<compile_context>
chip_gen: v7x
topology: tpu7x:2x2x1
jax: 0.10.0
libtpu: 0.0.40
codegen_flags: <defaults>
</compile_context>

<pallas_src>
import math

import jax
import jax.numpy as jnp
from jax.experimental import pallas as pl
from jax.experimental.pallas import tpu as pltpu


def _fallback_stp_kernel(i0_ref, x1_ref, x0_ref, w_ref, o_ref, y_scr):
    """One batch tile of the summed segmented tensor products.

    i0_ref : (TZ, 1) int32        row indices into the x0 table
    x1_ref : (TZ, D1)             shared operand x1 (compute dtype, e.g. bf16)
    x0_ref : (N0, D0)             full x0 table (small -> resident in VMEM)
    w_ref  : (1+D1+D1*D1, D0*O)   stacked & permuted W1/W2/W3 coefficients
    o_ref  : (TZ//p, p*O)         lane-dense packed output tile
    y_scr  : (TZ, O) f32          scratch used to repack rows into lanes
    """
    TZ, D1 = x1_ref.shape
    N0, D0 = x0_ref.shape
    O = y_scr.shape[1]
    pack = o_ref.shape[1] // O

    x1b = x1_ref[...]                                        # (TZ, D1)

    # --- gather x0[i0] on the MXU via a one-hot matmul (exact 0/1 values) -----
    lane = jax.lax.broadcasted_iota(jnp.int32, (TZ, N0), 1)
    onehot = (lane == i0_ref[...]).astype(x0_ref.dtype)      # (TZ, N0)
    x0g = jnp.dot(onehot, x0_ref[...],
                  preferred_element_type=jnp.float32)        # (TZ, D0) f32

    # --- build vfeat = [1, x1, x1 (x) x1] with lane ops only (no reshapes) ----
    ones = jnp.ones((TZ, 1), dtype=x1b.dtype)
    pieces = [ones, x1b]
    for b in range(D1):                                      # only D1 lane-broadcasts
        pieces.append(x1b * x1b[:, b:b + 1])                 # columns b*D1 + c
    vfeat = jnp.concatenate(pieces, axis=-1)                 # (TZ, 1 + D1 + D1*D1)

    # --- single MXU matmul covers all three descriptors' x1-side contractions -
    m = jnp.dot(vfeat, w_ref[...],
                preferred_element_type=jnp.float32)          # (TZ, D0*O) f32

    # --- small reduction over the x0 segment index a (VPU, log-depth tree) ----
    parts = [x0g[:, a:a + 1] * m[:, a * O:(a + 1) * O] for a in range(D0)]
    while len(parts) > 1:
        nxt = [parts[i] + parts[i + 1] for i in range(0, len(parts) - 1, 2)]
        if len(parts) % 2:
            nxt.append(parts[-1])
        parts = nxt
    y = parts[0]                                             # (TZ, O) f32

    # --- store lane-dense: pack `pack` consecutive rows into one output row ---
    if pack == 1:
        o_ref[...] = y.astype(o_ref.dtype)
    else:
        y_scr[...] = y
        rows = TZ // pack
        o_ref[...] = jnp.concatenate(
            [y_scr[pl.ds(j, rows, stride=pack), :] for j in range(pack)],
            axis=-1).astype(o_ref.dtype)


def fallback_impl_forward(x0, i0, x1, w1, w2, w3, *, tz=256):
    """forward(x0, i0, x1): sum of the three segmented tensor products (Pallas)."""
    Z, D1 = x1.shape
    N0, D0 = x0.shape
    O = w1.shape[1]
    cdt = x1.dtype                              # MXU compute dtype (bf16 recommended)
    assert tz % 8 == 0

    # Lane-dense output packing: smallest p with (p*O) % 128 == 0 (free row-major unpack).
    pack = 1 if O % 128 == 0 else 128 // math.gcd(O, 128)
    if tz % pack != 0 or (tz // pack) % 8 != 0:
        pack = 1                                # fall back to masked stores

    # Pad ragged batches up to a multiple of the tile.
    Zp = pl.cdiv(Z, tz) * tz
    if Zp != Z:
        x1 = jnp.pad(x1, ((0, Zp - Z), (0, 0)))
        i0 = jnp.pad(i0, ((0, Zp - Z),))
    i0c = i0.astype(jnp.int32).reshape(Zp, 1)

    # Stack + permute coefficients so one (1+D1+D1^2, D0*O) matmul folds in W1, W2 and W3.
    # Row layout: [1 | b | b*D1+c]; column layout: [a*O + o].
    row1 = w1.astype(cdt).reshape(1, D0 * O)
    rows2 = jnp.transpose(w2.astype(cdt), (1, 0, 2)).reshape(D1, D0 * O)
    rows3 = jnp.transpose(w3.astype(cdt), (1, 2, 0, 3)).reshape(D1 * D1, D0 * O)
    wstack = jnp.concatenate([row1, rows2, rows3], axis=0)
    KS = 1 + D1 + D1 * D1

    grid = (Zp // tz,)
    out_packed = pl.pallas_call(
        _fallback_stp_kernel,
        out_shape=jax.ShapeDtypeStruct((Zp // pack, pack * O), x1.dtype),
        grid_spec=pltpu.PrefetchScalarGridSpec(
            num_scalar_prefetch=0,
            grid=grid,
            in_specs=[
                pl.BlockSpec((tz, 1), lambda z: (z, 0)),        # i0 (int32 column)
                pl.BlockSpec((tz, D1), lambda z: (z, 0)),       # x1 batch tile
                pl.BlockSpec((N0, D0), lambda z: (0, 0)),       # x0 table (constant block)
                pl.BlockSpec((KS, D0 * O), lambda z: (0, 0)),   # stacked weights (constant)
            ],
            out_specs=pl.BlockSpec((tz // pack, pack * O), lambda z: (z, 0)),
            scratch_shapes=[pltpu.VMEM((tz, O), jnp.float32)],
        ),
        compiler_params=pltpu.CompilerParams(
            dimension_semantics=("parallel",)),
    )(i0c, x1.astype(cdt), x0.astype(cdt), wstack)

    # Row-major unpack of the lane-dense output is a free (metadata-only) reshape.
    return out_packed.reshape(Zp, O)[:Z]


def reference(x0, i0, x1, w1, w2, w3):
    """Pure-JAX f32 reference for the summed tensor products."""
    f32 = jnp.float32
    x0g = x0.astype(f32)[i0]
    x1f = x1.astype(f32)
    y1 = jnp.einsum("za,ao->zo", x0g, w1.astype(f32))
    y2 = jnp.einsum("za,zb,abo->zo", x0g, x1f, w2.astype(f32))
    y3 = jnp.einsum("za,zb,zc,abco->zo", x0g, x1f, x1f, w3.astype(f32))
    return y1 + y2 + y3


if __name__ == "__main__":
    key = jax.random.PRNGKey(0)
    k0, k1, k2, kw1, kw2, kw3 = jax.random.split(key, 6)

    # Small shapes: x0 "index table" rows N0, batch Z, operand dims D0/D1, output dim O.
    N0, D0, D1, O, Z = 16, 8, 8, 32, 1024
    bf16 = jnp.bfloat16

    x0 = jax.random.normal(k0, (N0, D0), dtype=jnp.float32).astype(bf16)
    i0 = jax.random.randint(k1, (Z,), 0, N0, dtype=jnp.int32)
    x1 = jax.random.normal(k2, (Z, D1), dtype=jnp.float32).astype(bf16)

    # Deterministic synthetic descriptor coefficients (scaled ~ 1/sqrt(fan_in)).
    w1 = (jax.random.normal(kw1, (D0, O), jnp.float32) / math.sqrt(D0)).astype(bf16)
    w2 = (jax.random.normal(kw2, (D0, D1, O), jnp.float32) / math.sqrt(D0 * D1)).astype(bf16)
    w3 = (jax.random.normal(kw3, (D0, D1, D1, O), jnp.float32) / math.sqrt(D0 * D1 * D1)).astype(bf16)

    out = fallback_impl_forward(x0, i0, x1, w1, w2, w3, tz=256)
    out = jax.block_until_ready(out)

    ref = reference(x0, i0, x1, w1, w2, w3)
    rel_err = jnp.max(jnp.abs(out.astype(jnp.float32) - ref)) / (jnp.max(jnp.abs(ref)) + 1e-6)

    assert out.shape == (Z, O), out.shape
    assert bool(rel_err < 2e-2), f"relative error too large: {rel_err}"
    print("KERNEL_OK")
</pallas_src>

<mosaic_0001>
module attributes {stable_mosaic.version = 11 : i64} {
  func.func @_fallback_stp_kernel(%arg0: i32, %arg1: memref<256x1xi32, #tpu.memory_space<vmem>>, %arg2: memref<256x8xbf16, #tpu.memory_space<vmem>>, %arg3: memref<16x8xbf16, #tpu.memory_space<vmem>>, %arg4: memref<73x256xbf16, #tpu.memory_space<vmem>>, %arg5: memref<64x128xbf16, #tpu.memory_space<vmem>>, %arg6: memref<256x32xf32, #tpu.memory_space<vmem>>) attributes {dimension_semantics = [#tpu.dimension_semantics<parallel>], iteration_bounds = array<i64: 4>, scalar_prefetch = 0 : i64, scratch_operands = 1 : i64, tpu.core_type = #tpu.core_type<tc>, window_params = [{transform_indices = @transform_0, window_bounds = array<i64: 256, 1>}, {transform_indices = @transform_1, window_bounds = array<i64: 256, 8>}, {pipeline_mode = #tpu.pipeline_mode<synchronous>, transform_indices = @transform_2, window_bounds = array<i64: 16, 8>}, {pipeline_mode = #tpu.pipeline_mode<synchronous>, transform_indices = @transform_3, window_bounds = array<i64: 73, 256>}, {transform_indices = @transform_4, window_bounds = array<i64: 64, 128>}]} {
    %c0 = arith.constant 0 : index
    %c0_0 = arith.constant 0 : index
    %0 = vector.load %arg2[%c0, %c0_0] : memref<256x8xbf16, #tpu.memory_space<vmem>>, vector<256x8xbf16>
    %1 = tpu.iota {dimensions = array<i32: 1>} : vector<256x16xi32>
    %c0_1 = arith.constant 0 : index
    %c0_2 = arith.constant 0 : index
    %2 = vector.load %arg1[%c0_1, %c0_2] : memref<256x1xi32, #tpu.memory_space<vmem>>, vector<256x1xi32>
    %3 = vector.broadcast %2 : vector<256x1xi32> to vector<256x16xi32>
    %4 = arith.cmpi eq, %1, %3 : vector<256x16xi32>
    %5 = arith.extui %4 : vector<256x16xi1> to vector<256x16xi32>
    %6 = arith.sitofp %5 : vector<256x16xi32> to vector<256x16xf32>
    %7 = arith.truncf %6 : vector<256x16xf32> to vector<256x16xbf16>
    %c0_3 = arith.constant 0 : index
    %c0_4 = arith.constant 0 : index
    %8 = vector.load %arg3[%c0_3, %c0_4] : memref<16x8xbf16, #tpu.memory_space<vmem>>, vector<16x8xbf16>
    %cst = arith.constant dense<0.000000e+00> : vector<256x8xf32>
    %9 = tpu.matmul %7, %8, %cst {dimension_numbers = #tpu.dot_dimension_numbers<[1], [0], [0], [1], [0, 0, 1, 1], [], []>} : vector<256x16xbf16>, vector<16x8xbf16>, vector<256x8xf32> -> vector<256x8xf32>
    %cst_5 = arith.constant 1.000000e+00 : bf16
    %10 = vector.broadcast %cst_5 : bf16 to vector<256x1xbf16>
    %11 = vector.extract_strided_slice %0 {offsets = [0, 0], sizes = [256, 1], strides = [1, 1]} : vector<256x8xbf16> to vector<256x1xbf16>
    %12 = vector.broadcast %11 : vector<256x1xbf16> to vector<256x8xbf16>
    %13 = arith.mulf %0, %12 : vector<256x8xbf16>
    %14 = vector.extract_strided_slice %0 {offsets = [0, 1], sizes = [256, 1], strides = [1, 1]} : vector<256x8xbf16> to vector<256x1xbf16>
    %15 = vector.broadcast %14 : vector<256x1xbf16> to vector<256x8xbf16>
    %16 = arith.mulf %0, %15 : vector<256x8xbf16>
    %17 = vector.extract_strided_slice %0 {offsets = [0, 2], sizes = [256, 1], strides = [1, 1]} : vector<256x8xbf16> to vector<256x1xbf16>
    %18 = vector.broadcast %17 : vector<256x1xbf16> to vector<256x8xbf16>
    %19 = arith.mulf %0, %18 : vector<256x8xbf16>
    %20 = vector.extract_strided_slice %0 {offsets = [0, 3], sizes = [256, 1], strides = [1, 1]} : vector<256x8xbf16> to vector<256x1xbf16>
    %21 = vector.broadcast %20 : vector<256x1xbf16> to vector<256x8xbf16>
    %22 = arith.mulf %0, %21 : vector<256x8xbf16>
    %23 = vector.extract_strided_slice %0 {offsets = [0, 4], sizes = [256, 1], strides = [1, 1]} : vector<256x8xbf16> to vector<256x1xbf16>
    %24 = vector.broadcast %23 : vector<256x1xbf16> to vector<256x8xbf16>
    %25 = arith.mulf %0, %24 : vector<256x8xbf16>
    %26 = vector.extract_strided_slice %0 {offsets = [0, 5], sizes = [256, 1], strides = [1, 1]} : vector<256x8xbf16> to vector<256x1xbf16>
    %27 = vector.broadcast %26 : vector<256x1xbf16> to vector<256x8xbf16>
    %28 = arith.mulf %0, %27 : vector<256x8xbf16>
    %29 = vector.extract_strided_slice %0 {offsets = [0, 6], sizes = [256, 1], strides = [1, 1]} : vector<256x8xbf16> to vector<256x1xbf16>
    %30 = vector.broadcast %29 : vector<256x1xbf16> to vector<256x8xbf16>
    %31 = arith.mulf %0, %30 : vector<256x8xbf16>
    %32 = vector.extract_strided_slice %0 {offsets = [0, 7], sizes = [256, 1], strides = [1, 1]} : vector<256x8xbf16> to vector<256x1xbf16>
    %33 = vector.broadcast %32 : vector<256x1xbf16> to vector<256x8xbf16>
    %34 = arith.mulf %0, %33 : vector<256x8xbf16>
    %35 = tpu.concatenate %10, %0, %13, %16, %19, %22, %25, %28, %31, %34 in 1 : vector<256x1xbf16>, vector<256x8xbf16>, vector<256x8xbf16>, vector<256x8xbf16>, vector<256x8xbf16>, vector<256x8xbf16>, vector<256x8xbf16>, vector<256x8xbf16>, vector<256x8xbf16>, vector<256x8xbf16> -> vector<256x73xbf16>
    %c0_6 = arith.constant 0 : index
    %c0_7 = arith.constant 0 : index
    %36 = vector.load %arg4[%c0_6, %c0_7] : memref<73x256xbf16, #tpu.memory_space<vmem>>, vector<73x256xbf16>
    %cst_8 = arith.constant dense<0.000000e+00> : vector<256x256xf32>
    %37 = tpu.matmul %35, %36, %cst_8 {dimension_numbers = #tpu.dot_dimension_numbers<[1], [0], [0], [1], [0, 0, 1, 1], [], []>} : vector<256x73xbf16>, vector<73x256xbf16>, vector<256x256xf32> -> vector<256x256xf32>
    %38 = vector.extract_strided_slice %9 {offsets = [0, 0], sizes = [256, 1], strides = [1, 1]} : vector<256x8xf32> to vector<256x1xf32>
    %39 = vector.extract_strided_slice %37 {offsets = [0, 0], sizes = [256, 32], strides = [1, 1]} : vector<256x256xf32> to vector<256x32xf32>
    %40 = vector.broadcast %38 : vector<256x1xf32> to vector<256x32xf32>
    %41 = arith.mulf %40, %39 : vector<256x32xf32>
    %42 = vector.extract_strided_slice %9 {offsets = [0, 1], sizes = [256, 1], strides = [1, 1]} : vector<256x8xf32> to vector<256x1xf32>
    %43 = vector.extract_strided_slice %37 {offsets = [0, 32], sizes = [256, 32], strides = [1, 1]} : vector<256x256xf32> to vector<256x32xf32>
    %44 = vector.broadcast %42 : vector<256x1xf32> to vector<256x32xf32>
    %45 = arith.mulf %44, %43 : vector<256x32xf32>
    %46 = vector.extract_strided_slice %9 {offsets = [0, 2], sizes = [256, 1], strides = [1, 1]} : vector<256x8xf32> to vector<256x1xf32>
    %47 = vector.extract_strided_slice %37 {offsets = [0, 64], sizes = [256, 32], strides = [1, 1]} : vector<256x256xf32> to vector<256x32xf32>
    %48 = vector.broadcast %46 : vector<256x1xf32> to vector<256x32xf32>
    %49 = arith.mulf %48, %47 : vector<256x32xf32>
    %50 = vector.extract_strided_slice %9 {offsets = [0, 3], sizes = [256, 1], strides = [1, 1]} : vector<256x8xf32> to vector<256x1xf32>
    %51 = vector.extract_strided_slice %37 {offsets = [0, 96], sizes = [256, 32], strides = [1, 1]} : vector<256x256xf32> to vector<256x32xf32>
    %52 = vector.broadcast %50 : vector<256x1xf32> to vector<256x32xf32>
    %53 = arith.mulf %52, %51 : vector<256x32xf32>
    %54 = vector.extract_strided_slice %9 {offsets = [0, 4], sizes = [256, 1], strides = [1, 1]} : vector<256x8xf32> to vector<256x1xf32>
    %55 = vector.extract_strided_slice %37 {offsets = [0, 128], sizes = [256, 32], strides = [1, 1]} : vector<256x256xf32> to vector<256x32xf32>
    %56 = vector.broadcast %54 : vector<256x1xf32> to vector<256x32xf32>
    %57 = arith.mulf %56, %55 : vector<256x32xf32>
    %58 = vector.extract_strided_slice %9 {offsets = [0, 5], sizes = [256, 1], strides = [1, 1]} : vector<256x8xf32> to vector<256x1xf32>
    %59 = vector.extract_strided_slice %37 {offsets = [0, 160], sizes = [256, 32], strides = [1, 1]} : vector<256x256xf32> to vector<256x32xf32>
    %60 = vector.broadcast %58 : vector<256x1xf32> to vector<256x32xf32>
    %61 = arith.mulf %60, %59 : vector<256x32xf32>
    %62 = vector.extract_strided_slice %9 {offsets = [0, 6], sizes = [256, 1], strides = [1, 1]} : vector<256x8xf32> to vector<256x1xf32>
    %63 = vector.extract_strided_slice %37 {offsets = [0, 192], sizes = [256, 32], strides = [1, 1]} : vector<256x256xf32> to vector<256x32xf32>
    %64 = vector.broadcast %62 : vector<256x1xf32> to vector<256x32xf32>
    %65 = arith.mulf %64, %63 : vector<256x32xf32>
    %66 = vector.extract_strided_slice %9 {offsets = [0, 7], sizes = [256, 1], strides = [1, 1]} : vector<256x8xf32> to vector<256x1xf32>
    %67 = vector.extract_strided_slice %37 {offsets = [0, 224], sizes = [256, 32], strides = [1, 1]} : vector<256x256xf32> to vector<256x32xf32>
    %68 = vector.broadcast %66 : vector<256x1xf32> to vector<256x32xf32>
    %69 = arith.mulf %68, %67 : vector<256x32xf32>
    %70 = arith.addf %41, %45 : vector<256x32xf32>
    %71 = arith.addf %49, %53 : vector<256x32xf32>
    %72 = arith.addf %57, %61 : vector<256x32xf32>
    %73 = arith.addf %65, %69 : vector<256x32xf32>
    %74 = arith.addf %70, %71 : vector<256x32xf32>
    %75 = arith.addf %72, %73 : vector<256x32xf32>
    %76 = arith.addf %74, %75 : vector<256x32xf32>
    %c0_9 = arith.constant 0 : index
    %c0_10 = arith.constant 0 : index
    %77 = vector.load %arg6[%c0_9, %c0_10] : memref<256x32xf32, #tpu.memory_space<vmem>>, vector<256x32xf32>
    tpu.vector_store %arg6[%c0_9, %c0_10], %76 {strides = array<i32>} : memref<256x32xf32, #tpu.memory_space<vmem>>, vector<256x32xf32>,
    %c0_11 = arith.constant 0 : index
    %c0_12 = arith.constant 0 : index
    %78 = tpu.strided_load %arg6[%c0_11, %c0_12] {strides = array<i32: 4, 1>} : memref<256x32xf32, #tpu.memory_space<vmem>>, vector<64x32xf32>
    %c1 = arith.constant 1 : index
    %c0_13 = arith.constant 0 : index
    %79 = tpu.strided_load %arg6[%c1, %c0_13] {strides = array<i32: 4, 1>} : memref<256x32xf32, #tpu.memory_space<vmem>>, vector<64x32xf32>
    %c2 = arith.constant 2 : index
    %c0_14 = arith.constant 0 : index
    %80 = tpu.strided_load %arg6[%c2, %c0_14] {strides = array<i32: 4, 1>} : memref<256x32xf32, #tpu.memory_space<vmem>>, vector<64x32xf32>
    %c3 = arith.constant 3 : index
    %c0_15 = arith.constant 0 : index
    %81 = tpu.strided_load %arg6[%c3, %c0_15] {strides = array<i32: 4, 1>} : memref<256x32xf32, #tpu.memory_space<vmem>>, vector<64x32xf32>
    %82 = tpu.concatenate %78, %79, %80, %81 in 1 : vector<64x32xf32>, vector<64x32xf32>, vector<64x32xf32>, vector<64x32xf32> -> vector<64x128xf32>
    %83 = arith.truncf %82 : vector<64x128xf32> to vector<64x128xbf16>
    %c0_16 = arith.constant 0 : index
    %c0_17 = arith.constant 0 : index
    %84 = vector.load %arg5[%c0_16, %c0_17] : memref<64x128xbf16, #tpu.memory_space<vmem>>, vector<64x128xbf16>
    tpu.vector_store %arg5[%c0_16, %c0_17], %83 {strides = array<i32>} : memref<64x128xbf16, #tpu.memory_space<vmem>>, vector<64x128xbf16>,
    return
  }
  func.func @transform_0(%arg0: i32) -> (i32, i32) {
    %c0_i32 = arith.constant 0 : i32
    %c0_i32_0 = arith.constant 0 : i32
    return %arg0, %c0_i32 : i32, i32
  }
  func.func @transform_1(%arg0: i32) -> (i32, i32) {
    %c0_i32 = arith.constant 0 : i32
    %c0_i32_0 = arith.constant 0 : i32
    return %arg0, %c0_i32 : i32, i32
  }
  func.func @transform_2(%arg0: i32) -> (i32, i32) {
    %c0_i32 = arith.constant 0 : i32
    %c0_i32_0 = arith.constant 0 : i32
    %c0_i32_1 = arith.constant 0 : i32
    return %c0_i32, %c0_i32_0 : i32, i32
  }
  func.func @transform_3(%arg0: i32) -> (i32, i32) {
    %c0_i32 = arith.constant 0 : i32
    %c0_i32_0 = arith.constant 0 : i32
    %c0_i32_1 = arith.constant 0 : i32
    return %c0_i32, %c0_i32_0 : i32, i32
  }
  func.func @transform_4(%arg0: i32) -> (i32, i32) {
    %c0_i32 = arith.constant 0 : i32
    %c0_i32_0 = arith.constant 0 : i32
    return %arg0, %c0_i32 : i32, i32
  }
}

</mosaic_0001>

<llo_original>
// kernel: tpu_custom_call.1
$region0: #{tpu_custom_call.1}
  #allocation0 [shape = 'u32[]', space=smem, size = 0x4, offset = 0x4, fixed_abs, tag = 'smem constant byte address 0x4 - core index']
  #allocation1 [shape = 'u32[144,128]{1,0:T(1,128)}', space=vmem, size = 0x12000, scoped, tag = 'internal scratch']
  #allocation2 [shape = 'f32[256,32]{1,0:T(8,128)}', space=vmem, size = 0x20000, scoped, tag = 'scratch operand']
  %s0 = inlined_call_operand.vmem [shape: s32[1024,1], index: 0, kind: input, shape index: {}]
  %s1 = inlined_call_operand.vmem [shape: bf16[1024,8], index: 1, kind: input, shape index: {}]
  %s2 = inlined_call_operand.vmem [shape: bf16[16,8], index: 2, kind: input, shape index: {}]
  %s3 = inlined_call_operand.vmem [shape: bf16[73,256], index: 3, kind: input, shape index: {}]
  %s4 = inlined_call_operand.hbm [shape: bf16[256,128], index: 4, kind: output, shape index: {}]
  %s5 = sld [smem:[#allocation0]]
  $region49: #{tpu_custom_call.1} parent=0
    _
  %s7 = ssub.s32 1, %s5
  %s8 = scalar_select 0, %s7, %s5
  $region1: #{tpu_custom_call.1} parent=0
    #allocation3 [shape = 'u8[32768]{0}', space=vmem, size = 0x8000, scoped, tag = 'output window, operand 0']
    #allocation4 [shape = 's32[2]{0}', space=sflag, size = 0x8, scoped, tag = 'scoped memory for tpu_custom_call.1']
    %9 = vsyncpa [#allocation4], 0
    %s10 = scalar_lea.sflag [#allocation4], 1
    %11 = vsyncpa %s10, 0
    loop: start=0, step=1, limit=6
    $region2: #{tpu_custom_call.1} parent=1 // loop_pre_header
      _
    $region3: #{tpu_custom_call.1} parent=1 // loop_header
      %s13 = sphi 0, %s17
      %p14 = scmp.ge.s32.totalorder %s13, 6
      %s23 = sphi 0, %s25
      %s26 = sphi 0, %s23
      %s27 = sphi 0, %s26
      %s43 = sphi 0, %s27
      %s49 = sphi 0, %s51
      %s52 = sphi 0, %s49
      %s53 = sphi 0, %s52
      %s69 = sphi 0, %s53
      %s73 = sphi 0, %s73
      %s75 = sphi 0, %s73
      %s76 = sphi 0, %s75
      %s90 = sphi 0, %s76
      %s94 = sphi 0, %s94
      %s96 = sphi 0, %s94
      %s97 = sphi 0, %s96
      %s111 = sphi 0, %s97
      %s117 = sphi 0, %s119
      %s120 = sphi 0, %s117
      %s121 = sphi 0, %s120
      %s137 = sphi 0, %s121
    $region4: #{tpu_custom_call.1} parent=1 // loop_header_branch
      %16 = sbr.rel (%p14) target = $region8
    $region5: #{tpu_custom_call.1} parent=1 // loop_body
      %s18 = ssub.s32 %s13, 1
      %s19 = ssub.s32 %s13, 2
      %s20 = sadd.s32 %s13, 1
      %s21 = ssub.s32 %s13, %s20
      %p22 = scmp.eq.s32.totalorder %s21, 0
      %s24 = sadd.s32 %s23, 1
      %s25 = scalar_select %p22, %s23, %s24
      %p28 = pneg %p22
      %p29 = scmp.eq.s32.totalorder %s13, 3
      %p30 = por %p28, %p29
      %p31 = scmp.ne.s32.totalorder %s23, %s26
      %p32 = scmp.eq.s32.totalorder %s13, 0
      %p33 = por %p31, %p32
      %p34 = scmp.ne.s32.totalorder %s23, %s26
      %p35 = scmp.eq.s32.totalorder %s18, 3
      %p36 = por %p34, %p35
      %p37 = scmp.ne.s32.totalorder %s26, %s27
      %p38 = scmp.eq.s32.totalorder %s18, 0
      %p39 = por %p37, %p38
      %p40 = scmp.ne.s32.totalorder %s26, %s27
      %p41 = scmp.eq.s32.totalorder %s19, 3
      %p42 = por %p40, %p41
      %p44 = scmp.ne.s32.totalorder %s27, %s43
      %p45 = scmp.eq.s32.totalorder %s19, 0
      %p46 = por %p44, %p45
      %s47 = ssub.s32 %s13, %s20
      %p48 = scmp.eq.s32.totalorder %s47, 0
      %s50 = sadd.s32 %s49, 1
      %s51 = scalar_select %p48, %s49, %s50
      %p54 = pneg %p48
      %p55 = scmp.eq.s32.totalorder %s13, 3
      %p56 = por %p54, %p55
      %p57 = scmp.ne.s32.totalorder %s49, %s52
      %p58 = scmp.eq.s32.totalorder %s13, 0
      %p59 = por %p57, %p58
      %p60 = scmp.ne.s32.totalorder %s49, %s52
      %p61 = scmp.eq.s32.totalorder %s18, 3
      %p62 = por %p60, %p61
      %p63 = scmp.ne.s32.totalorder %s52, %s53
      %p64 = scmp.eq.s32.totalorder %s18, 0
      %p65 = por %p63, %p64
      %p66 = scmp.ne.s32.totalorder %s52, %s53
      %p67 = scmp.eq.s32.totalorder %s19, 3
      %p68 = por %p66, %p67
      %p70 = scmp.ne.s32.totalorder %s53, %s69
      %p71 = scmp.eq.s32.totalorder %s19, 0
      %p72 = por %p70, %p71
      %s74 = sadd.s32 %s73, 1
      %p77 = scmp.eq.s32.totalorder %s13, 3
      %p78 = scmp.ne.s32.totalorder %s73, %s75
      %p79 = scmp.eq.s32.totalorder %s13, 0
      %p80 = por %p78, %p79
      %p81 = scmp.ne.s32.totalorder %s73, %s75
      %p82 = scmp.eq.s32.totalorder %s18, 3
      %p83 = por %p81, %p82
      %p84 = scmp.ne.s32.totalorder %s75, %s76
      %p85 = scmp.eq.s32.totalorder %s18, 0
      %p86 = por %p84, %p85
      %p87 = scmp.ne.s32.totalorder %s75, %s76
      %p88 = scmp.eq.s32.totalorder %s19, 3
      %p89 = por %p87, %p88
      %p91 = scmp.ne.s32.totalorder %s76, %s90
      %p92 = scmp.eq.s32.totalorder %s19, 0
      %p93 = por %p91, %p92
      %s95 = sadd.s32 %s94, 1
      %p98 = scmp.eq.s32.totalorder %s13, 3
      %p99 = scmp.ne.s32.totalorder %s94, %s96
      %p100 = scmp.eq.s32.totalorder %s13, 0
      %p101 = por %p99, %p100
      %p102 = scmp.ne.s32.totalorder %s94, %s96
      %p103 = scmp.eq.s32.totalorder %s18, 3
      %p104 = por %p102, %p103
      %p105 = scmp.ne.s32.totalorder %s96, %s97
      %p106 = scmp.eq.s32.totalorder %s18, 0
      %p107 = por %p105, %p106
      %p108 = scmp.ne.s32.totalorder %s96, %s97
      %p109 = scmp.eq.s32.totalorder %s19, 3
      %p110 = por %p108, %p109
      %p112 = scmp.ne.s32.totalorder %s97, %s111
      %p113 = scmp.eq.s32.totalorder %s19, 0
      %p114 = por %p112, %p113
      %s115 = ssub.s32 %s13, %s20
      %p116 = scmp.eq.s32.totalorder %s115, 0
      %s118 = sadd.s32 %s117, 1
      %s119 = scalar_select %p116, %s117, %s118
      %p122 = pneg %p116
      %p123 = scmp.eq.s32.totalorder %s13, 3
      %p124 = por %p122, %p123
      %p125 = scmp.ne.s32.totalorder %s117, %s120
      %p126 = scmp.eq.s32.totalorder %s13, 0
      %p127 = por %p125, %p126
      %p128 = scmp.ne.s32.totalorder %s117, %s120
      %p129 = scmp.eq.s32.totalorder %s18, 3
      %p130 = por %p128, %p129
      %p131 = scmp.ne.s32.totalorder %s120, %s121
      %p132 = scmp.eq.s32.totalorder %s18, 0
      %p133 = por %p131, %p132
      %p134 = scmp.ne.s32.totalorder %s120, %s121
      %p135 = scmp.eq.s32.totalorder %s19, 3
      %p136 = por %p134, %p135
      %p138 = scmp.ne.s32.totalorder %s121, %s137
      %p139 = scmp.eq.s32.totalorder %s19, 0
      %p140 = por %p138, %p139
      %p141 = scmp.le.s32.totalorder 1, %s13
      %p142 = scmp.lt.s32.totalorder %s13, 5
      %p143 = pnand %p141, %p142
      %p144 = pneg %p143
      // Predicated region
      $region9: #{tpu_custom_call.1} parent=5 // pred_check
        _
      $region10: #{tpu_custom_call.1} parent=5 // pred_check_branch
        %146 = sbr.rel (%p143) target = $region12
      $region11: #{tpu_custom_call.1} parent=5 // pred_region
        %s147 = ssub.s32 %s13, 1
        // Predicated region
        $region13: #{tpu_custom_call.1} parent=11 // pred_check
          %p148 = pneg %p86
        $region14: #{tpu_custom_call.1} parent=11 // pred_check_branch
          %150 = sbr.rel (%p148) target = $region16
        $region15: #{tpu_custom_call.1} parent=11 // pred_region
          _
        $region16: #{tpu_custom_call.1} parent=11 // pred_fallthru
          _
        // Predicated region
        $region17: #{tpu_custom_call.1} parent=11 // pred_check
          %p151 = pneg %p107
        $region18: #{tpu_custom_call.1} parent=11 // pred_check_branch
          %153 = sbr.rel (%p151) target = $region20
        $region19: #{tpu_custom_call.1} parent=11 // pred_region
          _
        $region20: #{tpu_custom_call.1} parent=11 // pred_fallthru
          _
      $region12: #{tpu_custom_call.1} parent=5 // pred_fallthru
        _
      %p154 = scmp.lt.s32.totalorder %s13, 4
      // Predicated region
      $region21: #{tpu_custom_call.1} parent=5 // pred_check
        %p155 = pneg %p154
      $region22: #{tpu_custom_call.1} parent=5 // pred_check_branch
        %157 = sbr.rel (%p155) target = $region24
      $region23: #{tpu_custom_call.1} parent=5 // pred_region
        // Predicated region
        $region25: #{tpu_custom_call.1} parent=23 // pred_check
          %p158 = pneg %p33
        $region26: #{tpu_custom_call.1} parent=23 // pred_check_branch
          %160 = sbr.rel (%p158) target = $region28
        $region27: #{tpu_custom_call.1} parent=23 // pred_region
          %s161 = smul.u32 32, %s13
          %p162 = scmp.lt.s32.totalorder %s161, 127
          %s163 = scalar_select %p162, %s161, 127
          %s164 = smul.addr %s163, 8
          %s165 = scalar_lea.vmem %s0, %s164
          %s166 = smul.u32 32, %s13
        $region28: #{tpu_custom_call.1} parent=23 // pred_fallthru
          _
        // Predicated region
        $region29: #{tpu_custom_call.1} parent=23 // pred_check
          %p167 = pneg %p59
        $region30: #{tpu_custom_call.1} parent=23 // pred_check_branch
          %169 = sbr.rel (%p167) target = $region32
        $region31: #{tpu_custom_call.1} parent=23 // pred_region
          %s170 = smul.u32 32, %s13
          %p171 = scmp.lt.s32.totalorder %s170, 127
          %s172 = scalar_select %p171, %s170, 127
          %s173 = smul.addr %s172, 4
          %s174 = scalar_lea.vmem %s1, %s173
          %s175 = smul.u32 32, %s13
        $region32: #{tpu_custom_call.1} parent=23 // pred_fallthru
          _
      $region24: #{tpu_custom_call.1} parent=5 // pred_fallthru
        _
      %p176 = scmp.le.s32.totalorder 1, %s13
      %p177 = scmp.lt.s32.totalorder %s13, 5
      %p178 = pnand %p176, %p177
      %p179 = pneg %p178
      // Predicated region
      $region33: #{tpu_custom_call.1} parent=5 // pred_check
        _
      $region34: #{tpu_custom_call.1} parent=5 // pred_check_branch
        %181 = sbr.rel (%p178) target = $region36
      $region35: #{tpu_custom_call.1} parent=5 // pred_region
        %s182 = ssub.s32 %s13, 1
        %s183 = smul.u32 32, %s18
        %p184 = scmp.lt.s32.totalorder %s183, 127
        %s185 = scalar_select %p184, %s183, 127
        %s186 = smul.addr %s185, 8
        %s187 = scalar_lea.vmem %s0, %s186
        %p188 = pneg %p39
        %p189 = pneg %p36
        %s190 = smul.u32 32, %s18
        %p191 = scmp.lt.s32.totalorder %s190, 127
        %s192 = scalar_select %p191, %s190, 127
        %s193 = smul.addr %s192, 4
        %s194 = scalar_lea.vmem %s1, %s193
        %p195 = pneg %p65
        %p196 = pneg %p62
        %p197 = pneg %p86
        %p198 = pneg %p83
        %p199 = pneg %p107
        %p200 = pneg %p104
        %p201 = pneg %p133
        %p202 = pneg %p130
        %s203 = sand.u32 %s120, 1
        %s204 = scalar_lea.sflag [#allocation4], %s203
        %s205 = sand.u32 %s120, 1
        %s206 = smul.addr %s205, 32
        %s207 = scalar_lea.vmem [#allocation3], %s206
        %s208 = smul.u32 32, %s18
        %p209 = scmp.lt.s32.totalorder %s208, 127
        %s210 = scalar_select %p209, %s208, 127
        %s211 = smul.addr %s210, 8
        %s212 = scalar_lea.vmem %s0, %s211
        %s213 = smul.u32 32, %s18
        %s214 = smul.u32 32, %s18
        %p215 = scmp.lt.s32.totalorder %s214, 127
        %s216 = scalar_select %p215, %s214, 127
        %s217 = smul.addr %s216, 4
        %s218 = scalar_lea.vmem %s1, %s217
        %s219 = smul.u32 32, %s18
        %s220 = smul.u32 8, %s18
        %v223 = vld [vmem:[%s218] sm:$0xf]
        %v224 = vld [vmem:[%s218 + $0x4] sm:$0xf]
        %v225 = vld [vmem:[%s218 + $0x8] sm:$0xf]
        %v226 = vld [vmem:[%s218 + $0xc] sm:$0xf]
        %v227 = vld [vmem:[%s218 + $0x10] sm:$0xf]
        %v228 = vld [vmem:[%s218 + $0x14] sm:$0xf]
        %v229 = vld [vmem:[%s218 + $0x18] sm:$0xf]
        %v230 = vld [vmem:[%s218 + $0x1c] sm:$0xf]
        %v231 = vld [vmem:[%s218 + $0x20] sm:$0xf]
        %v232 = vld [vmem:[%s218 + $0x24] sm:$0xf]
        %v233 = vld [vmem:[%s218 + $0x28] sm:$0xf]
        %v234 = vld [vmem:[%s218 + $0x2c] sm:$0xf]
        %v235 = vld [vmem:[%s218 + $0x30] sm:$0xf]
        %v236 = vld [vmem:[%s218 + $0x34] sm:$0xf]
        %v237 = vld [vmem:[%s218 + $0x38] sm:$0xf]
        %v238 = vld [vmem:[%s218 + $0x3c] sm:$0xf]
        %v239 = vld [vmem:[%s218 + $0x40] sm:$0xf]
        %v240 = vld [vmem:[%s218 + $0x44] sm:$0xf]
        %v241 = vld [vmem:[%s218 + $0x48] sm:$0xf]
        %v242 = vld [vmem:[%s218 + $0x4c] sm:$0xf]
        %v243 = vld [vmem:[%s218 + $0x50] sm:$0xf]
        %v244 = vld [vmem:[%s218 + $0x54] sm:$0xf]
        %v245 = vld [vmem:[%s218 + $0x58] sm:$0xf]
        %v246 = vld [vmem:[%s218 + $0x5c] sm:$0xf]
        %v247 = vld [vmem:[%s218 + $0x60] sm:$0xf]
        %v248 = vld [vmem:[%s218 + $0x64] sm:$0xf]
        %v249 = vld [vmem:[%s218 + $0x68] sm:$0xf]
        %v250 = vld [vmem:[%s218 + $0x6c] sm:$0xf]
        %v251 = vld [vmem:[%s218 + $0x70] sm:$0xf]
        %v252 = vld [vmem:[%s218 + $0x74] sm:$0xf]
        %v253 = vld [vmem:[%s218 + $0x78] sm:$0xf]
        %v254 = vld [vmem:[%s218 + $0x7c] sm:$0xf]
        %v255 = vlaneseq
        %v256 = vand.u32 %v255, 127
        %v257 = vld [vmem:[%s212] sm:$0xff]
        %v258 = vld [vmem:[%s212 + $0x8] sm:$0xff]
        %v259 = vld [vmem:[%s212 + $0x10] sm:$0xff]
        %v260 = vld [vmem:[%s212 + $0x18] sm:$0xff]
        %v261 = vld [vmem:[%s212 + $0x20] sm:$0xff]
        %v262 = vld [vmem:[%s212 + $0x28] sm:$0xff]
        %v263 = vld [vmem:[%s212 + $0x30] sm:$0xff]
        %v264 = vld [vmem:[%s212 + $0x38] sm:$0xff]
        %v265 = vld [vmem:[%s212 + $0x40] sm:$0xff]
        %v266 = vld [vmem:[%s212 + $0x48] sm:$0xff]
        %v267 = vld [vmem:[%s212 + $0x50] sm:$0xff]
        %v268 = vld [vmem:[%s212 + $0x58] sm:$0xff]
        %v269 = vld [vmem:[%s212 + $0x60] sm:$0xff]
        %v270 = vld [vmem:[%s212 + $0x68] sm:$0xff]
        %v271 = vld [vmem:[%s212 + $0x70] sm:$0xff]
        %v272 = vld [vmem:[%s212 + $0x78] sm:$0xff]
        %v273 = vld [vmem:[%s212 + $0x80] sm:$0xff]
        %v274 = vld [vmem:[%s212 + $0x88] sm:$0xff]
        %v275 = vld [vmem:[%s212 + $0x90] sm:$0xff]
        %v276 = vld [vmem:[%s212 + $0x98] sm:$0xff]
        %v277 = vld [vmem:[%s212 + $0xa0] sm:$0xff]
        %v278 = vld [vmem:[%s212 + $0xa8] sm:$0xff]
        %v279 = vld [vmem:[%s212 + $0xb0] sm:$0xff]
        %v280 = vld [vmem:[%s212 + $0xb8] sm:$0xff]
        %v281 = vld [vmem:[%s212 + $0xc0] sm:$0xff]
        %v282 = vld [vmem:[%s212 + $0xc8] sm:$0xff]
        %v283 = vld [vmem:[%s212 + $0xd0] sm:$0xff]
        %v284 = vld [vmem:[%s212 + $0xd8] sm:$0xff]
        %v285 = vld [vmem:[%s212 + $0xe0] sm:$0xff]
        %v286 = vld [vmem:[%s212 + $0xe8] sm:$0xff]
        %v287 = vld [vmem:[%s212 + $0xf0] sm:$0xff]
        %v288 = vld [vmem:[%s212 + $0xf8] sm:$0xff]
        %289 = vset.pattern.permute.xlu0 0
        %290 = vperm.xlu0 %289, %v257
        %v291 = vpop.permute.xlu0 %290
        %292 = vset.pattern.permute.xlu0 0
        %293 = vperm.xlu0 %292, %v258
        %v294 = vpop.permute.xlu0 %293
        %295 = vset.pattern.permute.xlu0 0
        %296 = vperm.xlu0 %295, %v259
        %v297 = vpop.permute.xlu0 %296
        %298 = vset.pattern.permute.xlu0 0
        %299 = vperm.xlu0 %298, %v260
        %v300 = vpop.permute.xlu0 %299
        %301 = vset.pattern.permute.xlu0 0
        %302 = vperm.xlu0 %301, %v261
        %v303 = vpop.permute.xlu0 %302
        %304 = vset.pattern.permute.xlu0 0
        %305 = vperm.xlu0 %304, %v262
        %v306 = vpop.permute.xlu0 %305
        %307 = vset.pattern.permute.xlu0 0
        %308 = vperm.xlu0 %307, %v263
        %v309 = vpop.permute.xlu0 %308
        %310 = vset.pattern.permute.xlu0 0
        %311 = vperm.xlu0 %310, %v264
        %v312 = vpop.permute.xlu0 %311
        %313 = vset.pattern.permute.xlu0 0
        %314 = vperm.xlu0 %313, %v265
        %v315 = vpop.permute.xlu0 %314
        %316 = vset.pattern.permute.xlu0 0
        %317 = vperm.xlu0 %316, %v266
        %v318 = vpop.permute.xlu0 %317
        %319 = vset.pattern.permute.xlu0 0
        %320 = vperm.xlu0 %319, %v267
        %v321 = vpop.permute.xlu0 %320
        %322 = vset.pattern.permute.xlu0 0
        %323 = vperm.xlu0 %322, %v268
        %v324 = vpop.permute.xlu0 %323
        %325 = vset.pattern.permute.xlu0 0
        %326 = vperm.xlu0 %325, %v269
        %v327 = vpop.permute.xlu0 %326
        %328 = vset.pattern.permute.xlu0 0
        %329 = vperm.xlu0 %328, %v270
        %v330 = vpop.permute.xlu0 %329
        %331 = vset.pattern.permute.xlu0 0
        %332 = vperm.xlu0 %331, %v271
        %v333 = vpop.permute.xlu0 %332
        %334 = vset.pattern.permute.xlu0 0
        %335 = vperm.xlu0 %334, %v272
        %v336 = vpop.permute.xlu0 %335
        %337 = vset.pattern.permute.xlu0 0
        %338 = vperm.xlu0 %337, %v273
        %v339 = vpop.permute.xlu0 %338
        %340 = vset.pattern.permute.xlu0 0
        %341 = vperm.xlu0 %340, %v274
        %v342 = vpop.permute.xlu0 %341
        %343 = vset.pattern.permute.xlu0 0
        %344 = vperm.xlu0 %343, %v275
        %v345 = vpop.permute.xlu0 %344
        %346 = vset.pattern.permute.xlu0 0
        %347 = vperm.xlu0 %346, %v276
        %v348 = vpop.permute.xlu0 %347
        %349 = vset.pattern.permute.xlu0 0
        %350 = vperm.xlu0 %349, %v277
        %v351 = vpop.permute.xlu0 %350
        %352 = vset.pattern.permute.xlu0 0
        %353 = vperm.xlu0 %352, %v278
        %v354 = vpop.permute.xlu0 %353
        %355 = vset.pattern.permute.xlu0 0
        %356 = vperm.xlu0 %355, %v279
        %v357 = vpop.permute.xlu0 %356
        %358 = vset.pattern.permute.xlu0 0
        %359 = vperm.xlu0 %358, %v280
        %v360 = vpop.permute.xlu0 %359
        %361 = vset.pattern.permute.xlu0 0
        %362 = vperm.xlu0 %361, %v281
        %v363 = vpop.permute.xlu0 %362
        %364 = vset.pattern.permute.xlu0 0
        %365 = vperm.xlu0 %364, %v282
        %v366 = vpop.permute.xlu0 %365
        %367 = vset.pattern.permute.xlu0 0
        %368 = vperm.xlu0 %367, %v283
        %v369 = vpop.permute.xlu0 %368
        %370 = vset.pattern.permute.xlu0 0
        %371 = vperm.xlu0 %370, %v284
        %v372 = vpop.permute.xlu0 %371
        %373 = vset.pattern.permute.xlu0 0
        %374 = vperm.xlu0 %373, %v285
        %v375 = vpop.permute.xlu0 %374
        %376 = vset.pattern.permute.xlu0 0
        %377 = vperm.xlu0 %376, %v286
        %v378 = vpop.permute.xlu0 %377
        %379 = vset.pattern.permute.xlu0 0
        %380 = vperm.xlu0 %379, %v287
        %v381 = vpop.permute.xlu0 %380
        %382 = vset.pattern.permute.xlu0 0
        %383 = vperm.xlu0 %382, %v288
        %v384 = vpop.permute.xlu0 %383
        %vm385 = vcmp.eq.s32.totalorder %v256, %v291
        %vm386 = vcmp.eq.s32.totalorder %v256, %v294
        %vm387 = vcmp.eq.s32.totalorder %v256, %v297
        %vm388 = vcmp.eq.s32.totalorder %v256, %v300
        %vm389 = vcmp.eq.s32.totalorder %v256, %v303
        %vm390 = vcmp.eq.s32.totalorder %v256, %v306
        %vm391 = vcmp.eq.s32.totalorder %v256, %v309
        %vm392 = vcmp.eq.s32.totalorder %v256, %v312
        %vm393 = vcmp.eq.s32.totalorder %v256, %v315
        %vm394 = vcmp.eq.s32.totalorder %v256, %v318
        %vm395 = vcmp.eq.s32.totalorder %v256, %v321
        %vm396 = vcmp.eq.s32.totalorder %v256, %v324
        %vm397 = vcmp.eq.s32.totalorder %v256, %v327
        %vm398 = vcmp.eq.s32.totalorder %v256, %v330
        %vm399 = vcmp.eq.s32.totalorder %v256, %v333
        %vm400 = vcmp.eq.s32.totalorder %v256, %v336
        %vm401 = vcmp.eq.s32.totalorder %v256, %v339
        %vm402 = vcmp.eq.s32.totalorder %v256, %v342
        %vm403 = vcmp.eq.s32.totalorder %v256, %v345
        %vm404 = vcmp.eq.s32.totalorder %v256, %v348
        %vm405 = vcmp.eq.s32.totalorder %v256, %v351
        %vm406 = vcmp.eq.s32.totalorder %v256, %v354
        %vm407 = vcmp.eq.s32.totalorder %v256, %v357
        %vm408 = vcmp.eq.s32.totalorder %v256, %v360
        %vm409 = vcmp.eq.s32.totalorder %v256, %v363
        %vm410 = vcmp.eq.s32.totalorder %v256, %v366
        %vm411 = vcmp.eq.s32.totalorder %v256, %v369
        %vm412 = vcmp.eq.s32.totalorder %v256, %v372
        %vm413 = vcmp.eq.s32.totalorder %v256, %v375
        %vm414 = vcmp.eq.s32.totalorder %v256, %v378
        %vm415 = vcmp.eq.s32.totalorder %v256, %v381
        %vm416 = vcmp.eq.s32.totalorder %v256, %v384
        %v417 = vsel %vm385, 1, 0
        %v418 = vsel %vm386, 1, 0
        %v419 = vsel %vm387, 1, 0
        %v420 = vsel %vm388, 1, 0
        %v421 = vsel %vm389, 1, 0
        %v422 = vsel %vm390, 1, 0
        %v423 = vsel %vm391, 1, 0
        %v424 = vsel %vm392, 1, 0
        %v425 = vsel %vm393, 1, 0
        %v426 = vsel %vm394, 1, 0
        %v427 = vsel %vm395, 1, 0
        %v428 = vsel %vm396, 1, 0
        %v429 = vsel %vm397, 1, 0
        %v430 = vsel %vm398, 1, 0
        %v431 = vsel %vm399, 1, 0
        %v432 = vsel %vm400, 1, 0
        %v433 = vsel %vm401, 1, 0
        %v434 = vsel %vm402, 1, 0
        %v435 = vsel %vm403, 1, 0
        %v436 = vsel %vm404, 1, 0
        %v437 = vsel %vm405, 1, 0
        %v438 = vsel %vm406, 1, 0
        %v439 = vsel %vm407, 1, 0
        %v440 = vsel %vm408, 1, 0
        %v441 = vsel %vm409, 1, 0
        %v442 = vsel %vm410, 1, 0
        %v443 = vsel %vm411, 1, 0
        %v444 = vsel %vm412, 1, 0
        %v445 = vsel %vm413, 1, 0
        %v446 = vsel %vm414, 1, 0
        %v447 = vsel %vm415, 1, 0
        %v448 = vsel %vm416, 1, 0
        %v449 = vcvt.s32.f32 %v417
        %v450 = vcvt.s32.f32 %v418
        %v451 = vcvt.s32.f32 %v419
        %v452 = vcvt.s32.f32 %v420
        %v453 = vcvt.s32.f32 %v421
        %v454 = vcvt.s32.f32 %v422
        %v455 = vcvt.s32.f32 %v423
        %v456 = vcvt.s32.f32 %v424
        %v457 = vcvt.s32.f32 %v425
        %v458 = vcvt.s32.f32 %v426
        %v459 = vcvt.s32.f32 %v427
        %v460 = vcvt.s32.f32 %v428
        %v461 = vcvt.s32.f32 %v429
        %v462 = vcvt.s32.f32 %v430
        %v463 = vcvt.s32.f32 %v431
        %v464 = vcvt.s32.f32 %v432
        %v465 = vcvt.s32.f32 %v433
        %v466 = vcvt.s32.f32 %v434
        %v467 = vcvt.s32.f32 %v435
        %v468 = vcvt.s32.f32 %v436
        %v469 = vcvt.s32.f32 %v437
        %v470 = vcvt.s32.f32 %v438
        %v471 = vcvt.s32.f32 %v439
        %v472 = vcvt.s32.f32 %v440
        %v473 = vcvt.s32.f32 %v441
        %v474 = vcvt.s32.f32 %v442
        %v475 = vcvt.s32.f32 %v443
        %v476 = vcvt.s32.f32 %v444
        %v477 = vcvt.s32.f32 %v445
        %v478 = vcvt.s32.f32 %v446
        %v479 = vcvt.s32.f32 %v447
        %v480 = vcvt.s32.f32 %v448
        %v481 = vpack.c.bf16 %v450, %v449
        %v482 = vpack.c.bf16 %v452, %v451
        %v483 = vpack.c.bf16 %v454, %v453
        %v484 = vpack.c.bf16 %v456, %v455
        %v485 = vpack.c.bf16 %v458, %v457
        %v486 = vpack.c.bf16 %v460, %v459
        %v487 = vpack.c.bf16 %v462, %v461
        %v488 = vpack.c.bf16 %v464, %v463
        %v489 = vpack.c.bf16 %v466, %v465
        %v490 = vpack.c.bf16 %v468, %v467
        %v491 = vpack.c.bf16 %v470, %v469
        %v492 = vpack.c.bf16 %v472, %v471
        %v493 = vpack.c.bf16 %v474, %v473
        %v494 = vpack.c.bf16 %v476, %v475
        %v495 = vpack.c.bf16 %v478, %v477
        %v496 = vpack.c.bf16 %v480, %v479
        %v497 = vld [vmem:[%s2] sm:$0xf]
        %v498 = vld [vmem:[%s2 + $0x4] sm:$0xf]
        %v501 = vunpack.c.l.b16 %v497
        %v502 = vunpack.c.l.b16 %v498
        %v503 = vpack.c.b16 %v502, %v501
        %vm505 = vcmask 130048
        %v507 = vsel %vm505, %v481, 0
        %v510 = vsel %vm505, %v482, 0
        %v513 = vsel %vm505, %v483, 0
        %v516 = vsel %vm505, %v484, 0
        %v519 = vsel %vm505, %v485, 0
        %v522 = vsel %vm505, %v486, 0
        %v525 = vsel %vm505, %v487, 0
        %v528 = vsel %vm505, %v488, 0
        %v531 = vsel %vm505, %v489, 0
        %v534 = vsel %vm505, %v490, 0
        %v537 = vsel %vm505, %v491, 0
        %v540 = vsel %vm505, %v492, 0
        %v543 = vsel %vm505, %v493, 0
        %v546 = vsel %vm505, %v494, 0
        %v549 = vsel %vm505, %v495, 0
        %v552 = vsel %vm505, %v496, 0
        %554 = vmatprep.subr.bf16.mxu0 0
        %555 = vmatpush1.bf16.msra.mxu0 %v503
        %556 = vmatprep.subr.bf16.mxu0 0
        %557 = vmatpush1.bf16.msra.mxu0 0
        %558 = vmatprep.subr.bf16.mxu0 0
        %559 = vmatpush1.bf16.msra.mxu0 0
        %560 = vmatprep.subr.bf16.mxu0 0
        %561 = vmatpush1.bf16.msra.mxu0 0
        %562 = vmatprep.subr.bf16.mxu0 0
        %563 = vmatpush1.bf16.msra.mxu0 0
        %564 = vmatprep.subr.bf16.mxu0 0
        %565 = vmatpush1.bf16.msra.mxu0 0
        %566 = vmatprep.subr.bf16.mxu0 0
        %567 = vmatpush1.bf16.msra.mxu0 0
        %568 = vmatprep.subr.bf16.mxu0 0
        %569 = vmatpush1.bf16.msra.mxu0 0
        %570 = vmatprep.subr.bf16.mxu0 0
        %571 = vmatpush1.bf16.msra.mxu0 0
        %572 = vmatprep.subr.bf16.mxu0 0
        %573 = vmatpush1.bf16.msra.mxu0 0
        %574 = vmatprep.subr.bf16.mxu0 0
        %575 = vmatpush1.bf16.msra.mxu0 0
        %576 = vmatprep.subr.bf16.mxu0 0
        %577 = vmatpush1.bf16.msra.mxu0 0
        %578 = vmatprep.subr.bf16.mxu0 0
        %579 = vmatpush1.bf16.msra.mxu0 0
        %580 = vmatprep.subr.bf16.mxu0 0
        %581 = vmatpush1.bf16.msra.mxu0 0
        %582 = vmatprep.subr.bf16.mxu0 0
        %583 = vmatpush1.bf16.msra.mxu0 0
        %584 = vmatprep.subr.bf16.mxu0 0
        %585 = vmatpush1.bf16.msra.mxu0 0
        %586 = vmatprep.mubr.bf16.mxu0 0
        %587 = vmatmul.mubr.bf16.gmra.mrb[0].mxu0 %v507
        %v588 = vpop.f32.mrb[0].mxu0
        %v589 = vadd.f32 0.0, %v588
        %v590 = vpop.f32.mrb[0].mxu0
        %v591 = vpop.f32.mrb[0].mxu0
        %v592 = vadd.f32 0.0, %v591
        %v593 = vpop.f32.mrb[0].mxu0
        %594 = vmatprep.mubr.bf16.mxu0 0
        %595 = vmatmul.mubr.bf16.gmra.mrb[0].mxu0 %v510
        %v596 = vpop.f32.mrb[0].mxu0
        %v597 = vadd.f32 0.0, %v596
        %v598 = vpop.f32.mrb[0].mxu0
        %v599 = vpop.f32.mrb[0].mxu0
        %v600 = vadd.f32 0.0, %v599
        %v601 = vpop.f32.mrb[0].mxu0
        %602 = vmatprep.mubr.bf16.mxu0 0
        %603 = vmatmul.mubr.bf16.gmra.mrb[0].mxu0 %v513
        %v604 = vpop.f32.mrb[0].mxu0
        %v605 = vadd.f32 0.0, %v604
        %v606 = vpop.f32.mrb[0].mxu0
        %v607 = vpop.f32.mrb[0].mxu0
        %v608 = vadd.f32 0.0, %v607
        %v609 = vpop.f32.mrb[0].mxu0
        %610 = vmatprep.mubr.bf16.mxu0 0
        %611 = vmatmul.mubr.bf16.gmra.mrb[0].mxu0 %v516
        %v612 = vpop.f32.mrb[0].mxu0
        %v613 = vadd.f32 0.0, %v612
        %v614 = vpop.f32.mrb[0].mxu0
        %v615 = vpop.f32.mrb[0].mxu0
        %v616 = vadd.f32 0.0, %v615
        %v617 = vpop.f32.mrb[0].mxu0
        %618 = vmatprep.mubr.bf16.mxu0 0
        %619 = vmatmul.mubr.bf16.gmra.mrb[0].mxu0 %v519
        %v620 = vpop.f32.mrb[0].mxu0
        %v621 = vadd.f32 0.0, %v620
        %v622 = vpop.f32.mrb[0].mxu0
        %v623 = vpop.f32.mrb[0].mxu0
        %v624 = vadd.f32 0.0, %v623
        %v625 = vpop.f32.mrb[0].mxu0
        %626 = vmatprep.mubr.bf16.mxu0 0
        %627 = vmatmul.mubr.bf16.gmra.mrb[0].mxu0 %v522
        %v628 = vpop.f32.mrb[0].mxu0
        %v629 = vadd.f32 0.0, %v628
        %v630 = vpop.f32.mrb[0].mxu0
        %v631 = vpop.f32.mrb[0].mxu0
        %v632 = vadd.f32 0.0, %v631
        %v633 = vpop.f32.mrb[0].mxu0
        %634 = vmatprep.mubr.bf16.mxu0 0
        %635 = vmatmul.mubr.bf16.gmra.mrb[0].mxu0 %v525
        %v636 = vpop.f32.mrb[0].mxu0
        %v637 = vadd.f32 0.0, %v636
        %v638 = vpop.f32.mrb[0].mxu0
        %v639 = vpop.f32.mrb[0].mxu0
        %v640 = vadd.f32 0.0, %v639
        %v641 = vpop.f32.mrb[0].mxu0
        %642 = vmatprep.mubr.bf16.mxu0 0
        %643 = vmatmul.mubr.bf16.gmra.mrb[0].mxu0 %v528
        %v644 = vpop.f32.mrb[0].mxu0
        %v645 = vadd.f32 0.0, %v644
        %v646 = vpop.f32.mrb[0].mxu0
        %v647 = vpop.f32.mrb[0].mxu0
        %v648 = vadd.f32 0.0, %v647
        %v649 = vpop.f32.mrb[0].mxu0
        %650 = vmatprep.mubr.bf16.mxu0 0
        %651 = vmatmul.mubr.bf16.gmra.mrb[0].mxu0 %v531
        %v652 = vpop.f32.mrb[0].mxu0
        %v653 = vadd.f32 0.0, %v652
        %v654 = vpop.f32.mrb[0].mxu0
        %v655 = vpop.f32.mrb[0].mxu0
        %v656 = vadd.f32 0.0, %v655
        %v657 = vpop.f32.mrb[0].mxu0
        %658 = vmatprep.mubr.bf16.mxu0 0
        %659 = vmatmul.mubr.bf16.gmra.mrb[0].mxu0 %v534
        %v660 = vpop.f32.mrb[0].mxu0
        %v661 = vadd.f32 0.0, %v660
        %v662 = vpop.f32.mrb[0].mxu0
        %v663 = vpop.f32.mrb[0].mxu0
        %v664 = vadd.f32 0.0, %v663
        %v665 = vpop.f32.mrb[0].mxu0
        %666 = vmatprep.mubr.bf16.mxu0 0
        %667 = vmatmul.mubr.bf16.gmra.mrb[0].mxu0 %v537
        %v668 = vpop.f32.mrb[0].mxu0
        %v669 = vadd.f32 0.0, %v668
        %v670 = vpop.f32.mrb[0].mxu0
        %v671 = vpop.f32.mrb[0].mxu0
        %v672 = vadd.f32 0.0, %v671
        %v673 = vpop.f32.mrb[0].mxu0
        %674 = vmatprep.mubr.bf16.mxu0 0
        %675 = vmatmul.mubr.bf16.gmra.mrb[0].mxu0 %v540
        %v676 = vpop.f32.mrb[0].mxu0
        %v677 = vadd.f32 0.0, %v676
        %v678 = vpop.f32.mrb[0].mxu0
        %v679 = vpop.f32.mrb[0].mxu0
        %v680 = vadd.f32 0.0, %v679
        %v681 = vpop.f32.mrb[0].mxu0
        %682 = vmatprep.mubr.bf16.mxu0 0
        %683 = vmatmul.mubr.bf16.gmra.mrb[0].mxu0 %v543
        %v684 = vpop.f32.mrb[0].mxu0
        %v685 = vadd.f32 0.0, %v684
        %v686 = vpop.f32.mrb[0].mxu0
        %v687 = vpop.f32.mrb[0].mxu0
        %v688 = vadd.f32 0.0, %v687
        %v689 = vpop.f32.mrb[0].mxu0
        %690 = vmatprep.mubr.bf16.mxu0 0
        %691 = vmatmul.mubr.bf16.gmra.mrb[0].mxu0 %v546
        %v692 = vpop.f32.mrb[0].mxu0
        %v693 = vadd.f32 0.0, %v692
        %v694 = vpop.f32.mrb[0].mxu0
        %v695 = vpop.f32.mrb[0].mxu0
        %v696 = vadd.f32 0.0, %v695
        %v697 = vpop.f32.mrb[0].mxu0
        %698 = vmatprep.mubr.bf16.mxu0 0
        %699 = vmatmul.mubr.bf16.gmra.mrb[0].mxu0 %v549
        %v700 = vpop.f32.mrb[0].mxu0
        %v701 = vadd.f32 0.0, %v700
        %v702 = vpop.f32.mrb[0].mxu0
        %v703 = vpop.f32.mrb[0].mxu0
        %v704 = vadd.f32 0.0, %v703
        %v705 = vpop.f32.mrb[0].mxu0
        %706 = vmatprep.mubr.bf16.mxu0 0
        %707 = vmatmul.mubr.bf16.gmra.mrb[0].mxu0 %v552
        %v708 = vpop.f32.mrb[0].mxu0
        %v709 = vadd.f32 0.0, %v708
        %v710 = vpop.f32.mrb[0].mxu0
        %v711 = vpop.f32.mrb[0].mxu0
        %v712 = vadd.f32 0.0, %v711
        %v713 = vpop.f32.mrb[0].mxu0
        %714 = vdwg.mxu0
        %716 = vset.pattern.permute.xlu0 0
        %717 = vperm.xlu0 %716, %v223
        %v718 = vpop.permute.xlu0 %717
        %v721 = vunpack.c.l.s4 839922192
        %v722 = vunpack.c.0.s8 %v721
        %v723 = vlaneseq
        %v724 = vshrl.u32 %v723, 7
        %v725 = vsub.s32 %v722, %v724
        %v726 = vrot.slane %v718, %v725
        %728 = vset.pattern.permute.xlu0 0
        %729 = vperm.xlu0 %728, %v224
        %v730 = vpop.permute.xlu0 %729
        %v733 = vunpack.c.l.s4 839922192
        %v734 = vunpack.c.0.s8 %v733
        %v735 = vlaneseq
        %v736 = vshrl.u32 %v735, 7
        %v737 = vsub.s32 %v734, %v736
        %v738 = vrot.slane %v730, %v737
        %740 = vset.pattern.permute.xlu0 0
        %741 = vperm.xlu0 %740, %v225
        %v742 = vpop.permute.xlu0 %741
        %v745 = vunpack.c.l.s4 839922192
        %v746 = vunpack.c.0.s8 %v745
        %v747 = vlaneseq
        %v748 = vshrl.u32 %v747, 7
        %v749 = vsub.s32 %v746, %v748
        %v750 = vrot.slane %v742, %v749
        %752 = vset.pattern.permute.xlu0 0
        %753 = vperm.xlu0 %752, %v226
        %v754 = vpop.permute.xlu0 %753
        %v757 = vunpack.c.l.s4 839922192
        %v758 = vunpack.c.0.s8 %v757
        %v759 = vlaneseq
        %v760 = vshrl.u32 %v759, 7
        %v761 = vsub.s32 %v758, %v760
        %v762 = vrot.slane %v754, %v761
        %764 = vset.pattern.permute.xlu0 0
        %765 = vperm.xlu0 %764, %v227
        %v766 = vpop.permute.xlu0 %765
        %v769 = vunpack.c.l.s4 839922192
        %v770 = vunpack.c.0.s8 %v769
        %v771 = vlaneseq
        %v772 = vshrl.u32 %v771, 7
        %v773 = vsub.s32 %v770, %v772
        %v774 = vrot.slane %v766, %v773
        %776 = vset.pattern.permute.xlu0 0
        %777 = vperm.xlu0 %776, %v228
        %v778 = vpop.permute.xlu0 %777
        %v781 = vunpack.c.l.s4 839922192
        %v782 = vunpack.c.0.s8 %v781
        %v783 = vlaneseq
        %v784 = vshrl.u32 %v783, 7
        %v785 = vsub.s32 %v782, %v784
        %v786 = vrot.slane %v778, %v785
        %788 = vset.pattern.permute.xlu0 0
        %789 = vperm.xlu0 %788, %v229
        %v790 = vpop.permute.xlu0 %789
        %v793 = vunpack.c.l.s4 839922192
        %v794 = vunpack.c.0.s8 %v793
        %v795 = vlaneseq
        %v796 = vshrl.u32 %v795, 7
        %v797 = vsub.s32 %v794, %v796
        %v798 = vrot.slane %v790, %v797
        %800 = vset.pattern.permute.xlu0 0
        %801 = vperm.xlu0 %800, %v230
        %v802 = vpop.permute.xlu0 %801
        %v805 = vunpack.c.l.s4 839922192
        %v806 = vunpack.c.0.s8 %v805
        %v807 = vlaneseq
        %v808 = vshrl.u32 %v807, 7
        %v809 = vsub.s32 %v806, %v808
        %v810 = vrot.slane %v802, %v809
        %812 = vset.pattern.permute.xlu0 0
        %813 = vperm.xlu0 %812, %v231
        %v814 = vpop.permute.xlu0 %813
        %v817 = vunpack.c.l.s4 839922192
        %v818 = vunpack.c.0.s8 %v817
        %v819 = vlaneseq
        %v820 = vshrl.u32 %v819, 7
        %v821 = vsub.s32 %v818, %v820
        %v822 = vrot.slane %v814, %v821
        %824 = vset.pattern.permute.xlu0 0
        %825 = vperm.xlu0 %824, %v232
        %v826 = vpop.permute.xlu0 %825
        %v829 = vunpack.c.l.s4 839922192
        %v830 = vunpack.c.0.s8 %v829
        %v831 = vlaneseq
        %v832 = vshrl.u32 %v831, 7
        %v833 = vsub.s32 %v830, %v832
        %v834 = vrot.slane %v826, %v833
        %836 = vset.pattern.permute.xlu0 0
        %837 = vperm.xlu0 %836, %v233
        %v838 = vpop.permute.xlu0 %837
        %v841 = vunpack.c.l.s4 839922192
        %v842 = vunpack.c.0.s8 %v841
        %v843 = vlaneseq
        %v844 = vshrl.u32 %v843, 7
        %v845 = vsub.s32 %v842, %v844
        %v846 = vrot.slane %v838, %v845
        %848 = vset.pattern.permute.xlu0 0
        %849 = vperm.xlu0 %848, %v234
        %v850 = vpop.permute.xlu0 %849
        %v853 = vunpack.c.l.s4 839922192
        %v854 = vunpack.c.0.s8 %v853
        %v855 = vlaneseq
        %v856 = vshrl.u32 %v855, 7
        %v857 = vsub.s32 %v854, %v856
        %v858 = vrot.slane %v850, %v857
        %860 = vset.pattern.permute.xlu0 0
        %861 = vperm.xlu0 %860, %v235
        %v862 = vpop.permute.xlu0 %861
        %v865 = vunpack.c.l.s4 839922192
        %v866 = vunpack.c.0.s8 %v865
        %v867 = vlaneseq
        %v868 = vshrl.u32 %v867, 7
        %v869 = vsub.s32 %v866, %v868
        %v870 = vrot.slane %v862, %v869
        %872 = vset.pattern.permute.xlu0 0
        %873 = vperm.xlu0 %872, %v236
        %v874 = vpop.permute.xlu0 %873
        %v877 = vunpack.c.l.s4 839922192
        %v878 = vunpack.c.0.s8 %v877
        %v879 = vlaneseq
        %v880 = vshrl.u32 %v879, 7
        %v881 = vsub.s32 %v878, %v880
        %v882 = vrot.slane %v874, %v881
        %884 = vset.pattern.permute.xlu0 0
        %885 = vperm.xlu0 %884, %v237
        %v886 = vpop.permute.xlu0 %885
        %v889 = vunpack.c.l.s4 839922192
        %v890 = vunpack.c.0.s8 %v889
        %v891 = vlaneseq
        %v892 = vshrl.u32 %v891, 7
        %v893 = vsub.s32 %v890, %v892
        %v894 = vrot.slane %v886, %v893
        %896 = vset.pattern.permute.xlu0 0
        %897 = vperm.xlu0 %896, %v238
        %v898 = vpop.permute.xlu0 %897
        %v901 = vunpack.c.l.s4 839922192
        %v902 = vunpack.c.0.s8 %v901
        %v903 = vlaneseq
        %v904 = vshrl.u32 %v903, 7
        %v905 = vsub.s32 %v902, %v904
        %v906 = vrot.slane %v898, %v905
        %908 = vset.pattern.permute.xlu0 0
        %909 = vperm.xlu0 %908, %v239
        %v910 = vpop.permute.xlu0 %909
        %v913 = vunpack.c.l.s4 839922192
        %v914 = vunpack.c.0.s8 %v913
        %v915 = vlaneseq
        %v916 = vshrl.u32 %v915, 7
        %v917 = vsub.s32 %v914, %v916
        %v918 = vrot.slane %v910, %v917
        %920 = vset.pattern.permute.xlu0 0
        %921 = vperm.xlu0 %920, %v240
        %v922 = vpop.permute.xlu0 %921
        %v925 = vunpack.c.l.s4 839922192
        %v926 = vunpack.c.0.s8 %v925
        %v927 = vlaneseq
        %v928 = vshrl.u32 %v927, 7
        %v929 = vsub.s32 %v926, %v928
        %v930 = vrot.slane %v922, %v929
        %932 = vset.pattern.permute.xlu0 0
        %933 = vperm.xlu0 %932, %v241
        %v934 = vpop.permute.xlu0 %933
        %v937 = vunpack.c.l.s4 839922192
        %v938 = vunpack.c.0.s8 %v937
        %v939 = vlaneseq
        %v940 = vshrl.u32 %v939, 7
        %v941 = vsub.s32 %v938, %v940
        %v942 = vrot.slane %v934, %v941
        %944 = vset.pattern.permute.xlu0 0
        %945 = vperm.xlu0 %944, %v242
        %v946 = vpop.permute.xlu0 %945
        %v949 = vunpack.c.l.s4 839922192
        %v950 = vunpack.c.0.s8 %v949
        %v951 = vlaneseq
        %v952 = vshrl.u32 %v951, 7
        %v953 = vsub.s32 %v950, %v952
        %v954 = vrot.slane %v946, %v953
        %956 = vset.pattern.permute.xlu0 0
        %957 = vperm.xlu0 %956, %v243
        %v958 = vpop.permute.xlu0 %957
        %v961 = vunpack.c.l.s4 839922192
        %v962 = vunpack.c.0.s8 %v961
        %v963 = vlaneseq
        %v964 = vshrl.u32 %v963, 7
        %v965 = vsub.s32 %v962, %v964
        %v966 = vrot.slane %v958, %v965
        %968 = vset.pattern.permute.xlu0 0
        %969 = vperm.xlu0 %968, %v244
        %v970 = vpop.permute.xlu0 %969
        %v973 = vunpack.c.l.s4 839922192
        %v974 = vunpack.c.0.s8 %v973
        %v975 = vlaneseq
        %v976 = vshrl.u32 %v975, 7
        %v977 = vsub.s32 %v974, %v976
        %v978 = vrot.slane %v970, %v977
        %980 = vset.pattern.permute.xlu0 0
        %981 = vperm.xlu0 %980, %v245
        %v982 = vpop.permute.xlu0 %981
        %v985 = vunpack.c.l.s4 839922192
        %v986 = vunpack.c.0.s8 %v985
        %v987 = vlaneseq
        %v988 = vshrl.u32 %v987, 7
        %v989 = vsub.s32 %v986, %v988
        %v990 = vrot.slane %v982, %v989
        %992 = vset.pattern.permute.xlu0 0
        %993 = vperm.xlu0 %992, %v246
        %v994 = vpop.permute.xlu0 %993
        %v997 = vunpack.c.l.s4 839922192
        %v998 = vunpack.c.0.s8 %v997
        %v999 = vlaneseq
        %v1000 = vshrl.u32 %v999, 7
        %v1001 = vsub.s32 %v998, %v1000
        %v1002 = vrot.slane %v994, %v1001
        %1004 = vset.pattern.permute.xlu0 0
        %1005 = vperm.xlu0 %1004, %v247
        %v1006 = vpop.permute.xlu0 %1005
        %v1009 = vunpack.c.l.s4 839922192
        %v1010 = vunpack.c.0.s8 %v1009
        %v1011 = vlaneseq
        %v1012 = vshrl.u32 %v1011, 7
        %v1013 = vsub.s32 %v1010, %v1012
        %v1014 = vrot.slane %v1006, %v1013
        %1016 = vset.pattern.permute.xlu0 0
        %1017 = vperm.xlu0 %1016, %v248
        %v1018 = vpop.permute.xlu0 %1017
        %v1021 = vunpack.c.l.s4 839922192
        %v1022 = vunpack.c.0.s8 %v1021
        %v1023 = vlaneseq
        %v1024 = vshrl.u32 %v1023, 7
        %v1025 = vsub.s32 %v1022, %v1024
        %v1026 = vrot.slane %v1018, %v1025
        %1028 = vset.pattern.permute.xlu0 0
        %1029 = vperm.xlu0 %1028, %v249
        %v1030 = vpop.permute.xlu0 %1029
        %v1033 = vunpack.c.l.s4 839922192
        %v1034 = vunpack.c.0.s8 %v1033
        %v1035 = vlaneseq
        %v1036 = vshrl.u32 %v1035, 7
        %v1037 = vsub.s32 %v1034, %v1036
        %v1038 = vrot.slane %v1030, %v1037
        %1040 = vset.pattern.permute.xlu0 0
        %1041 = vperm.xlu0 %1040, %v250
        %v1042 = vpop.permute.xlu0 %1041
        %v1045 = vunpack.c.l.s4 839922192
        %v1046 = vunpack.c.0.s8 %v1045
        %v1047 = vlaneseq
        %v1048 = vshrl.u32 %v1047, 7
        %v1049 = vsub.s32 %v1046, %v1048
        %v1050 = vrot.slane %v1042, %v1049
        %1052 = vset.pattern.permute.xlu0 0
        %1053 = vperm.xlu0 %1052, %v251
        %v1054 = vpop.permute.xlu0 %1053
        %v1057 = vunpack.c.l.s4 839922192
        %v1058 = vunpack.c.0.s8 %v1057
        %v1059 = vlaneseq
        %v1060 = vshrl.u32 %v1059, 7
        %v1061 = vsub.s32 %v1058, %v1060
        %v1062 = vrot.slane %v1054, %v1061
        %1064 = vset.pattern.permute.xlu0 0
        %1065 = vperm.xlu0 %1064, %v252
        %v1066 = vpop.permute.xlu0 %1065
        %v1069 = vunpack.c.l.s4 839922192
        %v1070 = vunpack.c.0.s8 %v1069
        %v1071 = vlaneseq
        %v1072 = vshrl.u32 %v1071, 7
        %v1073 = vsub.s32 %v1070, %v1072
        %v1074 = vrot.slane %v1066, %v1073
        %1076 = vset.pattern.permute.xlu0 0
        %1077 = vperm.xlu0 %1076, %v253
        %v1078 = vpop.permute.xlu0 %1077
        %v1081 = vunpack.c.l.s4 839922192
        %v1082 = vunpack.c.0.s8 %v1081
        %v1083 = vlaneseq
        %v1084 = vshrl.u32 %v1083, 7
        %v1085 = vsub.s32 %v1082, %v1084
        %v1086 = vrot.slane %v1078, %v1085
        %1088 = vset.pattern.permute.xlu0 0
        %1089 = vperm.xlu0 %1088, %v254
        %v1090 = vpop.permute.xlu0 %1089
        %v1093 = vunpack.c.l.s4 839922192
        %v1094 = vunpack.c.0.s8 %v1093
        %v1095 = vlaneseq
        %v1096 = vshrl.u32 %v1095, 7
        %v1097 = vsub.s32 %v1094, %v1096
        %v1098 = vrot.slane %v1090, %v1097
        %v1099 = vmul.bf16 %v223, %v726
        %v1100 = vmul.bf16 %v224, %v738
        %v1101 = vmul.bf16 %v225, %v750
        %v1102 = vmul.bf16 %v226, %v762
        %v1103 = vmul.bf16 %v227, %v774
        %v1104 = vmul.bf16 %v228, %v786
        %v1105 = vmul.bf16 %v229, %v798
        %v1106 = vmul.bf16 %v230, %v810
        %v1107 = vmul.bf16 %v231, %v822
        %v1108 = vmul.bf16 %v232, %v834
        %v1109 = vmul.bf16 %v233, %v846
        %v1110 = vmul.bf16 %v234, %v858
        %v1111 = vmul.bf16 %v235, %v870
        %v1112 = vmul.bf16 %v236, %v882
        %v1113 = vmul.bf16 %v237, %v894
        %v1114 = vmul.bf16 %v238, %v906
        %v1115 = vmul.bf16 %v239, %v918
        %v1116 = vmul.bf16 %v240, %v930
        %v1117 = vmul.bf16 %v241, %v942
        %v1118 = vmul.bf16 %v242, %v954
        %v1119 = vmul.bf16 %v243, %v966
        %v1120 = vmul.bf16 %v244, %v978
        %v1121 = vmul.bf16 %v245, %v990
        %v1122 = vmul.bf16 %v246, %v1002
        %v1123 = vmul.bf16 %v247, %v1014
        %v1124 = vmul.bf16 %v248, %v1026
        %v1125 = vmul.bf16 %v249, %v1038
        %v1126 = vmul.bf16 %v250, %v1050
        %v1127 = vmul.bf16 %v251, %v1062
        %v1128 = vmul.bf16 %v252, %v1074
        %v1129 = vmul.bf16 %v253, %v1086
        %v1130 = vmul.bf16 %v254, %v1098
        %1131 = vset.pattern.permute.xlu0 1
        %1132 = vperm.xlu0 %1131, %v223
        %v1133 = vpop.permute.xlu0 %1132
        %v1136 = vunpack.c.l.s4 839922192
        %v1137 = vunpack.c.0.s8 %v1136
        %v1138 = vlaneseq
        %v1139 = vshrl.u32 %v1138, 7
        %v1140 = vsub.s32 %v1137, %v1139
        %v1141 = vrot.slane %v1133, %v1140
        %1142 = vset.pattern.permute.xlu0 1
        %1143 = vperm.xlu0 %1142, %v224
        %v1144 = vpop.permute.xlu0 %1143
        %v1147 = vunpack.c.l.s4 839922192
        %v1148 = vunpack.c.0.s8 %v1147
        %v1149 = vlaneseq
        %v1150 = vshrl.u32 %v1149, 7
        %v1151 = vsub.s32 %v1148, %v1150
        %v1152 = vrot.slane %v1144, %v1151
        %1153 = vset.pattern.permute.xlu0 1
        %1154 = vperm.xlu0 %1153, %v225
        %v1155 = vpop.permute.xlu0 %1154
        %v1158 = vunpack.c.l.s4 839922192
        %v1159 = vunpack.c.0.s8 %v1158
        %v1160 = vlaneseq
        %v1161 = vshrl.u32 %v1160, 7
        %v1162 = vsub.s32 %v1159, %v1161
        %v1163 = vrot.slane %v1155, %v1162
        %1164 = vset.pattern.permute.xlu0 1
        %1165 = vperm.xlu0 %1164, %v226
        %v1166 = vpop.permute.xlu0 %1165
        %v1169 = vunpack.c.l.s4 839922192
        %v1170 = vunpack.c.0.s8 %v1169
        %v1171 = vlaneseq
        %v1172 = vshrl.u32 %v1171, 7
        %v1173 = vsub.s32 %v1170, %v1172
        %v1174 = vrot.slane %v1166, %v1173
        %1175 = vset.pattern.permute.xlu0 1
        %1176 = vperm.xlu0 %1175, %v227
        %v1177 = vpop.permute.xlu0 %1176
        %v1180 = vunpack.c.l.s4 839922192
        %v1181 = vunpack.c.0.s8 %v1180
        %v1182 = vlaneseq
        %v1183 = vshrl.u32 %v1182, 7
        %v1184 = vsub.s32 %v1181, %v1183
        %v1185 = vrot.slane %v1177, %v1184
        %1186 = vset.pattern.permute.xlu0 1
        %1187 = vperm.xlu0 %1186, %v228
        %v1188 = vpop.permute.xlu0 %1187
        %v1191 = vunpack.c.l.s4 839922192
        %v1192 = vunpack.c.0.s8 %v1191
        %v1193 = vlaneseq
        %v1194 = vshrl.u32 %v1193, 7
        %v1195 = vsub.s32 %v1192, %v1194
        %v1196 = vrot.slane %v1188, %v1195
        %1197 = vset.pattern.permute.xlu0 1
        %1198 = vperm.xlu0 %1197, %v229
        %v1199 = vpop.permute.xlu0 %1198
        %v1202 = vunpack.c.l.s4 839922192
        %v1203 = vunpack.c.0.s8 %v1202
        %v1204 = vlaneseq
        %v1205 = vshrl.u32 %v1204, 7
        %v1206 = vsub.s32 %v1203, %v1205
        %v1207 = vrot.slane %v1199, %v1206
        %1208 = vset.pattern.permute.xlu0 1
        %1209 = vperm.xlu0 %1208, %v230
        %v1210 = vpop.permute.xlu0 %1209
        %v1213 = vunpack.c.l.s4 839922192
        %v1214 = vunpack.c.0.s8 %v1213
        %v1215 = vlaneseq
        %v1216 = vshrl.u32 %v1215, 7
        %v1217 = vsub.s32 %v1214, %v1216
        %v1218 = vrot.slane %v1210, %v1217
        %1219 = vset.pattern.permute.xlu0 1
        %1220 = vperm.xlu0 %1219, %v231
        %v1221 = vpop.permute.xlu0 %1220
        %v1224 = vunpack.c.l.s4 839922192
        %v1225 = vunpack.c.0.s8 %v1224
        %v1226 = vlaneseq
        %v1227 = vshrl.u32 %v1226, 7
        %v1228 = vsub.s32 %v1225, %v1227
        %v1229 = vrot.slane %v1221, %v1228
        %1230 = vset.pattern.permute.xlu0 1
        %1231 = vperm.xlu0 %1230, %v232
        %v1232 = vpop.permute.xlu0 %1231
        %v1235 = vunpack.c.l.s4 839922192
        %v1236 = vunpack.c.0.s8 %v1235
        %v1237 = vlaneseq
        %v1238 = vshrl.u32 %v1237, 7
        %v1239 = vsub.s32 %v1236, %v1238
        %v1240 = vrot.slane %v1232, %v1239
        %1241 = vset.pattern.permute.xlu0 1
        %1242 = vperm.xlu0 %1241, %v233
        %v1243 = vpop.permute.xlu0 %1242
        %v1246 = vunpack.c.l.s4 839922192
        %v1247 = vunpack.c.0.s8 %v1246
        %v1248 = vlaneseq
        %v1249 = vshrl.u32 %v1248, 7
        %v1250 = vsub.s32 %v1247, %v1249
        %v1251 = vrot.slane %v1243, %v1250
        %1252 = vset.pattern.permute.xlu0 1
        %1253 = vperm.xlu0 %1252, %v234
        %v1254 = vpop.permute.xlu0 %1253
        %v1257 = vunpack.c.l.s4 839922192
        %v1258 = vunpack.c.0.s8 %v1257
        %v1259 = vlaneseq
        %v1260 = vshrl.u32 %v1259, 7
        %v1261 = vsub.s32 %v1258, %v1260
        %v1262 = vrot.slane %v1254, %v1261
        %1263 = vset.pattern.permute.xlu0 1
        %1264 = vperm.xlu0 %1263, %v235
        %v1265 = vpop.permute.xlu0 %1264
        %v1268 = vunpack.c.l.s4 839922192
        %v1269 = vunpack.c.0.s8 %v1268
        %v1270 = vlaneseq
        %v1271 = vshrl.u32 %v1270, 7
        %v1272 = vsub.s32 %v1269, %v1271
        %v1273 = vrot.slane %v1265, %v1272
        %1274 = vset.pattern.permute.xlu0 1
        %1275 = vperm.xlu0 %1274, %v236
        %v1276 = vpop.permute.xlu0 %1275
        %v1279 = vunpack.c.l.s4 839922192
        %v1280 = vunpack.c.0.s8 %v1279
        %v1281 = vlaneseq
        %v1282 = vshrl.u32 %v1281, 7
        %v1283 = vsub.s32 %v1280, %v1282
        %v1284 = vrot.slane %v1276, %v1283
        %1285 = vset.pattern.permute.xlu0 1
        %1286 = vperm.xlu0 %1285, %v237
        %v1287 = vpop.permute.xlu0 %1286
        %v1290 = vunpack.c.l.s4 839922192
        %v1291 = vunpack.c.0.s8 %v1290
        %v1292 = vlaneseq
        %v1293 = vshrl.u32 %v1292, 7
        %v1294 = vsub.s32 %v1291, %v1293
        %v1295 = vrot.slane %v1287, %v1294
        %1296 = vset.pattern.permute.xlu0 1
        %1297 = vperm.xlu0 %1296, %v238
        %v1298 = vpop.permute.xlu0 %1297
        %v1301 = vunpack.c.l.s4 839922192
        %v1302 = vunpack.c.0.s8 %v1301
        %v1303 = vlaneseq
        %v1304 = vshrl.u32 %v1303, 7
        %v1305 = vsub.s32 %v1302, %v1304
        %v1306 = vrot.slane %v1298, %v1305
        %1307 = vset.pattern.permute.xlu0 1
        %1308 = vperm.xlu0 %1307, %v239
        %v1309 = vpop.permute.xlu0 %1308
        %v1312 = vunpack.c.l.s4 839922192
        %v1313 = vunpack.c.0.s8 %v1312
        %v1314 = vlaneseq
        %v1315 = vshrl.u32 %v1314, 7
        %v1316 = vsub.s32 %v1313, %v1315
        %v1317 = vrot.slane %v1309, %v1316
        %1318 = vset.pattern.permute.xlu0 1
        %1319 = vperm.xlu0 %1318, %v240
        %v1320 = vpop.permute.xlu0 %1319
        %v1323 = vunpack.c.l.s4 839922192
        %v1324 = vunpack.c.0.s8 %v1323
        %v1325 = vlaneseq
        %v1326 = vshrl.u32 %v1325, 7
        %v1327 = vsub.s32 %v1324, %v1326
        %v1328 = vrot.slane %v1320, %v1327
        %1329 = vset.pattern.permute.xlu0 1
        %1330 = vperm.xlu0 %1329, %v241
        %v1331 = vpop.permute.xlu0 %1330
        %v1334 = vunpack.c.l.s4 839922192
        %v1335 = vunpack.c.0.s8 %v1334
        %v1336 = vlaneseq
        %v1337 = vshrl.u32 %v1336, 7
        %v1338 = vsub.s32 %v1335, %v1337
        %v1339 = vrot.slane %v1331, %v1338
        %1340 = vset.pattern.permute.xlu0 1
        %1341 = vperm.xlu0 %1340, %v242
        %v1342 = vpop.permute.xlu0 %1341
        %v1345 = vunpack.c.l.s4 839922192
        %v1346 = vunpack.c.0.s8 %v1345
        %v1347 = vlaneseq
        %v1348 = vshrl.u32 %v1347, 7
        %v1349 = vsub.s32 %v1346, %v1348
        %v1350 = vrot.slane %v1342, %v1349
        %1351 = vset.pattern.permute.xlu0 1
        %1352 = vperm.xlu0 %1351, %v243
        %v1353 = vpop.permute.xlu0 %1352
        %v1356 = vunpack.c.l.s4 839922192
        %v1357 = vunpack.c.0.s8 %v1356
        %v1358 = vlaneseq
        %v1359 = vshrl.u32 %v1358, 7
        %v1360 = vsub.s32 %v1357, %v1359
        %v1361 = vrot.slane %v1353, %v1360
        %1362 = vset.pattern.permute.xlu0 1
        %1363 = vperm.xlu0 %1362, %v244
        %v1364 = vpop.permute.xlu0 %1363
        %v1367 = vunpack.c.l.s4 839922192
        %v1368 = vunpack.c.0.s8 %v1367
        %v1369 = vlaneseq
        %v1370 = vshrl.u32 %v1369, 7
        %v1371 = vsub.s32 %v1368, %v1370
        %v1372 = vrot.slane %v1364, %v1371
        %1373 = vset.pattern.permute.xlu0 1
        %1374 = vperm.xlu0 %1373, %v245
        %v1375 = vpop.permute.xlu0 %1374
        %v1378 = vunpack.c.l.s4 839922192
        %v1379 = vunpack.c.0.s8 %v1378
        %v1380 = vlaneseq
        %v1381 = vshrl.u32 %v1380, 7
        %v1382 = vsub.s32 %v1379, %v1381
        %v1383 = vrot.slane %v1375, %v1382
        %1384 = vset.pattern.permute.xlu0 1
        %1385 = vperm.xlu0 %1384, %v246
        %v1386 = vpop.permute.xlu0 %1385
        %v1389 = vunpack.c.l.s4 839922192
        %v1390 = vunpack.c.0.s8 %v1389
        %v1391 = vlaneseq
        %v1392 = vshrl.u32 %v1391, 7
        %v1393 = vsub.s32 %v1390, %v1392
        %v1394 = vrot.slane %v1386, %v1393
        %1395 = vset.pattern.permute.xlu0 1
        %1396 = vperm.xlu0 %1395, %v247
        %v1397 = vpop.permute.xlu0 %1396
        %v1400 = vunpack.c.l.s4 839922192
        %v1401 = vunpack.c.0.s8 %v1400
        %v1402 = vlaneseq
        %v1403 = vshrl.u32 %v1402, 7
        %v1404 = vsub.s32 %v1401, %v1403
        %v1405 = vrot.slane %v1397, %v1404
        %1406 = vset.pattern.permute.xlu0 1
        %1407 = vperm.xlu0 %1406, %v248
        %v1408 = vpop.permute.xlu0 %1407
        %v1411 = vunpack.c.l.s4 839922192
        %v1412 = vunpack.c.0.s8 %v1411
        %v1413 = vlaneseq
        %v1414 = vshrl.u32 %v1413, 7
        %v1415 = vsub.s32 %v1412, %v1414
        %v1416 = vrot.slane %v1408, %v1415
        %1417 = vset.pattern.permute.xlu0 1
        %1418 = vperm.xlu0 %1417, %v249
        %v1419 = vpop.permute.xlu0 %1418
        %v1422 = vunpack.c.l.s4 839922192
        %v1423 = vunpack.c.0.s8 %v1422
        %v1424 = vlaneseq
        %v1425 = vshrl.u32 %v1424, 7
        %v1426 = vsub.s32 %v1423, %v1425
        %v1427 = vrot.slane %v1419, %v1426
        %1428 = vset.pattern.permute.xlu0 1
        %1429 = vperm.xlu0 %1428, %v250
        %v1430 = vpop.permute.xlu0 %1429
        %v1433 = vunpack.c.l.s4 839922192
        %v1434 = vunpack.c.0.s8 %v1433
        %v1435 = vlaneseq
        %v1436 = vshrl.u32 %v1435, 7
        %v1437 = vsub.s32 %v1434, %v1436
        %v1438 = vrot.slane %v1430, %v1437
        %1439 = vset.pattern.permute.xlu0 1
        %1440 = vperm.xlu0 %1439, %v251
        %v1441 = vpop.permute.xlu0 %1440
        %v1444 = vunpack.c.l.s4 839922192
        %v1445 = vunpack.c.0.s8 %v1444
        %v1446 = vlaneseq
        %v1447 = vshrl.u32 %v1446, 7
        %v1448 = vsub.s32 %v1445, %v1447
        %v1449 = vrot.slane %v1441, %v1448
        %1450 = vset.pattern.permute.xlu0 1
        %1451 = vperm.xlu0 %1450, %v252
        %v1452 = vpop.permute.xlu0 %1451
        %v1455 = vunpack.c.l.s4 839922192
        %v1456 = vunpack.c.0.s8 %v1455
        %v1457 = vlaneseq
        %v1458 = vshrl.u32 %v1457, 7
        %v1459 = vsub.s32 %v1456, %v1458
        %v1460 = vrot.slane %v1452, %v1459
        %1461 = vset.pattern.permute.xlu0 1
        %1462 = vperm.xlu0 %1461, %v253
        %v1463 = vpop.permute.xlu0 %1462
        %v1466 = vunpack.c.l.s4 839922192
        %v1467 = vunpack.c.0.s8 %v1466
        %v1468 = vlaneseq
        %v1469 = vshrl.u32 %v1468, 7
        %v1470 = vsub.s32 %v1467, %v1469
        %v1471 = vrot.slane %v1463, %v1470
        %1472 = vset.pattern.permute.xlu0 1
        %1473 = vperm.xlu0 %1472, %v254
        %v1474 = vpop.permute.xlu0 %1473
        %v1477 = vunpack.c.l.s4 839922192
        %v1478 = vunpack.c.0.s8 %v1477
        %v1479 = vlaneseq
        %v1480 = vshrl.u32 %v1479, 7
        %v1481 = vsub.s32 %v1478, %v1480
        %v1482 = vrot.slane %v1474, %v1481
        %v1483 = vmul.bf16 %v223, %v1141
        %v1484 = vmul.bf16 %v224, %v1152
        %v1485 = vmul.bf16 %v225, %v1163
        %v1486 = vmul.bf16 %v226, %v1174
        %v1487 = vmul.bf16 %v227, %v1185
        %v1488 = vmul.bf16 %v228, %v1196
        %v1489 = vmul.bf16 %v229, %v1207
        %v1490 = vmul.bf16 %v230, %v1218
        %v1491 = vmul.bf16 %v231, %v1229
        %v1492 = vmul.bf16 %v232, %v1240
        %v1493 = vmul.bf16 %v233, %v1251
        %v1494 = vmul.bf16 %v234, %v1262
        %v1495 = vmul.bf16 %v235, %v1273
        %v1496 = vmul.bf16 %v236, %v1284
        %v1497 = vmul.bf16 %v237, %v1295
        %v1498 = vmul.bf16 %v238, %v1306
        %v1499 = vmul.bf16 %v239, %v1317
        %v1500 = vmul.bf16 %v240, %v1328
        %v1501 = vmul.bf16 %v241, %v1339
        %v1502 = vmul.bf16 %v242, %v1350
        %v1503 = vmul.bf16 %v243, %v1361
        %v1504 = vmul.bf16 %v244, %v1372
        %v1505 = vmul.bf16 %v245, %v1383
        %v1506 = vmul.bf16 %v246, %v1394
        %v1507 = vmul.bf16 %v247, %v1405
        %v1508 = vmul.bf16 %v248, %v1416
        %v1509 = vmul.bf16 %v249, %v1427
        %v1510 = vmul.bf16 %v250, %v1438
        %v1511 = vmul.bf16 %v251, %v1449
        %v1512 = vmul.bf16 %v252, %v1460
        %v1513 = vmul.bf16 %v253, %v1471
        %v1514 = vmul.bf16 %v254, %v1482
        %1515 = vset.pattern.permute.xlu0 2
        %1516 = vperm.xlu0 %1515, %v223
        %v1517 = vpop.permute.xlu0 %1516
        %v1520 = vunpack.c.l.s4 839922192
        %v1521 = vunpack.c.0.s8 %v1520
        %v1522 = vlaneseq
        %v1523 = vshrl.u32 %v1522, 7
        %v1524 = vsub.s32 %v1521, %v1523
        %v1525 = vrot.slane %v1517, %v1524
        %1526 = vset.pattern.permute.xlu0 2
        %1527 = vperm.xlu0 %1526, %v224
        %v1528 = vpop.permute.xlu0 %1527
        %v1531 = vunpack.c.l.s4 839922192
        %v1532 = vunpack.c.0.s8 %v1531
        %v1533 = vlaneseq
        %v1534 = vshrl.u32 %v1533, 7
        %v1535 = vsub.s32 %v1532, %v1534
        %v1536 = vrot.slane %v1528, %v1535
        %1537 = vset.pattern.permute.xlu0 2
        %1538 = vperm.xlu0 %1537, %v225
        %v1539 = vpop.permute.xlu0 %1538
        %v1542 = vunpack.c.l.s4 839922192
        %v1543 = vunpack.c.0.s8 %v1542
        %v1544 = vlaneseq
        %v1545 = vshrl.u32 %v1544, 7
        %v1546 = vsub.s32 %v1543, %v1545
        %v1547 = vrot.slane %v1539, %v1546
        %1548 = vset.pattern.permute.xlu0 2
        %1549 = vperm.xlu0 %1548, %v226
        %v1550 = vpop.permute.xlu0 %1549
        %v1553 = vunpack.c.l.s4 839922192
        %v1554 = vunpack.c.0.s8 %v1553
        %v1555 = vlaneseq
        %v1556 = vshrl.u32 %v1555, 7
        %v1557 = vsub.s32 %v1554, %v1556
        %v1558 = vrot.slane %v1550, %v1557
        %1559 = vset.pattern.permute.xlu0 2
        %1560 = vperm.xlu0 %1559, %v227
        %v1561 = vpop.permute.xlu0 %1560
        %v1564 = vunpack.c.l.s4 839922192
        %v1565 = vunpack.c.0.s8 %v1564
        %v1566 = vlaneseq
        %v1567 = vshrl.u32 %v1566, 7
        %v1568 = vsub.s32 %v1565, %v1567
        %v1569 = vrot.slane %v1561, %v1568
        %1570 = vset.pattern.permute.xlu0 2
        %1571 = vperm.xlu0 %1570, %v228
        %v1572 = vpop.permute.xlu0 %1571
        %v1575 = vunpack.c.l.s4 839922192
        %v1576 = vunpack.c.0.s8 %v1575
        %v1577 = vlaneseq
        %v1578 = vshrl.u32 %v1577, 7
        %v1579 = vsub.s32 %v1576, %v1578
        %v1580 = vrot.slane %v1572, %v1579
        %1581 = vset.pattern.permute.xlu0 2
        %1582 = vperm.xlu0 %1581, %v229
        %v1583 = vpop.permute.xlu0 %1582
        %v1586 = vunpack.c.l.s4 839922192
        %v1587 = vunpack.c.0.s8 %v1586
        %v1588 = vlaneseq
        %v1589 = vshrl.u32 %v1588, 7
        %v1590 = vsub.s32 %v1587, %v1589
        %v1591 = vrot.slane %v1583, %v1590
        %1592 = vset.pattern.permute.xlu0 2
        %1593 = vperm.xlu0 %1592, %v230
        %v1594 = vpop.permute.xlu0 %1593
        %v1597 = vunpack.c.l.s4 839922192
        %v1598 = vunpack.c.0.s8 %v1597
        %v1599 = vlaneseq
        %v1600 = vshrl.u32 %v1599, 7
        %v1601 = vsub.s32 %v1598, %v1600
        %v1602 = vrot.slane %v1594, %v1601
        %1603 = vset.pattern.permute.xlu0 2
        %1604 = vperm.xlu0 %1603, %v231
        %v1605 = vpop.permute.xlu0 %1604
        %v1608 = vunpack.c.l.s4 839922192
        %v1609 = vunpack.c.0.s8 %v1608
        %v1610 = vlaneseq
        %v1611 = vshrl.u32 %v1610, 7
        %v1612 = vsub.s32 %v1609, %v1611
        %v1613 = vrot.slane %v1605, %v1612
        %1614 = vset.pattern.permute.xlu0 2
        %1615 = vperm.xlu0 %1614, %v232
        %v1616 = vpop.permute.xlu0 %1615
        %v1619 = vunpack.c.l.s4 839922192
        %v1620 = vunpack.c.0.s8 %v1619
        %v1621 = vlaneseq
        %v1622 = vshrl.u32 %v1621, 7
        %v1623 = vsub.s32 %v1620, %v1622
        %v1624 = vrot.slane %v1616, %v1623
        %1625 = vset.pattern.permute.xlu0 2
        %1626 = vperm.xlu0 %1625, %v233
        %v1627 = vpop.permute.xlu0 %1626
        %v1630 = vunpack.c.l.s4 839922192
        %v1631 = vunpack.c.0.s8 %v1630
        %v1632 = vlaneseq
        %v1633 = vshrl.u32 %v1632, 7
        %v1634 = vsub.s32 %v1631, %v1633
        %v1635 = vrot.slane %v1627, %v1634
        %1636 = vset.pattern.permute.xlu0 2
        %1637 = vperm.xlu0 %1636, %v234
        %v1638 = vpop.permute.xlu0 %1637
        %v1641 = vunpack.c.l.s4 839922192
        %v1642 = vunpack.c.0.s8 %v1641
        %v1643 = vlaneseq
        %v1644 = vshrl.u32 %v1643, 7
        %v1645 = vsub.s32 %v1642, %v1644
        %v1646 = vrot.slane %v1638, %v1645
        %1647 = vset.pattern.permute.xlu0 2
        %1648 = vperm.xlu0 %1647, %v235
        %v1649 = vpop.permute.xlu0 %1648
        %v1652 = vunpack.c.l.s4 839922192
        %v1653 = vunpack.c.0.s8 %v1652
        %v1654 = vlaneseq
        %v1655 = vshrl.u32 %v1654, 7
        %v1656 = vsub.s32 %v1653, %v1655
        %v1657 = vrot.slane %v1649, %v1656
        %1658 = vset.pattern.permute.xlu0 2
        %1659 = vperm.xlu0 %1658, %v236
        %v1660 = vpop.permute.xlu0 %1659
        %v1663 = vunpack.c.l.s4 839922192
        %v1664 = vunpack.c.0.s8 %v1663
        %v1665 = vlaneseq
        %v1666 = vshrl.u32 %v1665, 7
        %v1667 = vsub.s32 %v1664, %v1666
        %v1668 = vrot.slane %v1660, %v1667
        %1669 = vset.pattern.permute.xlu0 2
        %1670 = vperm.xlu0 %1669, %v237
        %v1671 = vpop.permute.xlu0 %1670
        %v1674 = vunpack.c.l.s4 839922192
        %v1675 = vunpack.c.0.s8 %v1674
        %v1676 = vlaneseq
        %v1677 = vshrl.u32 %v1676, 7
        %v1678 = vsub.s32 %v1675, %v1677
        %v1679 = vrot.slane %v1671, %v1678
        %1680 = vset.pattern.permute.xlu0 2
        %1681 = vperm.xlu0 %1680, %v238
        %v1682 = vpop.permute.xlu0 %1681
        %v1685 = vunpack.c.l.s4 839922192
        %v1686 = vunpack.c.0.s8 %v1685
        %v1687 = vlaneseq
        %v1688 = vshrl.u32 %v1687, 7
        %v1689 = vsub.s32 %v1686, %v1688
        %v1690 = vrot.slane %v1682, %v1689
        %1691 = vset.pattern.permute.xlu0 2
        %1692 = vperm.xlu0 %1691, %v239
        %v1693 = vpop.permute.xlu0 %1692
        %v1696 = vunpack.c.l.s4 839922192
        %v1697 = vunpack.c.0.s8 %v1696
        %v1698 = vlaneseq
        %v1699 = vshrl.u32 %v1698, 7
        %v1700 = vsub.s32 %v1697, %v1699
        %v1701 = vrot.slane %v1693, %v1700
        %1702 = vset.pattern.permute.xlu0 2
        %1703 = vperm.xlu0 %1702, %v240
        %v1704 = vpop.permute.xlu0 %1703
        %v1707 = vunpack.c.l.s4 839922192
        %v1708 = vunpack.c.0.s8 %v1707
        %v1709 = vlaneseq
        %v1710 = vshrl.u32 %v1709, 7
        %v1711 = vsub.s32 %v1708, %v1710
        %v1712 = vrot.slane %v1704, %v1711
        %1713 = vset.pattern.permute.xlu0 2
        %1714 = vperm.xlu0 %1713, %v241
        %v1715 = vpop.permute.xlu0 %1714
        %v1718 = vunpack.c.l.s4 839922192
        %v1719 = vunpack.c.0.s8 %v1718
        %v1720 = vlaneseq
        %v1721 = vshrl.u32 %v1720, 7
        %v1722 = vsub.s32 %v1719, %v1721
        %v1723 = vrot.slane %v1715, %v1722
        %1724 = vset.pattern.permute.xlu0 2
        %1725 = vperm.xlu0 %1724, %v242
        %v1726 = vpop.permute.xlu0 %1725
        %v1729 = vunpack.c.l.s4 839922192
        %v1730 = vunpack.c.0.s8 %v1729
        %v1731 = vlaneseq
        %v1732 = vshrl.u32 %v1731, 7
        %v1733 = vsub.s32 %v1730, %v1732
        %v1734 = vrot.slane %v1726, %v1733
        %1735 = vset.pattern.permute.xlu0 2
        %1736 = vperm.xlu0 %1735, %v243
        %v1737 = vpop.permute.xlu0 %1736
        %v1740 = vunpack.c.l.s4 839922192
        %v1741 = vunpack.c.0.s8 %v1740
        %v1742 = vlaneseq
        %v1743 = vshrl.u32 %v1742, 7
        %v1744 = vsub.s32 %v1741, %v1743
        %v1745 = vrot.slane %v1737, %v1744
        %1746 = vset.pattern.permute.xlu0 2
        %1747 = vperm.xlu0 %1746, %v244
        %v1748 = vpop.permute.xlu0 %1747
        %v1751 = vunpack.c.l.s4 839922192
        %v1752 = vunpack.c.0.s8 %v1751
        %v1753 = vlaneseq
        %v1754 = vshrl.u32 %v1753, 7
        %v1755 = vsub.s32 %v1752, %v1754
        %v1756 = vrot.slane %v1748, %v1755
        %1757 = vset.pattern.permute.xlu0 2
        %1758 = vperm.xlu0 %1757, %v245
        %v1759 = vpop.permute.xlu0 %1758
        %v1762 = vunpack.c.l.s4 839922192
        %v1763 = vunpack.c.0.s8 %v1762
        %v1764 = vlaneseq
        %v1765 = vshrl.u32 %v1764, 7
        %v1766 = vsub.s32 %v1763, %v1765
        %v1767 = vrot.slane %v1759, %v1766
        %1768 = vset.pattern.permute.xlu0 2
        %1769 = vperm.xlu0 %1768, %v246
        %v1770 = vpop.permute.xlu0 %1769
        %v1773 = vunpack.c.l.s4 839922192
        %v1774 = vunpack.c.0.s8 %v1773
        %v1775 = vlaneseq
        %v1776 = vshrl.u32 %v1775, 7
        %v1777 = vsub.s32 %v1774, %v1776
        %v1778 = vrot.slane %v1770, %v1777
        %1779 = vset.pattern.permute.xlu0 2
        %1780 = vperm.xlu0 %1779, %v247
        %v1781 = vpop.permute.xlu0 %1780
        %v1784 = vunpack.c.l.s4 839922192
        %v1785 = vunpack.c.0.s8 %v1784
        %v1786 = vlaneseq
        %v1787 = vshrl.u32 %v1786, 7
        %v1788 = vsub.s32 %v1785, %v1787
        %v1789 = vrot.slane %v1781, %v1788
        %1790 = vset.pattern.permute.xlu0 2
        %1791 = vperm.xlu0 %1790, %v248
        %v1792 = vpop.permute.xlu0 %1791
        %v1795 = vunpack.c.l.s4 839922192
        %v1796 = vunpack.c.0.s8 %v1795
        %v1797 = vlaneseq
        %v1798 = vshrl.u32 %v1797, 7
        %v1799 = vsub.s32 %v1796, %v1798
        %v1800 = vrot.slane %v1792, %v1799
        %1801 = vset.pattern.permute.xlu0 2
        %1802 = vperm.xlu0 %1801, %v249
        %v1803 = vpop.permute.xlu0 %1802
        %v1806 = vunpack.c.l.s4 839922192
        %v1807 = vunpack.c.0.s8 %v1806
        %v1808 = vlaneseq
        %v1809 = vshrl.u32 %v1808, 7
        %v1810 = vsub.s32 %v1807, %v1809
        %v1811 = vrot.slane %v1803, %v1810
        %1812 = vset.pattern.permute.xlu0 2
        %1813 = vperm.xlu0 %1812, %v250
        %v1814 = vpop.permute.xlu0 %1813
        %v1817 = vunpack.c.l.s4 839922192
        %v1818 = vunpack.c.0.s8 %v1817
        %v1819 = vlaneseq
        %v1820 = vshrl.u32 %v1819, 7
        %v1821 = vsub.s32 %v1818, %v1820
        %v1822 = vrot.slane %v1814, %v1821
        %1823 = vset.pattern.permute.xlu0 2
        %1824 = vperm.xlu0 %1823, %v251
        %v1825 = vpop.permute.xlu0 %1824
        %v1828 = vunpack.c.l.s4 839922192
        %v1829 = vunpack.c.0.s8 %v1828
        %v1830 = vlaneseq
        %v1831 = vshrl.u32 %v1830, 7
        %v1832 = vsub.s32 %v1829, %v1831
        %v1833 = vrot.slane %v1825, %v1832
        %1834 = vset.pattern.permute.xlu0 2
        %1835 = vperm.xlu0 %1834, %v252
        %v1836 = vpop.permute.xlu0 %1835
        %v1839 = vunpack.c.l.s4 839922192
        %v1840 = vunpack.c.0.s8 %v1839
        %v1841 = vlaneseq
        %v1842 = vshrl.u32 %v1841, 7
        %v1843 = vsub.s32 %v1840, %v1842
        %v1844 = vrot.slane %v1836, %v1843
        %1845 = vset.pattern.permute.xlu0 2
        %1846 = vperm.xlu0 %1845, %v253
        %v1847 = vpop.permute.xlu0 %1846
        %v1850 = vunpack.c.l.s4 839922192
        %v1851 = vunpack.c.0.s8 %v1850
        %v1852 = vlaneseq
        %v1853 = vshrl.u32 %v1852, 7
        %v1854 = vsub.s32 %v1851, %v1853
        %v1855 = vrot.slane %v1847, %v1854
        %1856 = vset.pattern.permute.xlu0 2
        %1857 = vperm.xlu0 %1856, %v254
        %v1858 = vpop.permute.xlu0 %1857
        %v1861 = vunpack.c.l.s4 839922192
        %v1862 = vunpack.c.0.s8 %v1861
        %v1863 = vlaneseq
        %v1864 = vshrl.u32 %v1863, 7
        %v1865 = vsub.s32 %v1862, %v1864
        %v1866 = vrot.slane %v1858, %v1865
        %v1867 = vmul.bf16 %v223, %v1525
        %v1868 = vmul.bf16 %v224, %v1536
        %v1869 = vmul.bf16 %v225, %v1547
        %v1870 = vmul.bf16 %v226, %v1558
        %v1871 = vmul.bf16 %v227, %v1569
        %v1872 = vmul.bf16 %v228, %v1580
        %v1873 = vmul.bf16 %v229, %v1591
        %v1874 = vmul.bf16 %v230, %v1602
        %v1875 = vmul.bf16 %v231, %v1613
        %v1876 = vmul.bf16 %v232, %v1624
        %v1877 = vmul.bf16 %v233, %v1635
        %v1878 = vmul.bf16 %v234, %v1646
        %v1879 = vmul.bf16 %v235, %v1657
        %v1880 = vmul.bf16 %v236, %v1668
        %v1881 = vmul.bf16 %v237, %v1679
        %v1882 = vmul.bf16 %v238, %v1690
        %v1883 = vmul.bf16 %v239, %v1701
        %v1884 = vmul.bf16 %v240, %v1712
        %v1885 = vmul.bf16 %v241, %v1723
        %v1886 = vmul.bf16 %v242, %v1734
        %v1887 = vmul.bf16 %v243, %v1745
        %v1888 = vmul.bf16 %v244, %v1756
        %v1889 = vmul.bf16 %v245, %v1767
        %v1890 = vmul.bf16 %v246, %v1778
        %v1891 = vmul.bf16 %v247, %v1789
        %v1892 = vmul.bf16 %v248, %v1800
        %v1893 = vmul.bf16 %v249, %v1811
        %v1894 = vmul.bf16 %v250, %v1822
        %v1895 = vmul.bf16 %v251, %v1833
        %v1896 = vmul.bf16 %v252, %v1844
        %v1897 = vmul.bf16 %v253, %v1855
        %v1898 = vmul.bf16 %v254, %v1866
        %1899 = vset.pattern.permute.xlu0 3
        %1900 = vperm.xlu0 %1899, %v223
        %v1901 = vpop.permute.xlu0 %1900
        %v1904 = vunpack.c.l.s4 839922192
        %v1905 = vunpack.c.0.s8 %v1904
        %v1906 = vlaneseq
        %v1907 = vshrl.u32 %v1906, 7
        %v1908 = vsub.s32 %v1905, %v1907
        %v1909 = vrot.slane %v1901, %v1908
        %1910 = vset.pattern.permute.xlu0 3
        %1911 = vperm.xlu0 %1910, %v224
        %v1912 = vpop.permute.xlu0 %1911
        %v1915 = vunpack.c.l.s4 839922192
        %v1916 = vunpack.c.0.s8 %v1915
        %v1917 = vlaneseq
        %v1918 = vshrl.u32 %v1917, 7
        %v1919 = vsub.s32 %v1916, %v1918
        %v1920 = vrot.slane %v1912, %v1919
        %1921 = vset.pattern.permute.xlu0 3
        %1922 = vperm.xlu0 %1921, %v225
        %v1923 = vpop.permute.xlu0 %1922
        %v1926 = vunpack.c.l.s4 839922192
        %v1927 = vunpack.c.0.s8 %v1926
        %v1928 = vlaneseq
        %v1929 = vshrl.u32 %v1928, 7
        %v1930 = vsub.s32 %v1927, %v1929
        %v1931 = vrot.slane %v1923, %v1930
        %1932 = vset.pattern.permute.xlu0 3
        %1933 = vperm.xlu0 %1932, %v226
        %v1934 = vpop.permute.xlu0 %1933
        %v1937 = vunpack.c.l.s4 839922192
        %v1938 = vunpack.c.0.s8 %v1937
        %v1939 = vlaneseq
        %v1940 = vshrl.u32 %v1939, 7
        %v1941 = vsub.s32 %v1938, %v1940
        %v1942 = vrot.slane %v1934, %v1941
        %1943 = vset.pattern.permute.xlu0 3
        %1944 = vperm.xlu0 %1943, %v227
        %v1945 = vpop.permute.xlu0 %1944
        %v1948 = vunpack.c.l.s4 839922192
        %v1949 = vunpack.c.0.s8 %v1948
        %v1950 = vlaneseq
        %v1951 = vshrl.u32 %v1950, 7
        %v1952 = vsub.s32 %v1949, %v1951
        %v1953 = vrot.slane %v1945, %v1952
        %1954 = vset.pattern.permute.xlu0 3
        %1955 = vperm.xlu0 %1954, %v228
        %v1956 = vpop.permute.xlu0 %1955
        %v1959 = vunpack.c.l.s4 839922192
        %v1960 = vunpack.c.0.s8 %v1959
        %v1961 = vlaneseq
        %v1962 = vshrl.u32 %v1961, 7
        %v1963 = vsub.s32 %v1960, %v1962
        %v1964 = vrot.slane %v1956, %v1963
        %1965 = vset.pattern.permute.xlu0 3
        %1966 = vperm.xlu0 %1965, %v229
        %v1967 = vpop.permute.xlu0 %1966
        %v1970 = vunpack.c.l.s4 839922192
        %v1971 = vunpack.c.0.s8 %v1970
        %v1972 = vlaneseq
        %v1973 = vshrl.u32 %v1972, 7
        %v1974 = vsub.s32 %v1971, %v1973
        %v1975 = vrot.slane %v1967, %v1974
        %1976 = vset.pattern.permute.xlu0 3
        %1977 = vperm.xlu0 %1976, %v230
        %v1978 = vpop.permute.xlu0 %1977
        %v1981 = vunpack.c.l.s4 839922192
        %v1982 = vunpack.c.0.s8 %v1981
        %v1983 = vlaneseq
        %v1984 = vshrl.u32 %v1983, 7
        %v1985 = vsub.s32 %v1982, %v1984
        %v1986 = vrot.slane %v1978, %v1985
        %1987 = vset.pattern.permute.xlu0 3
        %1988 = vperm.xlu0 %1987, %v231
        %v1989 = vpop.permute.xlu0 %1988
        %v1992 = vunpack.c.l.s4 839922192
        %v1993 = vunpack.c.0.s8 %v1992
        %v1994 = vlaneseq
        %v1995 = vshrl.u32 %v1994, 7
        %v1996 = vsub.s32 %v1993, %v1995
        %v1997 = vrot.slane %v1989, %v1996
        %1998 = vset.pattern.permute.xlu0 3
        %1999 = vperm.xlu0 %1998, %v232
        %v2000 = vpop.permute.xlu0 %1999
        %v2003 = vunpack.c.l.s4 839922192
        %v2004 = vunpack.c.0.s8 %v2003
        %v2005 = vlaneseq
        %v2006 = vshrl.u32 %v2005, 7
        %v2007 = vsub.s32 %v2004, %v2006
        %v2008 = vrot.slane %v2000, %v2007
        %2009 = vset.pattern.permute.xlu0 3
        %2010 = vperm.xlu0 %2009, %v233
        %v2011 = vpop.permute.xlu0 %2010
        %v2014 = vunpack.c.l.s4 839922192
        %v2015 = vunpack.c.0.s8 %v2014
        %v2016 = vlaneseq
        %v2017 = vshrl.u32 %v2016, 7
        %v2018 = vsub.s32 %v2015, %v2017
        %v2019 = vrot.slane %v2011, %v2018
        %2020 = vset.pattern.permute.xlu0 3
        %2021 = vperm.xlu0 %2020, %v234
        %v2022 = vpop.permute.xlu0 %2021
        %v2025 = vunpack.c.l.s4 839922192
        %v2026 = vunpack.c.0.s8 %v2025
        %v2027 = vlaneseq
        %v2028 = vshrl.u32 %v2027, 7
        %v2029 = vsub.s32 %v2026, %v2028
        %v2030 = vrot.slane %v2022, %v2029
        %2031 = vset.pattern.permute.xlu0 3
        %2032 = vperm.xlu0 %2031, %v235
        %v2033 = vpop.permute.xlu0 %2032
        %v2036 = vunpack.c.l.s4 839922192
        %v2037 = vunpack.c.0.s8 %v2036
        %v2038 = vlaneseq
        %v2039 = vshrl.u32 %v2038, 7
        %v2040 = vsub.s32 %v2037, %v2039
        %v2041 = vrot.slane %v2033, %v2040
        %2042 = vset.pattern.permute.xlu0 3
        %2043 = vperm.xlu0 %2042, %v236
        %v2044 = vpop.permute.xlu0 %2043
        %v2047 = vunpack.c.l.s4 839922192
        %v2048 = vunpack.c.0.s8 %v2047
        %v2049 = vlaneseq
        %v2050 = vshrl.u32 %v2049, 7
        %v2051 = vsub.s32 %v2048, %v2050
        %v2052 = vrot.slane %v2044, %v2051
        %2053 = vset.pattern.permute.xlu0 3
        %2054 = vperm.xlu0 %2053, %v237
        %v2055 = vpop.permute.xlu0 %2054
        %v2058 = vunpack.c.l.s4 839922192
        %v2059 = vunpack.c.0.s8 %v2058
        %v2060 = vlaneseq
        %v2061 = vshrl.u32 %v2060, 7
        %v2062 = vsub.s32 %v2059, %v2061
        %v2063 = vrot.slane %v2055, %v2062
        %2064 = vset.pattern.permute.xlu0 3
        %2065 = vperm.xlu0 %2064, %v238
        %v2066 = vpop.permute.xlu0 %2065
        %v2069 = vunpack.c.l.s4 839922192
        %v2070 = vunpack.c.0.s8 %v2069
        %v2071 = vlaneseq
        %v2072 = vshrl.u32 %v2071, 7
        %v2073 = vsub.s32 %v2070, %v2072
        %v2074 = vrot.slane %v2066, %v2073
        %2075 = vset.pattern.permute.xlu0 3
        %2076 = vperm.xlu0 %2075, %v239
        %v2077 = vpop.permute.xlu0 %2076
        %v2080 = vunpack.c.l.s4 839922192
        %v2081 = vunpack.c.0.s8 %v2080
        %v2082 = vlaneseq
        %v2083 = vshrl.u32 %v2082, 7
        %v2084 = vsub.s32 %v2081, %v2083
        %v2085 = vrot.slane %v2077, %v2084
        %2086 = vset.pattern.permute.xlu0 3
        %2087 = vperm.xlu0 %2086, %v240
        %v2088 = vpop.permute.xlu0 %2087
        %v2091 = vunpack.c.l.s4 839922192
        %v2092 = vunpack.c.0.s8 %v2091
        %v2093 = vlaneseq
        %v2094 = vshrl.u32 %v2093, 7
        %v2095 = vsub.s32 %v2092, %v2094
        %v2096 = vrot.slane %v2088, %v2095
        %2097 = vset.pattern.permute.xlu0 3
        %2098 = vperm.xlu0 %2097, %v241
        %v2099 = vpop.permute.xlu0 %2098
        %v2102 = vunpack.c.l.s4 839922192
        %v2103 = vunpack.c.0.s8 %v2102
        %v2104 = vlaneseq
        %v2105 = vshrl.u32 %v2104, 7
        %v2106 = vsub.s32 %v2103, %v2105
        %v2107 = vrot.slane %v2099, %v2106
        %2108 = vset.pattern.permute.xlu0 3
        %2109 = vperm.xlu0 %2108, %v242
        %v2110 = vpop.permute.xlu0 %2109
        %v2113 = vunpack.c.l.s4 839922192
        %v2114 = vunpack.c.0.s8 %v2113
        %v2115 = vlaneseq
        %v2116 = vshrl.u32 %v2115, 7
        %v2117 = vsub.s32 %v2114, %v2116
        %v2118 = vrot.slane %v2110, %v2117
        %2119 = vset.pattern.permute.xlu0 3
        %2120 = vperm.xlu0 %2119, %v243
        %v2121 = vpop.permute.xlu0 %2120
        %v2124 = vunpack.c.l.s4 839922192
        %v2125 = vunpack.c.0.s8 %v2124
        %v2126 = vlaneseq
        %v2127 = vshrl.u32 %v2126, 7
        %v2128 = vsub.s32 %v2125, %v2127
        %v2129 = vrot.slane %v2121, %v2128
        %2130 = vset.pattern.permute.xlu0 3
        %2131 = vperm.xlu0 %2130, %v244
        %v2132 = vpop.permute.xlu0 %2131
        %v2135 = vunpack.c.l.s4 839922192
        %v2136 = vunpack.c.0.s8 %v2135
        %v2137 = vlaneseq
        %v2138 = vshrl.u32 %v2137, 7
        %v2139 = vsub.s32 %v2136, %v2138
        %v2140 = vrot.slane %v2132, %v2139
        %2141 = vset.pattern.permute.xlu0 3
        %2142 = vperm.xlu0 %2141, %v245
        %v2143 = vpop.permute.xlu0 %2142
        %v2146 = vunpack.c.l.s4 839922192
        %v2147 = vunpack.c.0.s8 %v2146
        %v2148 = vlaneseq
        %v2149 = vshrl.u32 %v2148, 7
        %v2150 = vsub.s32 %v2147, %v2149
        %v2151 = vrot.slane %v2143, %v2150
        %2152 = vset.pattern.permute.xlu0 3
        %2153 = vperm.xlu0 %2152, %v246
        %v2154 = vpop.permute.xlu0 %2153
        %v2157 = vunpack.c.l.s4 839922192
        %v2158 = vunpack.c.0.s8 %v2157
        %v2159 = vlaneseq
        %v2160 = vshrl.u32 %v2159, 7
        %v2161 = vsub.s32 %v2158, %v2160
        %v2162 = vrot.slane %v2154, %v2161
        %2163 = vset.pattern.permute.xlu0 3
        %2164 = vperm.xlu0 %2163, %v247
        %v2165 = vpop.permute.xlu0 %2164
        %v2168 = vunpack.c.l.s4 839922192
        %v2169 = vunpack.c.0.s8 %v2168
        %v2170 = vlaneseq
        %v2171 = vshrl.u32 %v2170, 7
        %v2172 = vsub.s32 %v2169, %v2171
        %v2173 = vrot.slane %v2165, %v2172
        %2174 = vset.pattern.permute.xlu0 3
        %2175 = vperm.xlu0 %2174, %v248
        %v2176 = vpop.permute.xlu0 %2175
        %v2179 = vunpack.c.l.s4 839922192
        %v2180 = vunpack.c.0.s8 %v2179
        %v2181 = vlaneseq
        %v2182 = vshrl.u32 %v2181, 7
        %v2183 = vsub.s32 %v2180, %v2182
        %v2184 = vrot.slane %v2176, %v2183
        %2185 = vset.pattern.permute.xlu0 3
        %2186 = vperm.xlu0 %2185, %v249
        %v2187 = vpop.permute.xlu0 %2186
        %v2190 = vunpack.c.l.s4 839922192
        %v2191 = vunpack.c.0.s8 %v2190
        %v2192 = vlaneseq
        %v2193 = vshrl.u32 %v2192, 7
        %v2194 = vsub.s32 %v2191, %v2193
        %v2195 = vrot.slane %v2187, %v2194
        %2196 = vset.pattern.permute.xlu0 3
        %2197 = vperm.xlu0 %2196, %v250
        %v2198 = vpop.permute.xlu0 %2197
        %v2201 = vunpack.c.l.s4 839922192
        %v2202 = vunpack.c.0.s8 %v2201
        %v2203 = vlaneseq
        %v2204 = vshrl.u32 %v2203, 7
        %v2205 = vsub.s32 %v2202, %v2204
        %v2206 = vrot.slane %v2198, %v2205
        %2207 = vset.pattern.permute.xlu0 3
        %2208 = vperm.xlu0 %2207, %v251
        %v2209 = vpop.permute.xlu0 %2208
        %v2212 = vunpack.c.l.s4 839922192
        %v2213 = vunpack.c.0.s8 %v2212
        %v2214 = vlaneseq
        %v2215 = vshrl.u32 %v2214, 7
        %v2216 = vsub.s32 %v2213, %v2215
        %v2217 = vrot.slane %v2209, %v2216
        %2218 = vset.pattern.permute.xlu0 3
        %2219 = vperm.xlu0 %2218, %v252
        %v2220 = vpop.permute.xlu0 %2219
        %v2223 = vunpack.c.l.s4 839922192
        %v2224 = vunpack.c.0.s8 %v2223
        %v2225 = vlaneseq
        %v2226 = vshrl.u32 %v2225, 7
        %v2227 = vsub.s32 %v2224, %v2226
        %v2228 = vrot.slane %v2220, %v2227
        %2229 = vset.pattern.permute.xlu0 3
        %2230 = vperm.xlu0 %2229, %v253
        %v2231 = vpop.permute.xlu0 %2230
        %v2234 = vunpack.c.l.s4 839922192
        %v2235 = vunpack.c.0.s8 %v2234
        %v2236 = vlaneseq
        %v2237 = vshrl.u32 %v2236, 7
        %v2238 = vsub.s32 %v2235, %v2237
        %v2239 = vrot.slane %v2231, %v2238
        %2240 = vset.pattern.permute.xlu0 3
        %2241 = vperm.xlu0 %2240, %v254
        %v2242 = vpop.permute.xlu0 %2241
        %v2245 = vunpack.c.l.s4 839922192
        %v2246 = vunpack.c.0.s8 %v2245
        %v2247 = vlaneseq
        %v2248 = vshrl.u32 %v2247, 7
        %v2249 = vsub.s32 %v2246, %v2248
        %v2250 = vrot.slane %v2242, %v2249
        %v2251 = vmul.bf16 %v223, %v1909
        %v2252 = vmul.bf16 %v224, %v1920
        %v2253 = vmul.bf16 %v225, %v1931
        %v2254 = vmul.bf16 %v226, %v1942
        %v2255 = vmul.bf16 %v227, %v1953
        %v2256 = vmul.bf16 %v228, %v1964
        %v2257 = vmul.bf16 %v229, %v1975
        %v2258 = vmul.bf16 %v230, %v1986
        %v2259 = vmul.bf16 %v231, %v1997
        %v2260 = vmul.bf16 %v232, %v2008
        %v2261 = vmul.bf16 %v233, %v2019
        %v2262 = vmul.bf16 %v234, %v2030
        %v2263 = vmul.bf16 %v235, %v2041
        %v2264 = vmul.bf16 %v236, %v2052
        %v2265 = vmul.bf16 %v237, %v2063
        %v2266 = vmul.bf16 %v238, %v2074
        %v2267 = vmul.bf16 %v239, %v2085
        %v2268 = vmul.bf16 %v240, %v2096
        %v2269 = vmul.bf16 %v241, %v2107
        %v2270 = vmul.bf16 %v242, %v2118
        %v2271 = vmul.bf16 %v243, %v2129
        %v2272 = vmul.bf16 %v244, %v2140
        %v2273 = vmul.bf16 %v245, %v2151
        %v2274 = vmul.bf16 %v246, %v2162
        %v2275 = vmul.bf16 %v247, %v2173
        %v2276 = vmul.bf16 %v248, %v2184
        %v2277 = vmul.bf16 %v249, %v2195
        %v2278 = vmul.bf16 %v250, %v2206
        %v2279 = vmul.bf16 %v251, %v2217
        %v2280 = vmul.bf16 %v252, %v2228
        %v2281 = vmul.bf16 %v253, %v2239
        %v2282 = vmul.bf16 %v254, %v2250
        %2283 = vset.pattern.permute.xlu0 4
        %2284 = vperm.xlu0 %2283, %v223
        %v2285 = vpop.permute.xlu0 %2284
        %v2288 = vunpack.c.l.s4 839922192
        %v2289 = vunpack.c.0.s8 %v2288
        %v2290 = vlaneseq
        %v2291 = vshrl.u32 %v2290, 7
        %v2292 = vsub.s32 %v2289, %v2291
        %v2293 = vrot.slane %v2285, %v2292
        %2294 = vset.pattern.permute.xlu0 4
        %2295 = vperm.xlu0 %2294, %v224
        %v2296 = vpop.permute.xlu0 %2295
        %v2299 = vunpack.c.l.s4 839922192
        %v2300 = vunpack.c.0.s8 %v2299
        %v2301 = vlaneseq
        %v2302 = vshrl.u32 %v2301, 7
        %v2303 = vsub.s32 %v2300, %v2302
        %v2304 = vrot.slane %v2296, %v2303
        %2305 = vset.pattern.permute.xlu0 4
        %2306 = vperm.xlu0 %2305, %v225
        %v2307 = vpop.permute.xlu0 %2306
        %v2310 = vunpack.c.l.s4 839922192
        %v2311 = vunpack.c.0.s8 %v2310
        %v2312 = vlaneseq
        %v2313 = vshrl.u32 %v2312, 7
        %v2314 = vsub.s32 %v2311, %v2313
        %v2315 = vrot.slane %v2307, %v2314
        %2316 = vset.pattern.permute.xlu0 4
        %2317 = vperm.xlu0 %2316, %v226
        %v2318 = vpop.permute.xlu0 %2317
        %v2321 = vunpack.c.l.s4 839922192
        %v2322 = vunpack.c.0.s8 %v2321
        %v2323 = vlaneseq
        %v2324 = vshrl.u32 %v2323, 7
        %v2325 = vsub.s32 %v2322, %v2324
        %v2326 = vrot.slane %v2318, %v2325
        %2327 = vset.pattern.permute.xlu0 4
        %2328 = vperm.xlu0 %2327, %v227
        %v2329 = vpop.permute.xlu0 %2328
        %v2332 = vunpack.c.l.s4 839922192
        %v2333 = vunpack.c.0.s8 %v2332
        %v2334 = vlaneseq
        %v2335 = vshrl.u32 %v2334, 7
        %v2336 = vsub.s32 %v2333, %v2335
        %v2337 = vrot.slane %v2329, %v2336
        %2338 = vset.pattern.permute.xlu0 4
        %2339 = vperm.xlu0 %2338, %v228
        %v2340 = vpop.permute.xlu0 %2339
        %v2343 = vunpack.c.l.s4 839922192
        %v2344 = vunpack.c.0.s8 %v2343
        %v2345 = vlaneseq
        %v2346 = vshrl.u32 %v2345, 7
        %v2347 = vsub.s32 %v2344, %v2346
        %v2348 = vrot.slane %v2340, %v2347
        %2349 = vset.pattern.permute.xlu0 4
        %2350 = vperm.xlu0 %2349, %v229
        %v2351 = vpop.permute.xlu0 %2350
        %v2354 = vunpack.c.l.s4 839922192
        %v2355 = vunpack.c.0.s8 %v2354
        %v2356 = vlaneseq
        %v2357 = vshrl.u32 %v2356, 7
        %v2358 = vsub.s32 %v2355, %v2357
        %v2359 = vrot.slane %v2351, %v2358
        %2360 = vset.pattern.permute.xlu0 4
        %2361 = vperm.xlu0 %2360, %v230
        %v2362 = vpop.permute.xlu0 %2361
        %v2365 = vunpack.c.l.s4 839922192
        %v2366 = vunpack.c.0.s8 %v2365
        %v2367 = vlaneseq
        %v2368 = vshrl.u32 %v2367, 7
        %v2369 = vsub.s32 %v2366, %v2368
        %v2370 = vrot.slane %v2362, %v2369
        %2371 = vset.pattern.permute.xlu0 4
        %2372 = vperm.xlu0 %2371, %v231
        %v2373 = vpop.permute.xlu0 %2372
        %v2376 = vunpack.c.l.s4 839922192
        %v2377 = vunpack.c.0.s8 %v2376
        %v2378 = vlaneseq
        %v2379 = vshrl.u32 %v2378, 7
        %v2380 = vsub.s32 %v2377, %v2379
        %v2381 = vrot.slane %v2373, %v2380
        %2382 = vset.pattern.permute.xlu0 4
        %2383 = vperm.xlu0 %2382, %v232
        %v2384 = vpop.permute.xlu0 %2383
        %v2387 = vunpack.c.l.s4 839922192
        %v2388 = vunpack.c.0.s8 %v2387
        %v2389 = vlaneseq
        %v2390 = vshrl.u32 %v2389, 7
        %v2391 = vsub.s32 %v2388, %v2390
        %v2392 = vrot.slane %v2384, %v2391
        %2393 = vset.pattern.permute.xlu0 4
        %2394 = vperm.xlu0 %2393, %v233
        %v2395 = vpop.permute.xlu0 %2394
        %v2398 = vunpack.c.l.s4 839922192
        %v2399 = vunpack.c.0.s8 %v2398
        %v2400 = vlaneseq
        %v2401 = vshrl.u32 %v2400, 7
        %v2402 = vsub.s32 %v2399, %v2401
        %v2403 = vrot.slane %v2395, %v2402
        %2404 = vset.pattern.permute.xlu0 4
        %2405 = vperm.xlu0 %2404, %v234
        %v2406 = vpop.permute.xlu0 %2405
        %v2409 = vunpack.c.l.s4 839922192
        %v2410 = vunpack.c.0.s8 %v2409
        %v2411 = vlaneseq
        %v2412 = vshrl.u32 %v2411, 7
        %v2413 = vsub.s32 %v2410, %v2412
        %v2414 = vrot.slane %v2406, %v2413
        %2415 = vset.pattern.permute.xlu0 4
        %2416 = vperm.xlu0 %2415, %v235
        %v2417 = vpop.permute.xlu0 %2416
        %v2420 = vunpack.c.l.s4 839922192
        %v2421 = vunpack.c.0.s8 %v2420
        %v2422 = vlaneseq
        %v2423 = vshrl.u32 %v2422, 7
        %v2424 = vsub.s32 %v2421, %v2423
        %v2425 = vrot.slane %v2417, %v2424
        %2426 = vset.pattern.permute.xlu0 4
        %2427 = vperm.xlu0 %2426, %v236
        %v2428 = vpop.permute.xlu0 %2427
        %v2431 = vunpack.c.l.s4 839922192
        %v2432 = vunpack.c.0.s8 %v2431
        %v2433 = vlaneseq
        %v2434 = vshrl.u32 %v2433, 7
        %v2435 = vsub.s32 %v2432, %v2434
        %v2436 = vrot.slane %v2428, %v2435
        %2437 = vset.pattern.permute.xlu0 4
        %2438 = vperm.xlu0 %2437, %v237
        %v2439 = vpop.permute.xlu0 %2438
        %v2442 = vunpack.c.l.s4 839922192
        %v2443 = vunpack.c.0.s8 %v2442
        %v2444 = vlaneseq
        %v2445 = vshrl.u32 %v2444, 7
        %v2446 = vsub.s32 %v2443, %v2445
        %v2447 = vrot.slane %v2439, %v2446
        %2448 = vset.pattern.permute.xlu0 4
        %2449 = vperm.xlu0 %2448, %v238
        %v2450 = vpop.permute.xlu0 %2449
        %v2453 = vunpack.c.l.s4 839922192
        %v2454 = vunpack.c.0.s8 %v2453
        %v2455 = vlaneseq
        %v2456 = vshrl.u32 %v2455, 7
        %v2457 = vsub.s32 %v2454, %v2456
        %v2458 = vrot.slane %v2450, %v2457
        %2459 = vset.pattern.permute.xlu0 4
        %2460 = vperm.xlu0 %2459, %v239
        %v2461 = vpop.permute.xlu0 %2460
        %v2464 = vunpack.c.l.s4 839922192
        %v2465 = vunpack.c.0.s8 %v2464
        %v2466 = vlaneseq
        %v2467 = vshrl.u32 %v2466, 7
        %v2468 = vsub.s32 %v2465, %v2467
        %v2469 = vrot.slane %v2461, %v2468
        %2470 = vset.pattern.permute.xlu0 4
        %2471 = vperm.xlu0 %2470, %v240
        %v2472 = vpop.permute.xlu0 %2471
        %v2475 = vunpack.c.l.s4 839922192
        %v2476 = vunpack.c.0.s8 %v2475
        %v2477 = vlaneseq
        %v2478 = vshrl.u32 %v2477, 7
        %v2479 = vsub.s32 %v2476, %v2478
        %v2480 = vrot.slane %v2472, %v2479
        %2481 = vset.pattern.permute.xlu0 4
        %2482 = vperm.xlu0 %2481, %v241
        %v2483 = vpop.permute.xlu0 %2482
        %v2486 = vunpack.c.l.s4 839922192
        %v2487 = vunpack.c.0.s8 %v2486
        %v2488 = vlaneseq
        %v2489 = vshrl.u32 %v2488, 7
        %v2490 = vsub.s32 %v2487, %v2489
        %v2491 = vrot.slane %v2483, %v2490
        %2492 = vset.pattern.permute.xlu0 4
        %2493 = vperm.xlu0 %2492, %v242
        %v2494 = vpop.permute.xlu0 %2493
        %v2497 = vunpack.c.l.s4 839922192
        %v2498 = vunpack.c.0.s8 %v2497
        %v2499 = vlaneseq
        %v2500 = vshrl.u32 %v2499, 7
        %v2501 = vsub.s32 %v2498, %v2500
        %v2502 = vrot.slane %v2494, %v2501
        %2503 = vset.pattern.permute.xlu0 4
        %2504 = vperm.xlu0 %2503, %v243
        %v2505 = vpop.permute.xlu0 %2504
        %v2508 = vunpack.c.l.s4 839922192
        %v2509 = vunpack.c.0.s8 %v2508
        %v2510 = vlaneseq
        %v2511 = vshrl.u32 %v2510, 7
        %v2512 = vsub.s32 %v2509, %v2511
        %v2513 = vrot.slane %v2505, %v2512
        %2514 = vset.pattern.permute.xlu0 4
        %2515 = vperm.xlu0 %2514, %v244
        %v2516 = vpop.permute.xlu0 %2515
        %v2519 = vunpack.c.l.s4 839922192
        %v2520 = vunpack.c.0.s8 %v2519
        %v2521 = vlaneseq
        %v2522 = vshrl.u32 %v2521, 7
        %v2523 = vsub.s32 %v2520, %v2522
        %v2524 = vrot.slane %v2516, %v2523
        %2525 = vset.pattern.permute.xlu0 4
        %2526 = vperm.xlu0 %2525, %v245
        %v2527 = vpop.permute.xlu0 %2526
        %v2530 = vunpack.c.l.s4 839922192
        %v2531 = vunpack.c.0.s8 %v2530
        %v2532 = vlaneseq
        %v2533 = vshrl.u32 %v2532, 7
        %v2534 = vsub.s32 %v2531, %v2533
        %v2535 = vrot.slane %v2527, %v2534
        %2536 = vset.pattern.permute.xlu0 4
        %2537 = vperm.xlu0 %2536, %v246
        %v2538 = vpop.permute.xlu0 %2537
        %v2541 = vunpack.c.l.s4 839922192
        %v2542 = vunpack.c.0.s8 %v2541
        %v2543 = vlaneseq
        %v2544 = vshrl.u32 %v2543, 7
        %v2545 = vsub.s32 %v2542, %v2544
        %v2546 = vrot.slane %v2538, %v2545
        %2547 = vset.pattern.permute.xlu0 4
        %2548 = vperm.xlu0 %2547, %v247
        %v2549 = vpop.permute.xlu0 %2548
        %v2552 = vunpack.c.l.s4 839922192
        %v2553 = vunpack.c.0.s8 %v2552
        %v2554 = vlaneseq
        %v2555 = vshrl.u32 %v2554, 7
        %v2556 = vsub.s32 %v2553, %v2555
        %v2557 = vrot.slane %v2549, %v2556
        %2558 = vset.pattern.permute.xlu0 4
        %2559 = vperm.xlu0 %2558, %v248
        %v2560 = vpop.permute.xlu0 %2559
        %v2563 = vunpack.c.l.s4 839922192
        %v2564 = vunpack.c.0.s8 %v2563
        %v2565 = vlaneseq
        %v2566 = vshrl.u32 %v2565, 7
        %v2567 = vsub.s32 %v2564, %v2566
        %v2568 = vrot.slane %v2560, %v2567
        %2569 = vset.pattern.permute.xlu0 4
        %2570 = vperm.xlu0 %2569, %v249
        %v2571 = vpop.permute.xlu0 %2570
        %v2574 = vunpack.c.l.s4 839922192
        %v2575 = vunpack.c.0.s8 %v2574
        %v2576 = vlaneseq
        %v2577 = vshrl.u32 %v2576, 7
        %v2578 = vsub.s32 %v2575, %v2577
        %v2579 = vrot.slane %v2571, %v2578
        %2580 = vset.pattern.permute.xlu0 4
        %2581 = vperm.xlu0 %2580, %v250
        %v2582 = vpop.permute.xlu0 %2581
        %v2585 = vunpack.c.l.s4 839922192
        %v2586 = vunpack.c.0.s8 %v2585
        %v2587 = vlaneseq
        %v2588 = vshrl.u32 %v2587, 7
        %v2589 = vsub.s32 %v2586, %v2588
        %v2590 = vrot.slane %v2582, %v2589
        %2591 = vset.pattern.permute.xlu0 4
        %2592 = vperm.xlu0 %2591, %v251
        %v2593 = vpop.permute.xlu0 %2592
        %v2596 = vunpack.c.l.s4 839922192
        %v2597 = vunpack.c.0.s8 %v2596
        %v2598 = vlaneseq
        %v2599 = vshrl.u32 %v2598, 7
        %v2600 = vsub.s32 %v2597, %v2599
        %v2601 = vrot.slane %v2593, %v2600
        %2602 = vset.pattern.permute.xlu0 4
        %2603 = vperm.xlu0 %2602, %v252
        %v2604 = vpop.permute.xlu0 %2603
        %v2607 = vunpack.c.l.s4 839922192
        %v2608 = vunpack.c.0.s8 %v2607
        %v2609 = vlaneseq
        %v2610 = vshrl.u32 %v2609, 7
        %v2611 = vsub.s32 %v2608, %v2610
        %v2612 = vrot.slane %v2604, %v2611
        %2613 = vset.pattern.permute.xlu0 4
        %2614 = vperm.xlu0 %2613, %v253
        %v2615 = vpop.permute.xlu0 %2614
        %v2618 = vunpack.c.l.s4 839922192
        %v2619 = vunpack.c.0.s8 %v2618
        %v2620 = vlaneseq
        %v2621 = vshrl.u32 %v2620, 7
        %v2622 = vsub.s32 %v2619, %v2621
        %v2623 = vrot.slane %v2615, %v2622
        %2624 = vset.pattern.permute.xlu0 4
        %2625 = vperm.xlu0 %2624, %v254
        %v2626 = vpop.permute.xlu0 %2625
        %v2629 = vunpack.c.l.s4 839922192
        %v2630 = vunpack.c.0.s8 %v2629
        %v2631 = vlaneseq
        %v2632 = vshrl.u32 %v2631, 7
        %v2633 = vsub.s32 %v2630, %v2632
        %v2634 = vrot.slane %v2626, %v2633
        %v2635 = vmul.bf16 %v223, %v2293
        %v2636 = vmul.bf16 %v224, %v2304
        %v2637 = vmul.bf16 %v225, %v2315
        %v2638 = vmul.bf16 %v226, %v2326
        %v2639 = vmul.bf16 %v227, %v2337
        %v2640 = vmul.bf16 %v228, %v2348
        %v2641 = vmul.bf16 %v229, %v2359
        %v2642 = vmul.bf16 %v230, %v2370
        %v2643 = vmul.bf16 %v231, %v2381
        %v2644 = vmul.bf16 %v232, %v2392
        %v2645 = vmul.bf16 %v233, %v2403
        %v2646 = vmul.bf16 %v234, %v2414
        %v2647 = vmul.bf16 %v235, %v2425
        %v2648 = vmul.bf16 %v236, %v2436
        %v2649 = vmul.bf16 %v237, %v2447
        %v2650 = vmul.bf16 %v238, %v2458
        %v2651 = vmul.bf16 %v239, %v2469
        %v2652 = vmul.bf16 %v240, %v2480
        %v2653 = vmul.bf16 %v241, %v2491
        %v2654 = vmul.bf16 %v242, %v2502
        %v2655 = vmul.bf16 %v243, %v2513
        %v2656 = vmul.bf16 %v244, %v2524
        %v2657 = vmul.bf16 %v245, %v2535
        %v2658 = vmul.bf16 %v246, %v2546
        %v2659 = vmul.bf16 %v247, %v2557
        %v2660 = vmul.bf16 %v248, %v2568
        %v2661 = vmul.bf16 %v249, %v2579
        %v2662 = vmul.bf16 %v250, %v2590
        %v2663 = vmul.bf16 %v251, %v2601
        %v2664 = vmul.bf16 %v252, %v2612
        %v2665 = vmul.bf16 %v253, %v2623
        %v2666 = vmul.bf16 %v254, %v2634
        %2667 = vset.pattern.permute.xlu0 5
        %2668 = vperm.xlu0 %2667, %v223
        %v2669 = vpop.permute.xlu0 %2668
        %v2672 = vunpack.c.l.s4 839922192
        %v2673 = vunpack.c.0.s8 %v2672
        %v2674 = vlaneseq
        %v2675 = vshrl.u32 %v2674, 7
        %v2676 = vsub.s32 %v2673, %v2675
        %v2677 = vrot.slane %v2669, %v2676
        %2678 = vset.pattern.permute.xlu0 5
        %2679 = vperm.xlu0 %2678, %v224
        %v2680 = vpop.permute.xlu0 %2679
        %v2683 = vunpack.c.l.s4 839922192
        %v2684 = vunpack.c.0.s8 %v2683
        %v2685 = vlaneseq
        %v2686 = vshrl.u32 %v2685, 7
        %v2687 = vsub.s32 %v2684, %v2686
        %v2688 = vrot.slane %v2680, %v2687
        %2689 = vset.pattern.permute.xlu0 5
        %2690 = vperm.xlu0 %2689, %v225
        %v2691 = vpop.permute.xlu0 %2690
        %v2694 = vunpack.c.l.s4 839922192
        %v2695 = vunpack.c.0.s8 %v2694
        %v2696 = vlaneseq
        %v2697 = vshrl.u32 %v2696, 7
        %v2698 = vsub.s32 %v2695, %v2697
        %v2699 = vrot.slane %v2691, %v2698
        %2700 = vset.pattern.permute.xlu0 5
        %2701 = vperm.xlu0 %2700, %v226
        %v2702 = vpop.permute.xlu0 %2701
        %v2705 = vunpack.c.l.s4 839922192
        %v2706 = vunpack.c.0.s8 %v2705
        %v2707 = vlaneseq
        %v2708 = vshrl.u32 %v2707, 7
        %v2709 = vsub.s32 %v2706, %v2708
        %v2710 = vrot.slane %v2702, %v2709
        %2711 = vset.pattern.permute.xlu0 5
        %2712 = vperm.xlu0 %2711, %v227
        %v2713 = vpop.permute.xlu0 %2712
        %v2716 = vunpack.c.l.s4 839922192
        %v2717 = vunpack.c.0.s8 %v2716
        %v2718 = vlaneseq
        %v2719 = vshrl.u32 %v2718, 7
        %v2720 = vsub.s32 %v2717, %v2719
        %v2721 = vrot.slane %v2713, %v2720
        %2722 = vset.pattern.permute.xlu0 5
        %2723 = vperm.xlu0 %2722, %v228
        %v2724 = vpop.permute.xlu0 %2723
        %v2727 = vunpack.c.l.s4 839922192
        %v2728 = vunpack.c.0.s8 %v2727
        %v2729 = vlaneseq
        %v2730 = vshrl.u32 %v2729, 7
        %v2731 = vsub.s32 %v2728, %v2730
        %v2732 = vrot.slane %v2724, %v2731
        %2733 = vset.pattern.permute.xlu0 5
        %2734 = vperm.xlu0 %2733, %v229
        %v2735 = vpop.permute.xlu0 %2734
        %v2738 = vunpack.c.l.s4 839922192
        %v2739 = vunpack.c.0.s8 %v2738
        %v2740 = vlaneseq
        %v2741 = vshrl.u32 %v2740, 7
        %v2742 = vsub.s32 %v2739, %v2741
        %v2743 = vrot.slane %v2735, %v2742
        %2744 = vset.pattern.permute.xlu0 5
        %2745 = vperm.xlu0 %2744, %v230
        %v2746 = vpop.permute.xlu0 %2745
        %v2749 = vunpack.c.l.s4 839922192
        %v2750 = vunpack.c.0.s8 %v2749
        %v2751 = vlaneseq
        %v2752 = vshrl.u32 %v2751, 7
        %v2753 = vsub.s32 %v2750, %v2752
        %v2754 = vrot.slane %v2746, %v2753
        %2755 = vset.pattern.permute.xlu0 5
        %2756 = vperm.xlu0 %2755, %v231
        %v2757 = vpop.permute.xlu0 %2756
        %v2760 = vunpack.c.l.s4 839922192
        %v2761 = vunpack.c.0.s8 %v2760
        %v2762 = vlaneseq
        %v2763 = vshrl.u32 %v2762, 7
        %v2764 = vsub.s32 %v2761, %v2763
        %v2765 = vrot.slane %v2757, %v2764
        %2766 = vset.pattern.permute.xlu0 5
        %2767 = vperm.xlu0 %2766, %v232
        %v2768 = vpop.permute.xlu0 %2767
        %v2771 = vunpack.c.l.s4 839922192
        %v2772 = vunpack.c.0.s8 %v2771
        %v2773 = vlaneseq
        %v2774 = vshrl.u32 %v2773, 7
        %v2775 = vsub.s32 %v2772, %v2774
        %v2776 = vrot.slane %v2768, %v2775
        %2777 = vset.pattern.permute.xlu0 5
        %2778 = vperm.xlu0 %2777, %v233
        %v2779 = vpop.permute.xlu0 %2778
        %v2782 = vunpack.c.l.s4 839922192
        %v2783 = vunpack.c.0.s8 %v2782
        %v2784 = vlaneseq
        %v2785 = vshrl.u32 %v2784, 7
        %v2786 = vsub.s32 %v2783, %v2785
        %v2787 = vrot.slane %v2779, %v2786
        %2788 = vset.pattern.permute.xlu0 5
        %2789 = vperm.xlu0 %2788, %v234
        %v2790 = vpop.permute.xlu0 %2789
        %v2793 = vunpack.c.l.s4 839922192
        %v2794 = vunpack.c.0.s8 %v2793
        %v2795 = vlaneseq
        %v2796 = vshrl.u32 %v2795, 7
        %v2797 = vsub.s32 %v2794, %v2796
        %v2798 = vrot.slane %v2790, %v2797
        %2799 = vset.pattern.permute.xlu0 5
        %2800 = vperm.xlu0 %2799, %v235
        %v2801 = vpop.permute.xlu0 %2800
        %v2804 = vunpack.c.l.s4 839922192
        %v2805 = vunpack.c.0.s8 %v2804
        %v2806 = vlaneseq
        %v2807 = vshrl.u32 %v2806, 7
        %v2808 = vsub.s32 %v2805, %v2807
        %v2809 = vrot.slane %v2801, %v2808
        %2810 = vset.pattern.permute.xlu0 5
        %2811 = vperm.xlu0 %2810, %v236
        %v2812 = vpop.permute.xlu0 %2811
        %v2815 = vunpack.c.l.s4 839922192
        %v2816 = vunpack.c.0.s8 %v2815
        %v2817 = vlaneseq
        %v2818 = vshrl.u32 %v2817, 7
        %v2819 = vsub.s32 %v2816, %v2818
        %v2820 = vrot.slane %v2812, %v2819
        %2821 = vset.pattern.permute.xlu0 5
        %2822 = vperm.xlu0 %2821, %v237
        %v2823 = vpop.permute.xlu0 %2822
        %v2826 = vunpack.c.l.s4 839922192
        %v2827 = vunpack.c.0.s8 %v2826
        %v2828 = vlaneseq
        %v2829 = vshrl.u32 %v2828, 7
        %v2830 = vsub.s32 %v2827, %v2829
        %v2831 = vrot.slane %v2823, %v2830
        %2832 = vset.pattern.permute.xlu0 5
        %2833 = vperm.xlu0 %2832, %v238
        %v2834 = vpop.permute.xlu0 %2833
        %v2837 = vunpack.c.l.s4 839922192
        %v2838 = vunpack.c.0.s8 %v2837
        %v2839 = vlaneseq
        %v2840 = vshrl.u32 %v2839, 7
        %v2841 = vsub.s32 %v2838, %v2840
        %v2842 = vrot.slane %v2834, %v2841
        %2843 = vset.pattern.permute.xlu0 5
        %2844 = vperm.xlu0 %2843, %v239
        %v2845 = vpop.permute.xlu0 %2844
        %v2848 = vunpack.c.l.s4 839922192
        %v2849 = vunpack.c.0.s8 %v2848
        %v2850 = vlaneseq
        %v2851 = vshrl.u32 %v2850, 7
        %v2852 = vsub.s32 %v2849, %v2851
        %v2853 = vrot.slane %v2845, %v2852
        %2854 = vset.pattern.permute.xlu0 5
        %2855 = vperm.xlu0 %2854, %v240
        %v2856 = vpop.permute.xlu0 %2855
        %v2859 = vunpack.c.l.s4 839922192
        %v2860 = vunpack.c.0.s8 %v2859
        %v2861 = vlaneseq
        %v2862 = vshrl.u32 %v2861, 7
        %v2863 = vsub.s32 %v2860, %v2862
        %v2864 = vrot.slane %v2856, %v2863
        %2865 = vset.pattern.permute.xlu0 5
        %2866 = vperm.xlu0 %2865, %v241
        %v2867 = vpop.permute.xlu0 %2866
        %v2870 = vunpack.c.l.s4 839922192
        %v2871 = vunpack.c.0.s8 %v2870
        %v2872 = vlaneseq
        %v2873 = vshrl.u32 %v2872, 7
        %v2874 = vsub.s32 %v2871, %v2873
        %v2875 = vrot.slane %v2867, %v2874
        %2876 = vset.pattern.permute.xlu0 5
        %2877 = vperm.xlu0 %2876, %v242
        %v2878 = vpop.permute.xlu0 %2877
        %v2881 = vunpack.c.l.s4 839922192
        %v2882 = vunpack.c.0.s8 %v2881
        %v2883 = vlaneseq
        %v2884 = vshrl.u32 %v2883, 7
        %v2885 = vsub.s32 %v2882, %v2884
        %v2886 = vrot.slane %v2878, %v2885
        %2887 = vset.pattern.permute.xlu0 5
        %2888 = vperm.xlu0 %2887, %v243
        %v2889 = vpop.permute.xlu0 %2888
        %v2892 = vunpack.c.l.s4 839922192
        %v2893 = vunpack.c.0.s8 %v2892
        %v2894 = vlaneseq
        %v2895 = vshrl.u32 %v2894, 7
        %v2896 = vsub.s32 %v2893, %v2895
        %v2897 = vrot.slane %v2889, %v2896
        %2898 = vset.pattern.permute.xlu0 5
        %2899 = vperm.xlu0 %2898, %v244
        %v2900 = vpop.permute.xlu0 %2899
        %v2903 = vunpack.c.l.s4 839922192
        %v2904 = vunpack.c.0.s8 %v2903
        %v2905 = vlaneseq
        %v2906 = vshrl.u32 %v2905, 7
        %v2907 = vsub.s32 %v2904, %v2906
        %v2908 = vrot.slane %v2900, %v2907
        %2909 = vset.pattern.permute.xlu0 5
        %2910 = vperm.xlu0 %2909, %v245
        %v2911 = vpop.permute.xlu0 %2910
        %v2914 = vunpack.c.l.s4 839922192
        %v2915 = vunpack.c.0.s8 %v2914
        %v2916 = vlaneseq
        %v2917 = vshrl.u32 %v2916, 7
        %v2918 = vsub.s32 %v2915, %v2917
        %v2919 = vrot.slane %v2911, %v2918
        %2920 = vset.pattern.permute.xlu0 5
        %2921 = vperm.xlu0 %2920, %v246
        %v2922 = vpop.permute.xlu0 %2921
        %v2925 = vunpack.c.l.s4 839922192
        %v2926 = vunpack.c.0.s8 %v2925
        %v2927 = vlaneseq
        %v2928 = vshrl.u32 %v2927, 7
        %v2929 = vsub.s32 %v2926, %v2928
        %v2930 = vrot.slane %v2922, %v2929
        %2931 = vset.pattern.permute.xlu0 5
        %2932 = vperm.xlu0 %2931, %v247
        %v2933 = vpop.permute.xlu0 %2932
        %v2936 = vunpack.c.l.s4 839922192
        %v2937 = vunpack.c.0.s8 %v2936
        %v2938 = vlaneseq
        %v2939 = vshrl.u32 %v2938, 7
        %v2940 = vsub.s32 %v2937, %v2939
        %v2941 = vrot.slane %v2933, %v2940
        %2942 = vset.pattern.permute.xlu0 5
        %2943 = vperm.xlu0 %2942, %v248
        %v2944 = vpop.permute.xlu0 %2943
        %v2947 = vunpack.c.l.s4 839922192
        %v2948 = vunpack.c.0.s8 %v2947
        %v2949 = vlaneseq
        %v2950 = vshrl.u32 %v2949, 7
        %v2951 = vsub.s32 %v2948, %v2950
        %v2952 = vrot.slane %v2944, %v2951
        %2953 = vset.pattern.permute.xlu0 5
        %2954 = vperm.xlu0 %2953, %v249
        %v2955 = vpop.permute.xlu0 %2954
        %v2958 = vunpack.c.l.s4 839922192
        %v2959 = vunpack.c.0.s8 %v2958
        %v2960 = vlaneseq
        %v2961 = vshrl.u32 %v2960, 7
        %v2962 = vsub.s32 %v2959, %v2961
        %v2963 = vrot.slane %v2955, %v2962
        %2964 = vset.pattern.permute.xlu0 5
        %2965 = vperm.xlu0 %2964, %v250
        %v2966 = vpop.permute.xlu0 %2965
        %v2969 = vunpack.c.l.s4 839922192
        %v2970 = vunpack.c.0.s8 %v2969
        %v2971 = vlaneseq
        %v2972 = vshrl.u32 %v2971, 7
        %v2973 = vsub.s32 %v2970, %v2972
        %v2974 = vrot.slane %v2966, %v2973
        %2975 = vset.pattern.permute.xlu0 5
        %2976 = vperm.xlu0 %2975, %v251
        %v2977 = vpop.permute.xlu0 %2976
        %v2980 = vunpack.c.l.s4 839922192
        %v2981 = vunpack.c.0.s8 %v2980
        %v2982 = vlaneseq
        %v2983 = vshrl.u32 %v2982, 7
        %v2984 = vsub.s32 %v2981, %v2983
        %v2985 = vrot.slane %v2977, %v2984
        %2986 = vset.pattern.permute.xlu0 5
        %2987 = vperm.xlu0 %2986, %v252
        %v2988 = vpop.permute.xlu0 %2987
        %v2991 = vunpack.c.l.s4 839922192
        %v2992 = vunpack.c.0.s8 %v2991
        %v2993 = vlaneseq
        %v2994 = vshrl.u32 %v2993, 7
        %v2995 = vsub.s32 %v2992, %v2994
        %v2996 = vrot.slane %v2988, %v2995
        %2997 = vset.pattern.permute.xlu0 5
        %2998 = vperm.xlu0 %2997, %v253
        %v2999 = vpop.permute.xlu0 %2998
        %v3002 = vunpack.c.l.s4 839922192
        %v3003 = vunpack.c.0.s8 %v3002
        %v3004 = vlaneseq
        %v3005 = vshrl.u32 %v3004, 7
        %v3006 = vsub.s32 %v3003, %v3005
        %v3007 = vrot.slane %v2999, %v3006
        %3008 = vset.pattern.permute.xlu0 5
        %3009 = vperm.xlu0 %3008, %v254
        %v3010 = vpop.permute.xlu0 %3009
        %v3013 = vunpack.c.l.s4 839922192
        %v3014 = vunpack.c.0.s8 %v3013
        %v3015 = vlaneseq
        %v3016 = vshrl.u32 %v3015, 7
        %v3017 = vsub.s32 %v3014, %v3016
        %v3018 = vrot.slane %v3010, %v3017
        %v3019 = vmul.bf16 %v223, %v2677
        %v3020 = vmul.bf16 %v224, %v2688
        %v3021 = vmul.bf16 %v225, %v2699
        %v3022 = vmul.bf16 %v226, %v2710
        %v3023 = vmul.bf16 %v227, %v2721
        %v3024 = vmul.bf16 %v228, %v2732
        %v3025 = vmul.bf16 %v229, %v2743
        %v3026 = vmul.bf16 %v230, %v2754
        %v3027 = vmul.bf16 %v231, %v2765
        %v3028 = vmul.bf16 %v232, %v2776
        %v3029 = vmul.bf16 %v233, %v2787
        %v3030 = vmul.bf16 %v234, %v2798
        %v3031 = vmul.bf16 %v235, %v2809
        %v3032 = vmul.bf16 %v236, %v2820
        %v3033 = vmul.bf16 %v237, %v2831
        %v3034 = vmul.bf16 %v238, %v2842
        %v3035 = vmul.bf16 %v239, %v2853
        %v3036 = vmul.bf16 %v240, %v2864
        %v3037 = vmul.bf16 %v241, %v2875
        %v3038 = vmul.bf16 %v242, %v2886
        %v3039 = vmul.bf16 %v243, %v2897
        %v3040 = vmul.bf16 %v244, %v2908
        %v3041 = vmul.bf16 %v245, %v2919
        %v3042 = vmul.bf16 %v246, %v2930
        %v3043 = vmul.bf16 %v247, %v2941
        %v3044 = vmul.bf16 %v248, %v2952
        %v3045 = vmul.bf16 %v249, %v2963
        %v3046 = vmul.bf16 %v250, %v2974
        %v3047 = vmul.bf16 %v251, %v2985
        %v3048 = vmul.bf16 %v252, %v2996
        %v3049 = vmul.bf16 %v253, %v3007
        %v3050 = vmul.bf16 %v254, %v3018
        %3051 = vset.pattern.permute.xlu0 6
        %3052 = vperm.xlu0 %3051, %v223
        %v3053 = vpop.permute.xlu0 %3052
        %v3056 = vunpack.c.l.s4 839922192
        %v3057 = vunpack.c.0.s8 %v3056
        %v3058 = vlaneseq
        %v3059 = vshrl.u32 %v3058, 7
        %v3060 = vsub.s32 %v3057, %v3059
        %v3061 = vrot.slane %v3053, %v3060
        %3062 = vset.pattern.permute.xlu0 6
        %3063 = vperm.xlu0 %3062, %v224
        %v3064 = vpop.permute.xlu0 %3063
        %v3067 = vunpack.c.l.s4 839922192
        %v3068 = vunpack.c.0.s8 %v3067
        %v3069 = vlaneseq
        %v3070 = vshrl.u32 %v3069, 7
        %v3071 = vsub.s32 %v3068, %v3070
        %v3072 = vrot.slane %v3064, %v3071
        %3073 = vset.pattern.permute.xlu0 6
        %3074 = vperm.xlu0 %3073, %v225
        %v3075 = vpop.permute.xlu0 %3074
        %v3078 = vunpack.c.l.s4 839922192
        %v3079 = vunpack.c.0.s8 %v3078
        %v3080 = vlaneseq
        %v3081 = vshrl.u32 %v3080, 7
        %v3082 = vsub.s32 %v3079, %v3081
        %v3083 = vrot.slane %v3075, %v3082
        %3084 = vset.pattern.permute.xlu0 6
        %3085 = vperm.xlu0 %3084, %v226
        %v3086 = vpop.permute.xlu0 %3085
        %v3089 = vunpack.c.l.s4 839922192
        %v3090 = vunpack.c.0.s8 %v3089
        %v3091 = vlaneseq
        %v3092 = vshrl.u32 %v3091, 7
        %v3093 = vsub.s32 %v3090, %v3092
        %v3094 = vrot.slane %v3086, %v3093
        %3095 = vset.pattern.permute.xlu0 6
        %3096 = vperm.xlu0 %3095, %v227
        %v3097 = vpop.permute.xlu0 %3096
        %v3100 = vunpack.c.l.s4 839922192
        %v3101 = vunpack.c.0.s8 %v3100
        %v3102 = vlaneseq
        %v3103 = vshrl.u32 %v3102, 7
        %v3104 = vsub.s32 %v3101, %v3103
        %v3105 = vrot.slane %v3097, %v3104
        %3106 = vset.pattern.permute.xlu0 6
        %3107 = vperm.xlu0 %3106, %v228
        %v3108 = vpop.permute.xlu0 %3107
        %v3111 = vunpack.c.l.s4 839922192
        %v3112 = vunpack.c.0.s8 %v3111
        %v3113 = vlaneseq
        %v3114 = vshrl.u32 %v3113, 7
        %v3115 = vsub.s32 %v3112, %v3114
        %v3116 = vrot.slane %v3108, %v3115
        %3117 = vset.pattern.permute.xlu0 6
        %3118 = vperm.xlu0 %3117, %v229
        %v3119 = vpop.permute.xlu0 %3118
        %v3122 = vunpack.c.l.s4 839922192
        %v3123 = vunpack.c.0.s8 %v3122
        %v3124 = vlaneseq
        %v3125 = vshrl.u32 %v3124, 7
        %v3126 = vsub.s32 %v3123, %v3125
        %v3127 = vrot.slane %v3119, %v3126
        %3128 = vset.pattern.permute.xlu0 6
        %3129 = vperm.xlu0 %3128, %v230
        %v3130 = vpop.permute.xlu0 %3129
        %v3133 = vunpack.c.l.s4 839922192
        %v3134 = vunpack.c.0.s8 %v3133
        %v3135 = vlaneseq
        %v3136 = vshrl.u32 %v3135, 7
        %v3137 = vsub.s32 %v3134, %v3136
        %v3138 = vrot.slane %v3130, %v3137
        %3139 = vset.pattern.permute.xlu0 6
        %3140 = vperm.xlu0 %3139, %v231
        %v3141 = vpop.permute.xlu0 %3140
        %v3144 = vunpack.c.l.s4 839922192
        %v3145 = vunpack.c.0.s8 %v3144
        %v3146 = vlaneseq
        %v3147 = vshrl.u32 %v3146, 7
        %v3148 = vsub.s32 %v3145, %v3147
        %v3149 = vrot.slane %v3141, %v3148
        %3150 = vset.pattern.permute.xlu0 6
        %3151 = vperm.xlu0 %3150, %v232
        %v3152 = vpop.permute.xlu0 %3151
        %v3155 = vunpack.c.l.s4 839922192
        %v3156 = vunpack.c.0.s8 %v3155
        %v3157 = vlaneseq
        %v3158 = vshrl.u32 %v3157, 7
        %v3159 = vsub.s32 %v3156, %v3158
        %v3160 = vrot.slane %v3152, %v3159
        %3161 = vset.pattern.permute.xlu0 6
        %3162 = vperm.xlu0 %3161, %v233
        %v3163 = vpop.permute.xlu0 %3162
        %v3166 = vunpack.c.l.s4 839922192
        %v3167 = vunpack.c.0.s8 %v3166
        %v3168 = vlaneseq
        %v3169 = vshrl.u32 %v3168, 7
        %v3170 = vsub.s32 %v3167, %v3169
        %v3171 = vrot.slane %v3163, %v3170
        %3172 = vset.pattern.permute.xlu0 6
        %3173 = vperm.xlu0 %3172, %v234
        %v3174 = vpop.permute.xlu0 %3173
        %v3177 = vunpack.c.l.s4 839922192
        %v3178 = vunpack.c.0.s8 %v3177
        %v3179 = vlaneseq
        %v3180 = vshrl.u32 %v3179, 7
        %v3181 = vsub.s32 %v3178, %v3180
        %v3182 = vrot.slane %v3174, %v3181
        %3183 = vset.pattern.permute.xlu0 6
        %3184 = vperm.xlu0 %3183, %v235
        %v3185 = vpop.permute.xlu0 %3184
        %v3188 = vunpack.c.l.s4 839922192
        %v3189 = vunpack.c.0.s8 %v3188
        %v3190 = vlaneseq
        %v3191 = vshrl.u32 %v3190, 7
        %v3192 = vsub.s32 %v3189, %v3191
        %v3193 = vrot.slane %v3185, %v3192
        %3194 = vset.pattern.permute.xlu0 6
        %3195 = vperm.xlu0 %3194, %v236
        %v3196 = vpop.permute.xlu0 %3195
        %v3199 = vunpack.c.l.s4 839922192
        %v3200 = vunpack.c.0.s8 %v3199
        %v3201 = vlaneseq
        %v3202 = vshrl.u32 %v3201, 7
        %v3203 = vsub.s32 %v3200, %v3202
        %v3204 = vrot.slane %v3196, %v3203
        %3205 = vset.pattern.permute.xlu0 6
        %3206 = vperm.xlu0 %3205, %v237
        %v3207 = vpop.permute.xlu0 %3206
        %v3210 = vunpack.c.l.s4 839922192
        %v3211 = vunpack.c.0.s8 %v3210
        %v3212 = vlaneseq
        %v3213 = vshrl.u32 %v3212, 7
        %v3214 = vsub.s32 %v3211, %v3213
        %v3215 = vrot.slane %v3207, %v3214
        %3216 = vset.pattern.permute.xlu0 6
        %3217 = vperm.xlu0 %3216, %v238
        %v3218 = vpop.permute.xlu0 %3217
        %v3221 = vunpack.c.l.s4 839922192
        %v3222 = vunpack.c.0.s8 %v3221
        %v3223 = vlaneseq
        %v3224 = vshrl.u32 %v3223, 7
        %v3225 = vsub.s32 %v3222, %v3224
        %v3226 = vrot.slane %v3218, %v3225
        %3227 = vset.pattern.permute.xlu0 6
        %3228 = vperm.xlu0 %3227, %v239
        %v3229 = vpop.permute.xlu0 %3228
        %v3232 = vunpack.c.l.s4 839922192
        %v3233 = vunpack.c.0.s8 %v3232
        %v3234 = vlaneseq
        %v3235 = vshrl.u32 %v3234, 7
        %v3236 = vsub.s32 %v3233, %v3235
        %v3237 = vrot.slane %v3229, %v3236
        %3238 = vset.pattern.permute.xlu0 6
        %3239 = vperm.xlu0 %3238, %v240
        %v3240 = vpop.permute.xlu0 %3239
        %v3243 = vunpack.c.l.s4 839922192
        %v3244 = vunpack.c.0.s8 %v3243
        %v3245 = vlaneseq
        %v3246 = vshrl.u32 %v3245, 7
        %v3247 = vsub.s32 %v3244, %v3246
        %v3248 = vrot.slane %v3240, %v3247
        %3249 = vset.pattern.permute.xlu0 6
        %3250 = vperm.xlu0 %3249, %v241
        %v3251 = vpop.permute.xlu0 %3250
        %v3254 = vunpack.c.l.s4 839922192
        %v3255 = vunpack.c.0.s8 %v3254
        %v3256 = vlaneseq
        %v3257 = vshrl.u32 %v3256, 7
        %v3258 = vsub.s32 %v3255, %v3257
        %v3259 = vrot.slane %v3251, %v3258
        %3260 = vset.pattern.permute.xlu0 6
        %3261 = vperm.xlu0 %3260, %v242
        %v3262 = vpop.permute.xlu0 %3261
        %v3265 = vunpack.c.l.s4 839922192
        %v3266 = vunpack.c.0.s8 %v3265
        %v3267 = vlaneseq
        %v3268 = vshrl.u32 %v3267, 7
        %v3269 = vsub.s32 %v3266, %v3268
        %v3270 = vrot.slane %v3262, %v3269
        %3271 = vset.pattern.permute.xlu0 6
        %3272 = vperm.xlu0 %3271, %v243
        %v3273 = vpop.permute.xlu0 %3272
        %v3276 = vunpack.c.l.s4 839922192
        %v3277 = vunpack.c.0.s8 %v3276
        %v3278 = vlaneseq
        %v3279 = vshrl.u32 %v3278, 7
        %v3280 = vsub.s32 %v3277, %v3279
        %v3281 = vrot.slane %v3273, %v3280
        %3282 = vset.pattern.permute.xlu0 6
        %3283 = vperm.xlu0 %3282, %v244
        %v3284 = vpop.permute.xlu0 %3283
        %v3287 = vunpack.c.l.s4 839922192
        %v3288 = vunpack.c.0.s8 %v3287
        %v3289 = vlaneseq
        %v3290 = vshrl.u32 %v3289, 7
        %v3291 = vsub.s32 %v3288, %v3290
        %v3292 = vrot.slane %v3284, %v3291
        %3293 = vset.pattern.permute.xlu0 6
        %3294 = vperm.xlu0 %3293, %v245
        %v3295 = vpop.permute.xlu0 %3294
        %v3298 = vunpack.c.l.s4 839922192
        %v3299 = vunpack.c.0.s8 %v3298
        %v3300 = vlaneseq
        %v3301 = vshrl.u32 %v3300, 7
        %v3302 = vsub.s32 %v3299, %v3301
        %v3303 = vrot.slane %v3295, %v3302
        %3304 = vset.pattern.permute.xlu0 6
        %3305 = vperm.xlu0 %3304, %v246
        %v3306 = vpop.permute.xlu0 %3305
        %v3309 = vunpack.c.l.s4 839922192
        %v3310 = vunpack.c.0.s8 %v3309
        %v3311 = vlaneseq
        %v3312 = vshrl.u32 %v3311, 7
        %v3313 = vsub.s32 %v3310, %v3312
        %v3314 = vrot.slane %v3306, %v3313
        %3315 = vset.pattern.permute.xlu0 6
        %3316 = vperm.xlu0 %3315, %v247
        %v3317 = vpop.permute.xlu0 %3316
        %v3320 = vunpack.c.l.s4 839922192
        %v3321 = vunpack.c.0.s8 %v3320
        %v3322 = vlaneseq
        %v3323 = vshrl.u32 %v3322, 7
        %v3324 = vsub.s32 %v3321, %v3323
        %v3325 = vrot.slane %v3317, %v3324
        %3326 = vset.pattern.permute.xlu0 6
        %3327 = vperm.xlu0 %3326, %v248
        %v3328 = vpop.permute.xlu0 %3327
        %v3331 = vunpack.c.l.s4 839922192
        %v3332 = vunpack.c.0.s8 %v3331
        %v3333 = vlaneseq
        %v3334 = vshrl.u32 %v3333, 7
        %v3335 = vsub.s32 %v3332, %v3334
        %v3336 = vrot.slane %v3328, %v3335
        %3337 = vset.pattern.permute.xlu0 6
        %3338 = vperm.xlu0 %3337, %v249
        %v3339 = vpop.permute.xlu0 %3338
        %v3342 = vunpack.c.l.s4 839922192
        %v3343 = vunpack.c.0.s8 %v3342
        %v3344 = vlaneseq
        %v3345 = vshrl.u32 %v3344, 7
        %v3346 = vsub.s32 %v3343, %v3345
        %v3347 = vrot.slane %v3339, %v3346
        %3348 = vset.pattern.permute.xlu0 6
        %3349 = vperm.xlu0 %3348, %v250
        %v3350 = vpop.permute.xlu0 %3349
        %v3353 = vunpack.c.l.s4 839922192
        %v3354 = vunpack.c.0.s8 %v3353
        %v3355 = vlaneseq
        %v3356 = vshrl.u32 %v3355, 7
        %v3357 = vsub.s32 %v3354, %v3356
        %v3358 = vrot.slane %v3350, %v3357
        %3359 = vset.pattern.permute.xlu0 6
        %3360 = vperm.xlu0 %3359, %v251
        %v3361 = vpop.permute.xlu0 %3360
        %v3364 = vunpack.c.l.s4 839922192
        %v3365 = vunpack.c.0.s8 %v3364
        %v3366 = vlaneseq
        %v3367 = vshrl.u32 %v3366, 7
        %v3368 = vsub.s32 %v3365, %v3367
        %v3369 = vrot.slane %v3361, %v3368
        %3370 = vset.pattern.permute.xlu0 6
        %3371 = vperm.xlu0 %3370, %v252
        %v3372 = vpop.permute.xlu0 %3371
        %v3375 = vunpack.c.l.s4 839922192
        %v3376 = vunpack.c.0.s8 %v3375
        %v3377 = vlaneseq
        %v3378 = vshrl.u32 %v3377, 7
        %v3379 = vsub.s32 %v3376, %v3378
        %v3380 = vrot.slane %v3372, %v3379
        %3381 = vset.pattern.permute.xlu0 6
        %3382 = vperm.xlu0 %3381, %v253
        %v3383 = vpop.permute.xlu0 %3382
        %v3386 = vunpack.c.l.s4 839922192
        %v3387 = vunpack.c.0.s8 %v3386
        %v3388 = vlaneseq
        %v3389 = vshrl.u32 %v3388, 7
        %v3390 = vsub.s32 %v3387, %v3389
        %v3391 = vrot.slane %v3383, %v3390
        %3392 = vset.pattern.permute.xlu0 6
        %3393 = vperm.xlu0 %3392, %v254
        %v3394 = vpop.permute.xlu0 %3393
        %v3397 = vunpack.c.l.s4 839922192
        %v3398 = vunpack.c.0.s8 %v3397
        %v3399 = vlaneseq
        %v3400 = vshrl.u32 %v3399, 7
        %v3401 = vsub.s32 %v3398, %v3400
        %v3402 = vrot.slane %v3394, %v3401
        %v3403 = vmul.bf16 %v223, %v3061
        %v3404 = vmul.bf16 %v224, %v3072
        %v3405 = vmul.bf16 %v225, %v3083
        %v3406 = vmul.bf16 %v226, %v3094
        %v3407 = vmul.bf16 %v227, %v3105
        %v3408 = vmul.bf16 %v228, %v3116
        %v3409 = vmul.bf16 %v229, %v3127
        %v3410 = vmul.bf16 %v230, %v3138
        %v3411 = vmul.bf16 %v231, %v3149
        %v3412 = vmul.bf16 %v232, %v3160
        %v3413 = vmul.bf16 %v233, %v3171
        %v3414 = vmul.bf16 %v234, %v3182
        %v3415 = vmul.bf16 %v235, %v3193
        %v3416 = vmul.bf16 %v236, %v3204
        %v3417 = vmul.bf16 %v237, %v3215
        %v3418 = vmul.bf16 %v238, %v3226
        %v3419 = vmul.bf16 %v239, %v3237
        %v3420 = vmul.bf16 %v240, %v3248
        %v3421 = vmul.bf16 %v241, %v3259
        %v3422 = vmul.bf16 %v242, %v3270
        %v3423 = vmul.bf16 %v243, %v3281
        %v3424 = vmul.bf16 %v244, %v3292
        %v3425 = vmul.bf16 %v245, %v3303
        %v3426 = vmul.bf16 %v246, %v3314
        %v3427 = vmul.bf16 %v247, %v3325
        %v3428 = vmul.bf16 %v248, %v3336
        %v3429 = vmul.bf16 %v249, %v3347
        %v3430 = vmul.bf16 %v250, %v3358
        %v3431 = vmul.bf16 %v251, %v3369
        %v3432 = vmul.bf16 %v252, %v3380
        %v3433 = vmul.bf16 %v253, %v3391
        %v3434 = vmul.bf16 %v254, %v3402
        %3435 = vset.pattern.permute.xlu0 7
        %3436 = vperm.xlu0 %3435, %v223
        %v3437 = vpop.permute.xlu0 %3436
        %v3440 = vunpack.c.l.s4 839922192
        %v3441 = vunpack.c.0.s8 %v3440
        %v3442 = vlaneseq
        %v3443 = vshrl.u32 %v3442, 7
        %v3444 = vsub.s32 %v3441, %v3443
        %v3445 = vrot.slane %v3437, %v3444
        %3446 = vset.pattern.permute.xlu0 7
        %3447 = vperm.xlu0 %3446, %v224
        %v3448 = vpop.permute.xlu0 %3447
        %v3451 = vunpack.c.l.s4 839922192
        %v3452 = vunpack.c.0.s8 %v3451
        %v3453 = vlaneseq
        %v3454 = vshrl.u32 %v3453, 7
        %v3455 = vsub.s32 %v3452, %v3454
        %v3456 = vrot.slane %v3448, %v3455
        %3457 = vset.pattern.permute.xlu0 7
        %3458 = vperm.xlu0 %3457, %v225
        %v3459 = vpop.permute.xlu0 %3458
        %v3462 = vunpack.c.l.s4 839922192
        %v3463 = vunpack.c.0.s8 %v3462
        %v3464 = vlaneseq
        %v3465 = vshrl.u32 %v3464, 7
        %v3466 = vsub.s32 %v3463, %v3465
        %v3467 = vrot.slane %v3459, %v3466
        %3468 = vset.pattern.permute.xlu0 7
        %3469 = vperm.xlu0 %3468, %v226
        %v3470 = vpop.permute.xlu0 %3469
        %v3473 = vunpack.c.l.s4 839922192
        %v3474 = vunpack.c.0.s8 %v3473
        %v3475 = vlaneseq
        %v3476 = vshrl.u32 %v3475, 7
        %v3477 = vsub.s32 %v3474, %v3476
        %v3478 = vrot.slane %v3470, %v3477
        %3479 = vset.pattern.permute.xlu0 7
        %3480 = vperm.xlu0 %3479, %v227
        %v3481 = vpop.permute.xlu0 %3480
        %v3484 = vunpack.c.l.s4 839922192
        %v3485 = vunpack.c.0.s8 %v3484
        %v3486 = vlaneseq
        %v3487 = vshrl.u32 %v3486, 7
        %v3488 = vsub.s32 %v3485, %v3487
        %v3489 = vrot.slane %v3481, %v3488
        %3490 = vset.pattern.permute.xlu0 7
        %3491 = vperm.xlu0 %3490, %v228
        %v3492 = vpop.permute.xlu0 %3491
        %v3495 = vunpack.c.l.s4 839922192
        %v3496 = vunpack.c.0.s8 %v3495
        %v3497 = vlaneseq
        %v3498 = vshrl.u32 %v3497, 7
        %v3499 = vsub.s32 %v3496, %v3498
        %v3500 = vrot.slane %v3492, %v3499
        %3501 = vset.pattern.permute.xlu0 7
        %3502 = vperm.xlu0 %3501, %v229
        %v3503 = vpop.permute.xlu0 %3502
        %v3506 = vunpack.c.l.s4 839922192
        %v3507 = vunpack.c.0.s8 %v3506
        %v3508 = vlaneseq
        %v3509 = vshrl.u32 %v3508, 7
        %v3510 = vsub.s32 %v3507, %v3509
        %v3511 = vrot.slane %v3503, %v3510
        %3512 = vset.pattern.permute.xlu0 7
        %3513 = vperm.xlu0 %3512, %v230
        %v3514 = vpop.permute.xlu0 %3513
        %v3517 = vunpack.c.l.s4 839922192
        %v3518 = vunpack.c.0.s8 %v3517
        %v3519 = vlaneseq
        %v3520 = vshrl.u32 %v3519, 7
        %v3521 = vsub.s32 %v3518, %v3520
        %v3522 = vrot.slane %v3514, %v3521
        %3523 = vset.pattern.permute.xlu0 7
        %3524 = vperm.xlu0 %3523, %v231
        %v3525 = vpop.permute.xlu0 %3524
        %v3528 = vunpack.c.l.s4 839922192
        %v3529 = vunpack.c.0.s8 %v3528
        %v3530 = vlaneseq
        %v3531 = vshrl.u32 %v3530, 7
        %v3532 = vsub.s32 %v3529, %v3531
        %v3533 = vrot.slane %v3525, %v3532
        %3534 = vset.pattern.permute.xlu0 7
        %3535 = vperm.xlu0 %3534, %v232
        %v3536 = vpop.permute.xlu0 %3535
        %v3539 = vunpack.c.l.s4 839922192
        %v3540 = vunpack.c.0.s8 %v3539
        %v3541 = vlaneseq
        %v3542 = vshrl.u32 %v3541, 7
        %v3543 = vsub.s32 %v3540, %v3542
        %v3544 = vrot.slane %v3536, %v3543
        %3545 = vset.pattern.permute.xlu0 7
        %3546 = vperm.xlu0 %3545, %v233
        %v3547 = vpop.permute.xlu0 %3546
        %v3550 = vunpack.c.l.s4 839922192
        %v3551 = vunpack.c.0.s8 %v3550
        %v3552 = vlaneseq
        %v3553 = vshrl.u32 %v3552, 7
        %v3554 = vsub.s32 %v3551, %v3553
        %v3555 = vrot.slane %v3547, %v3554
        %3556 = vset.pattern.permute.xlu0 7
        %3557 = vperm.xlu0 %3556, %v234
        %v3558 = vpop.permute.xlu0 %3557
        %v3561 = vunpack.c.l.s4 839922192
        %v3562 = vunpack.c.0.s8 %v3561
        %v3563 = vlaneseq
        %v3564 = vshrl.u32 %v3563, 7
        %v3565 = vsub.s32 %v3562, %v3564
        %v3566 = vrot.slane %v3558, %v3565
        %3567 = vset.pattern.permute.xlu0 7
        %3568 = vperm.xlu0 %3567, %v235
        %v3569 = vpop.permute.xlu0 %3568
        %v3572 = vunpack.c.l.s4 839922192
        %v3573 = vunpack.c.0.s8 %v3572
        %v3574 = vlaneseq
        %v3575 = vshrl.u32 %v3574, 7
        %v3576 = vsub.s32 %v3573, %v3575
        %v3577 = vrot.slane %v3569, %v3576
        %3578 = vset.pattern.permute.xlu0 7
        %3579 = vperm.xlu0 %3578, %v236
        %v3580 = vpop.permute.xlu0 %3579
        %v3583 = vunpack.c.l.s4 839922192
        %v3584 = vunpack.c.0.s8 %v3583
        %v3585 = vlaneseq
        %v3586 = vshrl.u32 %v3585, 7
        %v3587 = vsub.s32 %v3584, %v3586
        %v3588 = vrot.slane %v3580, %v3587
        %3589 = vset.pattern.permute.xlu0 7
        %3590 = vperm.xlu0 %3589, %v237
        %v3591 = vpop.permute.xlu0 %3590
        %v3594 = vunpack.c.l.s4 839922192
        %v3595 = vunpack.c.0.s8 %v3594
        %v3596 = vlaneseq
        %v3597 = vshrl.u32 %v3596, 7
        %v3598 = vsub.s32 %v3595, %v3597
        %v3599 = vrot.slane %v3591, %v3598
        %3600 = vset.pattern.permute.xlu0 7
        %3601 = vperm.xlu0 %3600, %v238
        %v3602 = vpop.permute.xlu0 %3601
        %v3605 = vunpack.c.l.s4 839922192
        %v3606 = vunpack.c.0.s8 %v3605
        %v3607 = vlaneseq
        %v3608 = vshrl.u32 %v3607, 7
        %v3609 = vsub.s32 %v3606, %v3608
        %v3610 = vrot.slane %v3602, %v3609
        %3611 = vset.pattern.permute.xlu0 7
        %3612 = vperm.xlu0 %3611, %v239
        %v3613 = vpop.permute.xlu0 %3612
        %v3616 = vunpack.c.l.s4 839922192
        %v3617 = vunpack.c.0.s8 %v3616
        %v3618 = vlaneseq
        %v3619 = vshrl.u32 %v3618, 7
        %v3620 = vsub.s32 %v3617, %v3619
        %v3621 = vrot.slane %v3613, %v3620
        %3622 = vset.pattern.permute.xlu0 7
        %3623 = vperm.xlu0 %3622, %v240
        %v3624 = vpop.permute.xlu0 %3623
        %v3627 = vunpack.c.l.s4 839922192
        %v3628 = vunpack.c.0.s8 %v3627
        %v3629 = vlaneseq
        %v3630 = vshrl.u32 %v3629, 7
        %v3631 = vsub.s32 %v3628, %v3630
        %v3632 = vrot.slane %v3624, %v3631
        %3633 = vset.pattern.permute.xlu0 7
        %3634 = vperm.xlu0 %3633, %v241
        %v3635 = vpop.permute.xlu0 %3634
        %v3638 = vunpack.c.l.s4 839922192
        %v3639 = vunpack.c.0.s8 %v3638
        %v3640 = vlaneseq
        %v3641 = vshrl.u32 %v3640, 7
        %v3642 = vsub.s32 %v3639, %v3641
        %v3643 = vrot.slane %v3635, %v3642
        %3644 = vset.pattern.permute.xlu0 7
        %3645 = vperm.xlu0 %3644, %v242
        %v3646 = vpop.permute.xlu0 %3645
        %v3649 = vunpack.c.l.s4 839922192
        %v3650 = vunpack.c.0.s8 %v3649
        %v3651 = vlaneseq
        %v3652 = vshrl.u32 %v3651, 7
        %v3653 = vsub.s32 %v3650, %v3652
        %v3654 = vrot.slane %v3646, %v3653
        %3655 = vset.pattern.permute.xlu0 7
        %3656 = vperm.xlu0 %3655, %v243
        %v3657 = vpop.permute.xlu0 %3656
        %v3660 = vunpack.c.l.s4 839922192
        %v3661 = vunpack.c.0.s8 %v3660
        %v3662 = vlaneseq
        %v3663 = vshrl.u32 %v3662, 7
        %v3664 = vsub.s32 %v3661, %v3663
        %v3665 = vrot.slane %v3657, %v3664
        %3666 = vset.pattern.permute.xlu0 7
        %3667 = vperm.xlu0 %3666, %v244
        %v3668 = vpop.permute.xlu0 %3667
        %v3671 = vunpack.c.l.s4 839922192
        %v3672 = vunpack.c.0.s8 %v3671
        %v3673 = vlaneseq
        %v3674 = vshrl.u32 %v3673, 7
        %v3675 = vsub.s32 %v3672, %v3674
        %v3676 = vrot.slane %v3668, %v3675
        %3677 = vset.pattern.permute.xlu0 7
        %3678 = vperm.xlu0 %3677, %v245
        %v3679 = vpop.permute.xlu0 %3678
        %v3682 = vunpack.c.l.s4 839922192
        %v3683 = vunpack.c.0.s8 %v3682
        %v3684 = vlaneseq
        %v3685 = vshrl.u32 %v3684, 7
        %v3686 = vsub.s32 %v3683, %v3685
        %v3687 = vrot.slane %v3679, %v3686
        %3688 = vset.pattern.permute.xlu0 7
        %3689 = vperm.xlu0 %3688, %v246
        %v3690 = vpop.permute.xlu0 %3689
        %v3693 = vunpack.c.l.s4 839922192
        %v3694 = vunpack.c.0.s8 %v3693
        %v3695 = vlaneseq
        %v3696 = vshrl.u32 %v3695, 7
        %v3697 = vsub.s32 %v3694, %v3696
        %v3698 = vrot.slane %v3690, %v3697
        %3699 = vset.pattern.permute.xlu0 7
        %3700 = vperm.xlu0 %3699, %v247
        %v3701 = vpop.permute.xlu0 %3700
        %v3704 = vunpack.c.l.s4 839922192
        %v3705 = vunpack.c.0.s8 %v3704
        %v3706 = vlaneseq
        %v3707 = vshrl.u32 %v3706, 7
        %v3708 = vsub.s32 %v3705, %v3707
        %v3709 = vrot.slane %v3701, %v3708
        %3710 = vset.pattern.permute.xlu0 7
        %3711 = vperm.xlu0 %3710, %v248
        %v3712 = vpop.permute.xlu0 %3711
        %v3715 = vunpack.c.l.s4 839922192
        %v3716 = vunpack.c.0.s8 %v3715
        %v3717 = vlaneseq
        %v3718 = vshrl.u32 %v3717, 7
        %v3719 = vsub.s32 %v3716, %v3718
        %v3720 = vrot.slane %v3712, %v3719
        %3721 = vset.pattern.permute.xlu0 7
        %3722 = vperm.xlu0 %3721, %v249
        %v3723 = vpop.permute.xlu0 %3722
        %v3726 = vunpack.c.l.s4 839922192
        %v3727 = vunpack.c.0.s8 %v3726
        %v3728 = vlaneseq
        %v3729 = vshrl.u32 %v3728, 7
        %v3730 = vsub.s32 %v3727, %v3729
        %v3731 = vrot.slane %v3723, %v3730
        %3732 = vset.pattern.permute.xlu0 7
        %3733 = vperm.xlu0 %3732, %v250
        %v3734 = vpop.permute.xlu0 %3733
        %v3737 = vunpack.c.l.s4 839922192
        %v3738 = vunpack.c.0.s8 %v3737
        %v3739 = vlaneseq
        %v3740 = vshrl.u32 %v3739, 7
        %v3741 = vsub.s32 %v3738, %v3740
        %v3742 = vrot.slane %v3734, %v3741
        %3743 = vset.pattern.permute.xlu0 7
        %3744 = vperm.xlu0 %3743, %v251
        %v3745 = vpop.permute.xlu0 %3744
        %v3748 = vunpack.c.l.s4 839922192
        %v3749 = vunpack.c.0.s8 %v3748
        %v3750 = vlaneseq
        %v3751 = vshrl.u32 %v3750, 7
        %v3752 = vsub.s32 %v3749, %v3751
        %v3753 = vrot.slane %v3745, %v3752
        %3754 = vset.pattern.permute.xlu0 7
        %3755 = vperm.xlu0 %3754, %v252
        %v3756 = vpop.permute.xlu0 %3755
        %v3759 = vunpack.c.l.s4 839922192
        %v3760 = vunpack.c.0.s8 %v3759
        %v3761 = vlaneseq
        %v3762 = vshrl.u32 %v3761, 7
        %v3763 = vsub.s32 %v3760, %v3762
        %v3764 = vrot.slane %v3756, %v3763
        %3765 = vset.pattern.permute.xlu0 7
        %3766 = vperm.xlu0 %3765, %v253
        %v3767 = vpop.permute.xlu0 %3766
        %v3770 = vunpack.c.l.s4 839922192
        %v3771 = vunpack.c.0.s8 %v3770
        %v3772 = vlaneseq
        %v3773 = vshrl.u32 %v3772, 7
        %v3774 = vsub.s32 %v3771, %v3773
        %v3775 = vrot.slane %v3767, %v3774
        %3776 = vset.pattern.permute.xlu0 7
        %3777 = vperm.xlu0 %3776, %v254
        %v3778 = vpop.permute.xlu0 %3777
        %v3781 = vunpack.c.l.s4 839922192
        %v3782 = vunpack.c.0.s8 %v3781
        %v3783 = vlaneseq
        %v3784 = vshrl.u32 %v3783, 7
        %v3785 = vsub.s32 %v3782, %v3784
        %v3786 = vrot.slane %v3778, %v3785
        %v3787 = vmul.bf16 %v223, %v3445
        %v3788 = vmul.bf16 %v224, %v3456
        %v3789 = vmul.bf16 %v225, %v3467
        %v3790 = vmul.bf16 %v226, %v3478
        %v3791 = vmul.bf16 %v227, %v3489
        %v3792 = vmul.bf16 %v228, %v3500
        %v3793 = vmul.bf16 %v229, %v3511
        %v3794 = vmul.bf16 %v230, %v3522
        %v3795 = vmul.bf16 %v231, %v3533
        %v3796 = vmul.bf16 %v232, %v3544
        %v3797 = vmul.bf16 %v233, %v3555
        %v3798 = vmul.bf16 %v234, %v3566
        %v3799 = vmul.bf16 %v235, %v3577
        %v3800 = vmul.bf16 %v236, %v3588
        %v3801 = vmul.bf16 %v237, %v3599
        %v3802 = vmul.bf16 %v238, %v3610
        %v3803 = vmul.bf16 %v239, %v3621
        %v3804 = vmul.bf16 %v240, %v3632
        %v3805 = vmul.bf16 %v241, %v3643
        %v3806 = vmul.bf16 %v242, %v3654
        %v3807 = vmul.bf16 %v243, %v3665
        %v3808 = vmul.bf16 %v244, %v3676
        %v3809 = vmul.bf16 %v245, %v3687
        %v3810 = vmul.bf16 %v246, %v3698
        %v3811 = vmul.bf16 %v247, %v3709
        %v3812 = vmul.bf16 %v248, %v3720
        %v3813 = vmul.bf16 %v249, %v3731
        %v3814 = vmul.bf16 %v250, %v3742
        %v3815 = vmul.bf16 %v251, %v3753
        %v3816 = vmul.bf16 %v252, %v3764
        %v3817 = vmul.bf16 %v253, %v3775
        %v3818 = vmul.bf16 %v254, %v3786
        %v3851 = vunpack.c.l.b16 %v223
        %v3852 = vunpack.c.l.b16 %v224
        %v3853 = vunpack.c.l.b16 %v225
        %v3854 = vunpack.c.l.b16 %v226
        %v3855 = vunpack.c.l.b16 %v227
        %v3856 = vunpack.c.l.b16 %v228
        %v3857 = vunpack.c.l.b16 %v229
        %v3858 = vunpack.c.l.b16 %v230
        %v3859 = vunpack.c.l.b16 %v231
        %v3860 = vunpack.c.l.b16 %v232
        %v3861 = vunpack.c.l.b16 %v233
        %v3862 = vunpack.c.l.b16 %v234
        %v3863 = vunpack.c.l.b16 %v235
        %v3864 = vunpack.c.l.b16 %v236
        %v3865 = vunpack.c.l.b16 %v237
        %v3866 = vunpack.c.l.b16 %v238
        %v3867 = vunpack.c.l.b16 %v239
        %v3868 = vunpack.c.l.b16 %v240
        %v3869 = vunpack.c.l.b16 %v241
        %v3870 = vunpack.c.l.b16 %v242
        %v3871 = vunpack.c.l.b16 %v243
        %v3872 = vunpack.c.l.b16 %v244
        %v3873 = vunpack.c.l.b16 %v245
        %v3874 = vunpack.c.l.b16 %v246
        %v3875 = vunpack.c.l.b16 %v247
        %v3876 = vunpack.c.l.b16 %v248
        %v3877 = vunpack.c.l.b16 %v249
        %v3878 = vunpack.c.l.b16 %v250
        %v3879 = vunpack.c.l.b16 %v251
        %v3880 = vunpack.c.l.b16 %v252
        %v3881 = vunpack.c.l.b16 %v253
        %v3882 = vunpack.c.l.b16 %v254
        %v3883 = vpack.c.b16 %v3852, %v3851
        %v3884 = vpack.c.b16 %v3854, %v3853
        %v3885 = vpack.c.b16 %v3856, %v3855
        %v3886 = vpack.c.b16 %v3858, %v3857
        %v3887 = vpack.c.b16 %v3860, %v3859
        %v3888 = vpack.c.b16 %v3862, %v3861
        %v3889 = vpack.c.b16 %v3864, %v3863
        %v3890 = vpack.c.b16 %v3866, %v3865
        %v3891 = vpack.c.b16 %v3868, %v3867
        %v3892 = vpack.c.b16 %v3870, %v3869
        %v3893 = vpack.c.b16 %v3872, %v3871
        %v3894 = vpack.c.b16 %v3874, %v3873
        %v3895 = vpack.c.b16 %v3876, %v3875
        %v3896 = vpack.c.b16 %v3878, %v3877
        %v3897 = vpack.c.b16 %v3880, %v3879
        %v3898 = vpack.c.b16 %v3882, %v3881
        %3899 = vrot.lane.b32.xlu0 %v3883, 1
        %v3900 = vpop.permute.xlu0 %3899
        %3901 = vrot.lane.b32.xlu0 %v3884, 1
        %v3902 = vpop.permute.xlu0 %3901
        %3903 = vrot.lane.b32.xlu0 %v3885, 1
        %v3904 = vpop.permute.xlu0 %3903
        %3905 = vrot.lane.b32.xlu0 %v3886, 1
        %v3906 = vpop.permute.xlu0 %3905
        %3907 = vrot.lane.b32.xlu0 %v3887, 1
        %v3908 = vpop.permute.xlu0 %3907
        %3909 = vrot.lane.b32.xlu0 %v3888, 1
        %v3910 = vpop.permute.xlu0 %3909
        %3911 = vrot.lane.b32.xlu0 %v3889, 1
        %v3912 = vpop.permute.xlu0 %3911
        %3913 = vrot.lane.b32.xlu0 %v3890, 1
        %v3914 = vpop.permute.xlu0 %3913
        %3915 = vrot.lane.b32.xlu0 %v3891, 1
        %v3916 = vpop.permute.xlu0 %3915
        %3917 = vrot.lane.b32.xlu0 %v3892, 1
        %v3918 = vpop.permute.xlu0 %3917
        %3919 = vrot.lane.b32.xlu0 %v3893, 1
        %v3920 = vpop.permute.xlu0 %3919
        %3921 = vrot.lane.b32.xlu0 %v3894, 1
        %v3922 = vpop.permute.xlu0 %3921
        %3923 = vrot.lane.b32.xlu0 %v3895, 1
        %v3924 = vpop.permute.xlu0 %3923
        %3925 = vrot.lane.b32.xlu0 %v3896, 1
        %v3926 = vpop.permute.xlu0 %3925
        %3927 = vrot.lane.b32.xlu0 %v3897, 1
        %v3928 = vpop.permute.xlu0 %3927
        %3929 = vrot.lane.b32.xlu0 %v3898, 1
        %v3930 = vpop.permute.xlu0 %3929
        %v3963 = vunpack.c.l.b16 %v1099
        %v3964 = vunpack.c.l.b16 %v1100
        %v3965 = vunpack.c.l.b16 %v1101
        %v3966 = vunpack.c.l.b16 %v1102
        %v3967 = vunpack.c.l.b16 %v1103
        %v3968 = vunpack.c.l.b16 %v1104
        %v3969 = vunpack.c.l.b16 %v1105
        %v3970 = vunpack.c.l.b16 %v1106
        %v3971 = vunpack.c.l.b16 %v1107
        %v3972 = vunpack.c.l.b16 %v1108
        %v3973 = vunpack.c.l.b16 %v1109
        %v3974 = vunpack.c.l.b16 %v1110
        %v3975 = vunpack.c.l.b16 %v1111
        %v3976 = vunpack.c.l.b16 %v1112
        %v3977 = vunpack.c.l.b16 %v1113
        %v3978 = vunpack.c.l.b16 %v1114
        %v3979 = vunpack.c.l.b16 %v1115
        %v3980 = vunpack.c.l.b16 %v1116
        %v3981 = vunpack.c.l.b16 %v1117
        %v3982 = vunpack.c.l.b16 %v1118
        %v3983 = vunpack.c.l.b16 %v1119
        %v3984 = vunpack.c.l.b16 %v1120
        %v3985 = vunpack.c.l.b16 %v1121
        %v3986 = vunpack.c.l.b16 %v1122
        %v3987 = vunpack.c.l.b16 %v1123
        %v3988 = vunpack.c.l.b16 %v1124
        %v3989 = vunpack.c.l.b16 %v1125
        %v3990 = vunpack.c.l.b16 %v1126
        %v3991 = vunpack.c.l.b16 %v1127
        %v3992 = vunpack.c.l.b16 %v1128
        %v3993 = vunpack.c.l.b16 %v1129
        %v3994 = vunpack.c.l.b16 %v1130
        %v3995 = vpack.c.b16 %v3964, %v3963
        %v3996 = vpack.c.b16 %v3966, %v3965
        %v3997 = vpack.c.b16 %v3968, %v3967
        %v3998 = vpack.c.b16 %v3970, %v3969
        %v3999 = vpack.c.b16 %v3972, %v3971
        %v4000 = vpack.c.b16 %v3974, %v3973
        %v4001 = vpack.c.b16 %v3976, %v3975
        %v4002 = vpack.c.b16 %v3978, %v3977
        %v4003 = vpack.c.b16 %v3980, %v3979
        %v4004 = vpack.c.b16 %v3982, %v3981
        %v4005 = vpack.c.b16 %v3984, %v3983
        %v4006 = vpack.c.b16 %v3986, %v3985
        %v4007 = vpack.c.b16 %v3988, %v3987
        %v4008 = vpack.c.b16 %v3990, %v3989
        %v4009 = vpack.c.b16 %v3992, %v3991
        %v4010 = vpack.c.b16 %v3994, %v3993
        %4011 = vrot.lane.b32.xlu0 %v3995, 9
        %v4012 = vpop.permute.xlu0 %4011
        %4013 = vrot.lane.b32.xlu0 %v3996, 9
        %v4014 = vpop.permute.xlu0 %4013
        %4015 = vrot.lane.b32.xlu0 %v3997, 9
        %v4016 = vpop.permute.xlu0 %4015
        %4017 = vrot.lane.b32.xlu0 %v3998, 9
        %v4018 = vpop.permute.xlu0 %4017
        %4019 = vrot.lane.b32.xlu0 %v3999, 9
        %v4020 = vpop.permute.xlu0 %4019
        %4021 = vrot.lane.b32.xlu0 %v4000, 9
        %v4022 = vpop.permute.xlu0 %4021
        %4023 = vrot.lane.b32.xlu0 %v4001, 9
        %v4024 = vpop.permute.xlu0 %4023
        %4025 = vrot.lane.b32.xlu0 %v4002, 9
        %v4026 = vpop.permute.xlu0 %4025
        %4027 = vrot.lane.b32.xlu0 %v4003, 9
        %v4028 = vpop.permute.xlu0 %4027
        %4029 = vrot.lane.b32.xlu0 %v4004, 9
        %v4030 = vpop.permute.xlu0 %4029
        %4031 = vrot.lane.b32.xlu0 %v4005, 9
        %v4032 = vpop.permute.xlu0 %4031
        %4033 = vrot.lane.b32.xlu0 %v4006, 9
        %v4034 = vpop.permute.xlu0 %4033
        %4035 = vrot.lane.b32.xlu0 %v4007, 9
        %v4036 = vpop.permute.xlu0 %4035
        %4037 = vrot.lane.b32.xlu0 %v4008, 9
        %v4038 = vpop.permute.xlu0 %4037
        %4039 = vrot.lane.b32.xlu0 %v4009, 9
        %v4040 = vpop.permute.xlu0 %4039
        %4041 = vrot.lane.b32.xlu0 %v4010, 9
        %v4042 = vpop.permute.xlu0 %4041
        %v4075 = vunpack.c.l.b16 %v1483
        %v4076 = vunpack.c.l.b16 %v1484
        %v4077 = vunpack.c.l.b16 %v1485
        %v4078 = vunpack.c.l.b16 %v1486
        %v4079 = vunpack.c.l.b16 %v1487
        %v4080 = vunpack.c.l.b16 %v1488
        %v4081 = vunpack.c.l.b16 %v1489
        %v4082 = vunpack.c.l.b16 %v1490
        %v4083 = vunpack.c.l.b16 %v1491
        %v4084 = vunpack.c.l.b16 %v1492
        %v4085 = vunpack.c.l.b16 %v1493
        %v4086 = vunpack.c.l.b16 %v1494
        %v4087 = vunpack.c.l.b16 %v1495
        %v4088 = vunpack.c.l.b16 %v1496
        %v4089 = vunpack.c.l.b16 %v1497
        %v4090 = vunpack.c.l.b16 %v1498
        %v4091 = vunpack.c.l.b16 %v1499
        %v4092 = vunpack.c.l.b16 %v1500
        %v4093 = vunpack.c.l.b16 %v1501
        %v4094 = vunpack.c.l.b16 %v1502
        %v4095 = vunpack.c.l.b16 %v1503
        %v4096 = vunpack.c.l.b16 %v1504
        %v4097 = vunpack.c.l.b16 %v1505
        %v4098 = vunpack.c.l.b16 %v1506
        %v4099 = vunpack.c.l.b16 %v1507
        %v4100 = vunpack.c.l.b16 %v1508
        %v4101 = vunpack.c.l.b16 %v1509
        %v4102 = vunpack.c.l.b16 %v1510
        %v4103 = vunpack.c.l.b16 %v1511
        %v4104 = vunpack.c.l.b16 %v1512
        %v4105 = vunpack.c.l.b16 %v1513
        %v4106 = vunpack.c.l.b16 %v1514
        %v4107 = vpack.c.b16 %v4076, %v4075
        %v4108 = vpack.c.b16 %v4078, %v4077
        %v4109 = vpack.c.b16 %v4080, %v4079
        %v4110 = vpack.c.b16 %v4082, %v4081
        %v4111 = vpack.c.b16 %v4084, %v4083
        %v4112 = vpack.c.b16 %v4086, %v4085
        %v4113 = vpack.c.b16 %v4088, %v4087
        %v4114 = vpack.c.b16 %v4090, %v4089
        %v4115 = vpack.c.b16 %v4092, %v4091
        %v4116 = vpack.c.b16 %v4094, %v4093
        %v4117 = vpack.c.b16 %v4096, %v4095
        %v4118 = vpack.c.b16 %v4098, %v4097
        %v4119 = vpack.c.b16 %v4100, %v4099
        %v4120 = vpack.c.b16 %v4102, %v4101
        %v4121 = vpack.c.b16 %v4104, %v4103
        %v4122 = vpack.c.b16 %v4106, %v4105
        %4123 = vrot.lane.b32.xlu0 %v4107, 17
        %v4124 = vpop.permute.xlu0 %4123
        %4125 = vrot.lane.b32.xlu0 %v4108, 17
        %v4126 = vpop.permute.xlu0 %4125
        %4127 = vrot.lane.b32.xlu0 %v4109, 17
        %v4128 = vpop.permute.xlu0 %4127
        %4129 = vrot.lane.b32.xlu0 %v4110, 17
        %v4130 = vpop.permute.xlu0 %4129
        %4131 = vrot.lane.b32.xlu0 %v4111, 17
        %v4132 = vpop.permute.xlu0 %4131
        %4133 = vrot.lane.b32.xlu0 %v4112, 17
        %v4134 = vpop.permute.xlu0 %4133
        %4135 = vrot.lane.b32.xlu0 %v4113, 17
        %v4136 = vpop.permute.xlu0 %4135
        %4137 = vrot.lane.b32.xlu0 %v4114, 17
        %v4138 = vpop.permute.xlu0 %4137
        %4139 = vrot.lane.b32.xlu0 %v4115, 17
        %v4140 = vpop.permute.xlu0 %4139
        %4141 = vrot.lane.b32.xlu0 %v4116, 17
        %v4142 = vpop.permute.xlu0 %4141
        %4143 = vrot.lane.b32.xlu0 %v4117, 17
        %v4144 = vpop.permute.xlu0 %4143
        %4145 = vrot.lane.b32.xlu0 %v4118, 17
        %v4146 = vpop.permute.xlu0 %4145
        %4147 = vrot.lane.b32.xlu0 %v4119, 17
        %v4148 = vpop.permute.xlu0 %4147
        %4149 = vrot.lane.b32.xlu0 %v4120, 17
        %v4150 = vpop.permute.xlu0 %4149
        %4151 = vrot.lane.b32.xlu0 %v4121, 17
        %v4152 = vpop.permute.xlu0 %4151
        %4153 = vrot.lane.b32.xlu0 %v4122, 17
        %v4154 = vpop.permute.xlu0 %4153
        %v4187 = vunpack.c.l.b16 %v1867
        %v4188 = vunpack.c.l.b16 %v1868
        %v4189 = vunpack.c.l.b16 %v1869
        %v4190 = vunpack.c.l.b16 %v1870
        %v4191 = vunpack.c.l.b16 %v1871
        %v4192 = vunpack.c.l.b16 %v1872
        %v4193 = vunpack.c.l.b16 %v1873
        %v4194 = vunpack.c.l.b16 %v1874
        %v4195 = vunpack.c.l.b16 %v1875
        %v4196 = vunpack.c.l.b16 %v1876
        %v4197 = vunpack.c.l.b16 %v1877
        %v4198 = vunpack.c.l.b16 %v1878
        %v4199 = vunpack.c.l.b16 %v1879
        %v4200 = vunpack.c.l.b16 %v1880
        %v4201 = vunpack.c.l.b16 %v1881
        %v4202 = vunpack.c.l.b16 %v1882
        %v4203 = vunpack.c.l.b16 %v1883
        %v4204 = vunpack.c.l.b16 %v1884
        %v4205 = vunpack.c.l.b16 %v1885
        %v4206 = vunpack.c.l.b16 %v1886
        %v4207 = vunpack.c.l.b16 %v1887
        %v4208 = vunpack.c.l.b16 %v1888
        %v4209 = vunpack.c.l.b16 %v1889
        %v4210 = vunpack.c.l.b16 %v1890
        %v4211 = vunpack.c.l.b16 %v1891
        %v4212 = vunpack.c.l.b16 %v1892
        %v4213 = vunpack.c.l.b16 %v1893
        %v4214 = vunpack.c.l.b16 %v1894
        %v4215 = vunpack.c.l.b16 %v1895
        %v4216 = vunpack.c.l.b16 %v1896
        %v4217 = vunpack.c.l.b16 %v1897
        %v4218 = vunpack.c.l.b16 %v1898
        %v4219 = vpack.c.b16 %v4188, %v4187
        %v4220 = vpack.c.b16 %v4190, %v4189
        %v4221 = vpack.c.b16 %v4192, %v4191
        %v4222 = vpack.c.b16 %v4194, %v4193
        %v4223 = vpack.c.b16 %v4196, %v4195
        %v4224 = vpack.c.b16 %v4198, %v4197
        %v4225 = vpack.c.b16 %v4200, %v4199
        %v4226 = vpack.c.b16 %v4202, %v4201
        %v4227 = vpack.c.b16 %v4204, %v4203
        %v4228 = vpack.c.b16 %v4206, %v4205
        %v4229 = vpack.c.b16 %v4208, %v4207
        %v4230 = vpack.c.b16 %v4210, %v4209
        %v4231 = vpack.c.b16 %v4212, %v4211
        %v4232 = vpack.c.b16 %v4214, %v4213
        %v4233 = vpack.c.b16 %v4216, %v4215
        %v4234 = vpack.c.b16 %v4218, %v4217
        %4235 = vrot.lane.b32.xlu0 %v4219, 25
        %v4236 = vpop.permute.xlu0 %4235
        %4237 = vrot.lane.b32.xlu0 %v4220, 25
        %v4238 = vpop.permute.xlu0 %4237
        %4239 = vrot.lane.b32.xlu0 %v4221, 25
        %v4240 = vpop.permute.xlu0 %4239
        %4241 = vrot.lane.b32.xlu0 %v4222, 25
        %v4242 = vpop.permute.xlu0 %4241
        %4243 = vrot.lane.b32.xlu0 %v4223, 25
        %v4244 = vpop.permute.xlu0 %4243
        %4245 = vrot.lane.b32.xlu0 %v4224, 25
        %v4246 = vpop.permute.xlu0 %4245
        %4247 = vrot.lane.b32.xlu0 %v4225, 25
        %v4248 = vpop.permute.xlu0 %4247
        %4249 = vrot.lane.b32.xlu0 %v4226, 25
        %v4250 = vpop.permute.xlu0 %4249
        %4251 = vrot.lane.b32.xlu0 %v4227, 25
        %v4252 = vpop.permute.xlu0 %4251
        %4253 = vrot.lane.b32.xlu0 %v4228, 25
        %v4254 = vpop.permute.xlu0 %4253
        %4255 = vrot.lane.b32.xlu0 %v4229, 25
        %v4256 = vpop.permute.xlu0 %4255
        %4257 = vrot.lane.b32.xlu0 %v4230, 25
        %v4258 = vpop.permute.xlu0 %4257
        %4259 = vrot.lane.b32.xlu0 %v4231, 25
        %v4260 = vpop.permute.xlu0 %4259
        %4261 = vrot.lane.b32.xlu0 %v4232, 25
        %v4262 = vpop.permute.xlu0 %4261
        %4263 = vrot.lane.b32.xlu0 %v4233, 25
        %v4264 = vpop.permute.xlu0 %4263
        %4265 = vrot.lane.b32.xlu0 %v4234, 25
        %v4266 = vpop.permute.xlu0 %4265
        %v4299 = vunpack.c.l.b16 %v2251
        %v4300 = vunpack.c.l.b16 %v2252
        %v4301 = vunpack.c.l.b16 %v2253
        %v4302 = vunpack.c.l.b16 %v2254
        %v4303 = vunpack.c.l.b16 %v2255
        %v4304 = vunpack.c.l.b16 %v2256
        %v4305 = vunpack.c.l.b16 %v2257
        %v4306 = vunpack.c.l.b16 %v2258
        %v4307 = vunpack.c.l.b16 %v2259
        %v4308 = vunpack.c.l.b16 %v2260
        %v4309 = vunpack.c.l.b16 %v2261
        %v4310 = vunpack.c.l.b16 %v2262
        %v4311 = vunpack.c.l.b16 %v2263
        %v4312 = vunpack.c.l.b16 %v2264
        %v4313 = vunpack.c.l.b16 %v2265
        %v4314 = vunpack.c.l.b16 %v2266
        %v4315 = vunpack.c.l.b16 %v2267
        %v4316 = vunpack.c.l.b16 %v2268
        %v4317 = vunpack.c.l.b16 %v2269
        %v4318 = vunpack.c.l.b16 %v2270
        %v4319 = vunpack.c.l.b16 %v2271
        %v4320 = vunpack.c.l.b16 %v2272
        %v4321 = vunpack.c.l.b16 %v2273
        %v4322 = vunpack.c.l.b16 %v2274
        %v4323 = vunpack.c.l.b16 %v2275
        %v4324 = vunpack.c.l.b16 %v2276
        %v4325 = vunpack.c.l.b16 %v2277
        %v4326 = vunpack.c.l.b16 %v2278
        %v4327 = vunpack.c.l.b16 %v2279
        %v4328 = vunpack.c.l.b16 %v2280
        %v4329 = vunpack.c.l.b16 %v2281
        %v4330 = vunpack.c.l.b16 %v2282
        %v4331 = vpack.c.b16 %v4300, %v4299
        %v4332 = vpack.c.b16 %v4302, %v4301
        %v4333 = vpack.c.b16 %v4304, %v4303
        %v4334 = vpack.c.b16 %v4306, %v4305
        %v4335 = vpack.c.b16 %v4308, %v4307
        %v4336 = vpack.c.b16 %v4310, %v4309
        %v4337 = vpack.c.b16 %v4312, %v4311
        %v4338 = vpack.c.b16 %v4314, %v4313
        %v4339 = vpack.c.b16 %v4316, %v4315
        %v4340 = vpack.c.b16 %v4318, %v4317
        %v4341 = vpack.c.b16 %v4320, %v4319
        %v4342 = vpack.c.b16 %v4322, %v4321
        %v4343 = vpack.c.b16 %v4324, %v4323
        %v4344 = vpack.c.b16 %v4326, %v4325
        %v4345 = vpack.c.b16 %v4328, %v4327
        %v4346 = vpack.c.b16 %v4330, %v4329
        %4347 = vrot.lane.b32.xlu0 %v4331, 33
        %v4348 = vpop.permute.xlu0 %4347
        %4349 = vrot.lane.b32.xlu0 %v4332, 33
        %v4350 = vpop.permute.xlu0 %4349
        %4351 = vrot.lane.b32.xlu0 %v4333, 33
        %v4352 = vpop.permute.xlu0 %4351
        %4353 = vrot.lane.b32.xlu0 %v4334, 33
        %v4354 = vpop.permute.xlu0 %4353
        %4355 = vrot.lane.b32.xlu0 %v4335, 33
        %v4356 = vpop.permute.xlu0 %4355
        %4357 = vrot.lane.b32.xlu0 %v4336, 33
        %v4358 = vpop.permute.xlu0 %4357
        %4359 = vrot.lane.b32.xlu0 %v4337, 33
        %v4360 = vpop.permute.xlu0 %4359
        %4361 = vrot.lane.b32.xlu0 %v4338, 33
        %v4362 = vpop.permute.xlu0 %4361
        %4363 = vrot.lane.b32.xlu0 %v4339, 33
        %v4364 = vpop.permute.xlu0 %4363
        %4365 = vrot.lane.b32.xlu0 %v4340, 33
        %v4366 = vpop.permute.xlu0 %4365
        %4367 = vrot.lane.b32.xlu0 %v4341, 33
        %v4368 = vpop.permute.xlu0 %4367
        %4369 = vrot.lane.b32.xlu0 %v4342, 33
        %v4370 = vpop.permute.xlu0 %4369
        %4371 = vrot.lane.b32.xlu0 %v4343, 33
        %v4372 = vpop.permute.xlu0 %4371
        %4373 = vrot.lane.b32.xlu0 %v4344, 33
        %v4374 = vpop.permute.xlu0 %4373
        %4375 = vrot.lane.b32.xlu0 %v4345, 33
        %v4376 = vpop.permute.xlu0 %4375
        %4377 = vrot.lane.b32.xlu0 %v4346, 33
        %v4378 = vpop.permute.xlu0 %4377
        %v4411 = vunpack.c.l.b16 %v2635
        %v4412 = vunpack.c.l.b16 %v2636
        %v4413 = vunpack.c.l.b16 %v2637
        %v4414 = vunpack.c.l.b16 %v2638
        %v4415 = vunpack.c.l.b16 %v2639
        %v4416 = vunpack.c.l.b16 %v2640
        %v4417 = vunpack.c.l.b16 %v2641
        %v4418 = vunpack.c.l.b16 %v2642
        %v4419 = vunpack.c.l.b16 %v2643
        %v4420 = vunpack.c.l.b16 %v2644
        %v4421 = vunpack.c.l.b16 %v2645
        %v4422 = vunpack.c.l.b16 %v2646
        %v4423 = vunpack.c.l.b16 %v2647
        %v4424 = vunpack.c.l.b16 %v2648
        %v4425 = vunpack.c.l.b16 %v2649
        %v4426 = vunpack.c.l.b16 %v2650
        %v4427 = vunpack.c.l.b16 %v2651
        %v4428 = vunpack.c.l.b16 %v2652
        %v4429 = vunpack.c.l.b16 %v2653
        %v4430 = vunpack.c.l.b16 %v2654
        %v4431 = vunpack.c.l.b16 %v2655
        %v4432 = vunpack.c.l.b16 %v2656
        %v4433 = vunpack.c.l.b16 %v2657
        %v4434 = vunpack.c.l.b16 %v2658
        %v4435 = vunpack.c.l.b16 %v2659
        %v4436 = vunpack.c.l.b16 %v2660
        %v4437 = vunpack.c.l.b16 %v2661
        %v4438 = vunpack.c.l.b16 %v2662
        %v4439 = vunpack.c.l.b16 %v2663
        %v4440 = vunpack.c.l.b16 %v2664
        %v4441 = vunpack.c.l.b16 %v2665
        %v4442 = vunpack.c.l.b16 %v2666
        %v4443 = vpack.c.b16 %v4412, %v4411
        %v4444 = vpack.c.b16 %v4414, %v4413
        %v4445 = vpack.c.b16 %v4416, %v4415
        %v4446 = vpack.c.b16 %v4418, %v4417
        %v4447 = vpack.c.b16 %v4420, %v4419
        %v4448 = vpack.c.b16 %v4422, %v4421
        %v4449 = vpack.c.b16 %v4424, %v4423
        %v4450 = vpack.c.b16 %v4426, %v4425
        %v4451 = vpack.c.b16 %v4428, %v4427
        %v4452 = vpack.c.b16 %v4430, %v4429
        %v4453 = vpack.c.b16 %v4432, %v4431
        %v4454 = vpack.c.b16 %v4434, %v4433
        %v4455 = vpack.c.b16 %v4436, %v4435
        %v4456 = vpack.c.b16 %v4438, %v4437
        %v4457 = vpack.c.b16 %v4440, %v4439
        %v4458 = vpack.c.b16 %v4442, %v4441
        %4459 = vrot.lane.b32.xlu0 %v4443, 41
        %v4460 = vpop.permute.xlu0 %4459
        %4461 = vrot.lane.b32.xlu0 %v4444, 41
        %v4462 = vpop.permute.xlu0 %4461
        %4463 = vrot.lane.b32.xlu0 %v4445, 41
        %v4464 = vpop.permute.xlu0 %4463
        %4465 = vrot.lane.b32.xlu0 %v4446, 41
        %v4466 = vpop.permute.xlu0 %4465
        %4467 = vrot.lane.b32.xlu0 %v4447, 41
        %v4468 = vpop.permute.xlu0 %4467
        %4469 = vrot.lane.b32.xlu0 %v4448, 41
        %v4470 = vpop.permute.xlu0 %4469
        %4471 = vrot.lane.b32.xlu0 %v4449, 41
        %v4472 = vpop.permute.xlu0 %4471
        %4473 = vrot.lane.b32.xlu0 %v4450, 41
        %v4474 = vpop.permute.xlu0 %4473
        %4475 = vrot.lane.b32.xlu0 %v4451, 41
        %v4476 = vpop.permute.xlu0 %4475
        %4477 = vrot.lane.b32.xlu0 %v4452, 41
        %v4478 = vpop.permute.xlu0 %4477
        %4479 = vrot.lane.b32.xlu0 %v4453, 41
        %v4480 = vpop.permute.xlu0 %4479
        %4481 = vrot.lane.b32.xlu0 %v4454, 41
        %v4482 = vpop.permute.xlu0 %4481
        %4483 = vrot.lane.b32.xlu0 %v4455, 41
        %v4484 = vpop.permute.xlu0 %4483
        %4485 = vrot.lane.b32.xlu0 %v4456, 41
        %v4486 = vpop.permute.xlu0 %4485
        %4487 = vrot.lane.b32.xlu0 %v4457, 41
        %v4488 = vpop.permute.xlu0 %4487
        %4489 = vrot.lane.b32.xlu0 %v4458, 41
        %v4490 = vpop.permute.xlu0 %4489
        %v4523 = vunpack.c.l.b16 %v3019
        %v4524 = vunpack.c.l.b16 %v3020
        %v4525 = vunpack.c.l.b16 %v3021
        %v4526 = vunpack.c.l.b16 %v3022
        %v4527 = vunpack.c.l.b16 %v3023
        %v4528 = vunpack.c.l.b16 %v3024
        %v4529 = vunpack.c.l.b16 %v3025
        %v4530 = vunpack.c.l.b16 %v3026
        %v4531 = vunpack.c.l.b16 %v3027
        %v4532 = vunpack.c.l.b16 %v3028
        %v4533 = vunpack.c.l.b16 %v3029
        %v4534 = vunpack.c.l.b16 %v3030
        %v4535 = vunpack.c.l.b16 %v3031
        %v4536 = vunpack.c.l.b16 %v3032
        %v4537 = vunpack.c.l.b16 %v3033
        %v4538 = vunpack.c.l.b16 %v3034
        %v4539 = vunpack.c.l.b16 %v3035
        %v4540 = vunpack.c.l.b16 %v3036
        %v4541 = vunpack.c.l.b16 %v3037
        %v4542 = vunpack.c.l.b16 %v3038
        %v4543 = vunpack.c.l.b16 %v3039
        %v4544 = vunpack.c.l.b16 %v3040
        %v4545 = vunpack.c.l.b16 %v3041
        %v4546 = vunpack.c.l.b16 %v3042
        %v4547 = vunpack.c.l.b16 %v3043
        %v4548 = vunpack.c.l.b16 %v3044
        %v4549 = vunpack.c.l.b16 %v3045
        %v4550 = vunpack.c.l.b16 %v3046
        %v4551 = vunpack.c.l.b16 %v3047
        %v4552 = vunpack.c.l.b16 %v3048
        %v4553 = vunpack.c.l.b16 %v3049
        %v4554 = vunpack.c.l.b16 %v3050
        %v4555 = vpack.c.b16 %v4524, %v4523
        %v4556 = vpack.c.b16 %v4526, %v4525
        %v4557 = vpack.c.b16 %v4528, %v4527
        %v4558 = vpack.c.b16 %v4530, %v4529
        %v4559 = vpack.c.b16 %v4532, %v4531
        %v4560 = vpack.c.b16 %v4534, %v4533
        %v4561 = vpack.c.b16 %v4536, %v4535
        %v4562 = vpack.c.b16 %v4538, %v4537
        %v4563 = vpack.c.b16 %v4540, %v4539
        %v4564 = vpack.c.b16 %v4542, %v4541
        %v4565 = vpack.c.b16 %v4544, %v4543
        %v4566 = vpack.c.b16 %v4546, %v4545
        %v4567 = vpack.c.b16 %v4548, %v4547
        %v4568 = vpack.c.b16 %v4550, %v4549
        %v4569 = vpack.c.b16 %v4552, %v4551
        %v4570 = vpack.c.b16 %v4554, %v4553
        %4571 = vrot.lane.b32.xlu0 %v4555, 49
        %v4572 = vpop.permute.xlu0 %4571
        %4573 = vrot.lane.b32.xlu0 %v4556, 49
        %v4574 = vpop.permute.xlu0 %4573
        %4575 = vrot.lane.b32.xlu0 %v4557, 49
        %v4576 = vpop.permute.xlu0 %4575
        %4577 = vrot.lane.b32.xlu0 %v4558, 49
        %v4578 = vpop.permute.xlu0 %4577
        %4579 = vrot.lane.b32.xlu0 %v4559, 49
        %v4580 = vpop.permute.xlu0 %4579
        %4581 = vrot.lane.b32.xlu0 %v4560, 49
        %v4582 = vpop.permute.xlu0 %4581
        %4583 = vrot.lane.b32.xlu0 %v4561, 49
        %v4584 = vpop.permute.xlu0 %4583
        %4585 = vrot.lane.b32.xlu0 %v4562, 49
        %v4586 = vpop.permute.xlu0 %4585
        %4587 = vrot.lane.b32.xlu0 %v4563, 49
        %v4588 = vpop.permute.xlu0 %4587
        %4589 = vrot.lane.b32.xlu0 %v4564, 49
        %v4590 = vpop.permute.xlu0 %4589
        %4591 = vrot.lane.b32.xlu0 %v4565, 49
        %v4592 = vpop.permute.xlu0 %4591
        %4593 = vrot.lane.b32.xlu0 %v4566, 49
        %v4594 = vpop.permute.xlu0 %4593
        %4595 = vrot.lane.b32.xlu0 %v4567, 49
        %v4596 = vpop.permute.xlu0 %4595
        %4597 = vrot.lane.b32.xlu0 %v4568, 49
        %v4598 = vpop.permute.xlu0 %4597
        %4599 = vrot.lane.b32.xlu0 %v4569, 49
        %v4600 = vpop.permute.xlu0 %4599
        %4601 = vrot.lane.b32.xlu0 %v4570, 49
        %v4602 = vpop.permute.xlu0 %4601
        %v4635 = vunpack.c.l.b16 %v3403
        %v4636 = vunpack.c.l.b16 %v3404
        %v4637 = vunpack.c.l.b16 %v3405
        %v4638 = vunpack.c.l.b16 %v3406
        %v4639 = vunpack.c.l.b16 %v3407
        %v4640 = vunpack.c.l.b16 %v3408
        %v4641 = vunpack.c.l.b16 %v3409
        %v4642 = vunpack.c.l.b16 %v3410
        %v4643 = vunpack.c.l.b16 %v3411
        %v4644 = vunpack.c.l.b16 %v3412
        %v4645 = vunpack.c.l.b16 %v3413
        %v4646 = vunpack.c.l.b16 %v3414
        %v4647 = vunpack.c.l.b16 %v3415
        %v4648 = vunpack.c.l.b16 %v3416
        %v4649 = vunpack.c.l.b16 %v3417
        %v4650 = vunpack.c.l.b16 %v3418
        %v4651 = vunpack.c.l.b16 %v3419
        %v4652 = vunpack.c.l.b16 %v3420
        %v4653 = vunpack.c.l.b16 %v3421
        %v4654 = vunpack.c.l.b16 %v3422
        %v4655 = vunpack.c.l.b16 %v3423
        %v4656 = vunpack.c.l.b16 %v3424
        %v4657 = vunpack.c.l.b16 %v3425
        %v4658 = vunpack.c.l.b16 %v3426
        %v4659 = vunpack.c.l.b16 %v3427
        %v4660 = vunpack.c.l.b16 %v3428
        %v4661 = vunpack.c.l.b16 %v3429
        %v4662 = vunpack.c.l.b16 %v3430
        %v4663 = vunpack.c.l.b16 %v3431
        %v4664 = vunpack.c.l.b16 %v3432
        %v4665 = vunpack.c.l.b16 %v3433
        %v4666 = vunpack.c.l.b16 %v3434
        %v4667 = vpack.c.b16 %v4636, %v4635
        %v4668 = vpack.c.b16 %v4638, %v4637
        %v4669 = vpack.c.b16 %v4640, %v4639
        %v4670 = vpack.c.b16 %v4642, %v4641
        %v4671 = vpack.c.b16 %v4644, %v4643
        %v4672 = vpack.c.b16 %v4646, %v4645
        %v4673 = vpack.c.b16 %v4648, %v4647
        %v4674 = vpack.c.b16 %v4650, %v4649
        %v4675 = vpack.c.b16 %v4652, %v4651
        %v4676 = vpack.c.b16 %v4654, %v4653
        %v4677 = vpack.c.b16 %v4656, %v4655
        %v4678 = vpack.c.b16 %v4658, %v4657
        %v4679 = vpack.c.b16 %v4660, %v4659
        %v4680 = vpack.c.b16 %v4662, %v4661
        %v4681 = vpack.c.b16 %v4664, %v4663
        %v4682 = vpack.c.b16 %v4666, %v4665
        %4683 = vrot.lane.b32.xlu0 %v4667, 57
        %v4684 = vpop.permute.xlu0 %4683
        %4685 = vrot.lane.b32.xlu0 %v4668, 57
        %v4686 = vpop.permute.xlu0 %4685
        %4687 = vrot.lane.b32.xlu0 %v4669, 57
        %v4688 = vpop.permute.xlu0 %4687
        %4689 = vrot.lane.b32.xlu0 %v4670, 57
        %v4690 = vpop.permute.xlu0 %4689
        %4691 = vrot.lane.b32.xlu0 %v4671, 57
        %v4692 = vpop.permute.xlu0 %4691
        %4693 = vrot.lane.b32.xlu0 %v4672, 57
        %v4694 = vpop.permute.xlu0 %4693
        %4695 = vrot.lane.b32.xlu0 %v4673, 57
        %v4696 = vpop.permute.xlu0 %4695
        %4697 = vrot.lane.b32.xlu0 %v4674, 57
        %v4698 = vpop.permute.xlu0 %4697
        %4699 = vrot.lane.b32.xlu0 %v4675, 57
        %v4700 = vpop.permute.xlu0 %4699
        %4701 = vrot.lane.b32.xlu0 %v4676, 57
        %v4702 = vpop.permute.xlu0 %4701
        %4703 = vrot.lane.b32.xlu0 %v4677, 57
        %v4704 = vpop.permute.xlu0 %4703
        %4705 = vrot.lane.b32.xlu0 %v4678, 57
        %v4706 = vpop.permute.xlu0 %4705
        %4707 = vrot.lane.b32.xlu0 %v4679, 57
        %v4708 = vpop.permute.xlu0 %4707
        %4709 = vrot.lane.b32.xlu0 %v4680, 57
        %v4710 = vpop.permute.xlu0 %4709
        %4711 = vrot.lane.b32.xlu0 %v4681, 57
        %v4712 = vpop.permute.xlu0 %4711
        %4713 = vrot.lane.b32.xlu0 %v4682, 57
        %v4714 = vpop.permute.xlu0 %4713
        %v4747 = vunpack.c.l.b16 %v3787
        %v4748 = vunpack.c.l.b16 %v3788
        %v4749 = vunpack.c.l.b16 %v3789
        %v4750 = vunpack.c.l.b16 %v3790
        %v4751 = vunpack.c.l.b16 %v3791
        %v4752 = vunpack.c.l.b16 %v3792
        %v4753 = vunpack.c.l.b16 %v3793
        %v4754 = vunpack.c.l.b16 %v3794
        %v4755 = vunpack.c.l.b16 %v3795
        %v4756 = vunpack.c.l.b16 %v3796
        %v4757 = vunpack.c.l.b16 %v3797
        %v4758 = vunpack.c.l.b16 %v3798
        %v4759 = vunpack.c.l.b16 %v3799
        %v4760 = vunpack.c.l.b16 %v3800
        %v4761 = vunpack.c.l.b16 %v3801
        %v4762 = vunpack.c.l.b16 %v3802
        %v4763 = vunpack.c.l.b16 %v3803
        %v4764 = vunpack.c.l.b16 %v3804
        %v4765 = vunpack.c.l.b16 %v3805
        %v4766 = vunpack.c.l.b16 %v3806
        %v4767 = vunpack.c.l.b16 %v3807
        %v4768 = vunpack.c.l.b16 %v3808
        %v4769 = vunpack.c.l.b16 %v3809
        %v4770 = vunpack.c.l.b16 %v3810
        %v4771 = vunpack.c.l.b16 %v3811
        %v4772 = vunpack.c.l.b16 %v3812
        %v4773 = vunpack.c.l.b16 %v3813
        %v4774 = vunpack.c.l.b16 %v3814
        %v4775 = vunpack.c.l.b16 %v3815
        %v4776 = vunpack.c.l.b16 %v3816
        %v4777 = vunpack.c.l.b16 %v3817
        %v4778 = vunpack.c.l.b16 %v3818
        %v4779 = vpack.c.b16 %v4748, %v4747
        %v4780 = vpack.c.b16 %v4750, %v4749
        %v4781 = vpack.c.b16 %v4752, %v4751
        %v4782 = vpack.c.b16 %v4754, %v4753
        %v4783 = vpack.c.b16 %v4756, %v4755
        %v4784 = vpack.c.b16 %v4758, %v4757
        %v4785 = vpack.c.b16 %v4760, %v4759
        %v4786 = vpack.c.b16 %v4762, %v4761
        %v4787 = vpack.c.b16 %v4764, %v4763
        %v4788 = vpack.c.b16 %v4766, %v4765
        %v4789 = vpack.c.b16 %v4768, %v4767
        %v4790 = vpack.c.b16 %v4770, %v4769
        %v4791 = vpack.c.b16 %v4772, %v4771
        %v4792 = vpack.c.b16 %v4774, %v4773
        %v4793 = vpack.c.b16 %v4776, %v4775
        %v4794 = vpack.c.b16 %v4778, %v4777
        %4795 = vrot.lane.b32.xlu0 %v4779, 65
        %v4796 = vpop.permute.xlu0 %4795
        %4797 = vrot.lane.b32.xlu0 %v4780, 65
        %v4798 = vpop.permute.xlu0 %4797
        %4799 = vrot.lane.b32.xlu0 %v4781, 65
        %v4800 = vpop.permute.xlu0 %4799
        %4801 = vrot.lane.b32.xlu0 %v4782, 65
        %v4802 = vpop.permute.xlu0 %4801
        %4803 = vrot.lane.b32.xlu0 %v4783, 65
        %v4804 = vpop.permute.xlu0 %4803
        %4805 = vrot.lane.b32.xlu0 %v4784, 65
        %v4806 = vpop.permute.xlu0 %4805
        %4807 = vrot.lane.b32.xlu0 %v4785, 65
        %v4808 = vpop.permute.xlu0 %4807
        %4809 = vrot.lane.b32.xlu0 %v4786, 65
        %v4810 = vpop.permute.xlu0 %4809
        %4811 = vrot.lane.b32.xlu0 %v4787, 65
        %v4812 = vpop.permute.xlu0 %4811
        %4813 = vrot.lane.b32.xlu0 %v4788, 65
        %v4814 = vpop.permute.xlu0 %4813
        %4815 = vrot.lane.b32.xlu0 %v4789, 65
        %v4816 = vpop.permute.xlu0 %4815
        %4817 = vrot.lane.b32.xlu0 %v4790, 65
        %v4818 = vpop.permute.xlu0 %4817
        %4819 = vrot.lane.b32.xlu0 %v4791, 65
        %v4820 = vpop.permute.xlu0 %4819
        %4821 = vrot.lane.b32.xlu0 %v4792, 65
        %v4822 = vpop.permute.xlu0 %4821
        %4823 = vrot.lane.b32.xlu0 %v4793, 65
        %v4824 = vpop.permute.xlu0 %4823
        %4825 = vrot.lane.b32.xlu0 %v4794, 65
        %v4826 = vpop.permute.xlu0 %4825
        %vm4827 = vcmask 7168
        %v4830 = vsel %vm4827, 1065369472, %v3900
        %v4832 = vsel %vm4827, 1065369472, %v3902
        %v4834 = vsel %vm4827, 1065369472, %v3904
        %v4836 = vsel %vm4827, 1065369472, %v3906
        %v4838 = vsel %vm4827, 1065369472, %v3908
        %v4840 = vsel %vm4827, 1065369472, %v3910
        %v4842 = vsel %vm4827, 1065369472, %v3912
        %v4844 = vsel %vm4827, 1065369472, %v3914
        %v4846 = vsel %vm4827, 1065369472, %v3916
        %v4848 = vsel %vm4827, 1065369472, %v3918
        %v4850 = vsel %vm4827, 1065369472, %v3920
        %v4852 = vsel %vm4827, 1065369472, %v3922
        %v4854 = vsel %vm4827, 1065369472, %v3924
        %v4856 = vsel %vm4827, 1065369472, %v3926
        %v4858 = vsel %vm4827, 1065369472, %v3928
        %v4860 = vsel %vm4827, 1065369472, %v3930
        %vm4861 = vcmask 72704
        %v4863 = vsel %vm4861, %v4830, %v4012
        %v4865 = vsel %vm4861, %v4832, %v4014
        %v4867 = vsel %vm4861, %v4834, %v4016
        %v4869 = vsel %vm4861, %v4836, %v4018
        %v4871 = vsel %vm4861, %v4838, %v4020
        %v4873 = vsel %vm4861, %v4840, %v4022
        %v4875 = vsel %vm4861, %v4842, %v4024
        %v4877 = vsel %vm4861, %v4844, %v4026
        %v4879 = vsel %vm4861, %v4846, %v4028
        %v4881 = vsel %vm4861, %v4848, %v4030
        %v4883 = vsel %vm4861, %v4850, %v4032
        %v4885 = vsel %vm4861, %v4852, %v4034
        %v4887 = vsel %vm4861, %v4854, %v4036
        %v4889 = vsel %vm4861, %v4856, %v4038
        %v4891 = vsel %vm4861, %v4858, %v4040
        %v4893 = vsel %vm4861, %v4860, %v4042
        %vm4894 = vcmask 138240
        %v4896 = vsel %vm4894, %v4863, %v4124
        %v4898 = vsel %vm4894, %v4865, %v4126
        %v4900 = vsel %vm4894, %v4867, %v4128
        %v4902 = vsel %vm4894, %v4869, %v4130
        %v4904 = vsel %vm4894, %v4871, %v4132
        %v4906 = vsel %vm4894, %v4873, %v4134
        %v4908 = vsel %vm4894, %v4875, %v4136
        %v4910 = vsel %vm4894, %v4877, %v4138
        %v4912 = vsel %vm4894, %v4879, %v4140
        %v4914 = vsel %vm4894, %v4881, %v4142
        %v4916 = vsel %vm4894, %v4883, %v4144
        %v4918 = vsel %vm4894, %v4885, %v4146
        %v4920 = vsel %vm4894, %v4887, %v4148
        %v4922 = vsel %vm4894, %v4889, %v4150
        %v4924 = vsel %vm4894, %v4891, %v4152
        %v4926 = vsel %vm4894, %v4893, %v4154
        %vm4927 = vcmask 203776
        %v4929 = vsel %vm4927, %v4896, %v4236
        %v4931 = vsel %vm4927, %v4898, %v4238
        %v4933 = vsel %vm4927, %v4900, %v4240
        %v4935 = vsel %vm4927, %v4902, %v4242
        %v4937 = vsel %vm4927, %v4904, %v4244
        %v4939 = vsel %vm4927, %v4906, %v4246
        %v4941 = vsel %vm4927, %v4908, %v4248
        %v4943 = vsel %vm4927, %v4910, %v4250
        %v4945 = vsel %vm4927, %v4912, %v4252
        %v4947 = vsel %vm4927, %v4914, %v4254
        %v4949 = vsel %vm4927, %v4916, %v4256
        %v4951 = vsel %vm4927, %v4918, %v4258
        %v4953 = vsel %vm4927, %v4920, %v4260
        %v4955 = vsel %vm4927, %v4922, %v4262
        %v4957 = vsel %vm4927, %v4924, %v4264
        %v4959 = vsel %vm4927, %v4926, %v4266
        %vm4960 = vcmask 269312
        %v4962 = vsel %vm4960, %v4929, %v4348
        %v4964 = vsel %vm4960, %v4931, %v4350
        %v4966 = vsel %vm4960, %v4933, %v4352
        %v4968 = vsel %vm4960, %v4935, %v4354
        %v4970 = vsel %vm4960, %v4937, %v4356
        %v4972 = vsel %vm4960, %v4939, %v4358
        %v4974 = vsel %vm4960, %v4941, %v4360
        %v4976 = vsel %vm4960, %v4943, %v4362
        %v4978 = vsel %vm4960, %v4945, %v4364
        %v4980 = vsel %vm4960, %v4947, %v4366
        %v4982 = vsel %vm4960, %v4949, %v4368
        %v4984 = vsel %vm4960, %v4951, %v4370
        %v4986 = vsel %vm4960, %v4953, %v4372
        %v4988 = vsel %vm4960, %v4955, %v4374
        %v4990 = vsel %vm4960, %v4957, %v4376
        %v4992 = vsel %vm4960, %v4959, %v4378
        %vm4993 = vcmask 334848
        %v4995 = vsel %vm4993, %v4962, %v4460
        %v4997 = vsel %vm4993, %v4964, %v4462
        %v4999 = vsel %vm4993, %v4966, %v4464
        %v5001 = vsel %vm4993, %v4968, %v4466
        %v5003 = vsel %vm4993, %v4970, %v4468
        %v5005 = vsel %vm4993, %v4972, %v4470
        %v5007 = vsel %vm4993, %v4974, %v4472
        %v5009 = vsel %vm4993, %v4976, %v4474
        %v5011 = vsel %vm4993, %v4978, %v4476
        %v5013 = vsel %vm4993, %v4980, %v4478
        %v5015 = vsel %vm4993, %v4982, %v4480
        %v5017 = vsel %vm4993, %v4984, %v4482
        %v5019 = vsel %vm4993, %v4986, %v4484
        %v5021 = vsel %vm4993, %v4988, %v4486
        %v5023 = vsel %vm4993, %v4990, %v4488
        %v5025 = vsel %vm4993, %v4992, %v4490
        %vm5026 = vcmask 400384
        %v5028 = vsel %vm5026, %v4995, %v4572
        %v5030 = vsel %vm5026, %v4997, %v4574
        %v5032 = vsel %vm5026, %v4999, %v4576
        %v5034 = vsel %vm5026, %v5001, %v4578
        %v5036 = vsel %vm5026, %v5003, %v4580
        %v5038 = vsel %vm5026, %v5005, %v4582
        %v5040 = vsel %vm5026, %v5007, %v4584
        %v5042 = vsel %vm5026, %v5009, %v4586
        %v5044 = vsel %vm5026, %v5011, %v4588
        %v5046 = vsel %vm5026, %v5013, %v4590
        %v5048 = vsel %vm5026, %v5015, %v4592
        %v5050 = vsel %vm5026, %v5017, %v4594
        %v5052 = vsel %vm5026, %v5019, %v4596
        %v5054 = vsel %vm5026, %v5021, %v4598
        %v5056 = vsel %vm5026, %v5023, %v4600
        %v5058 = vsel %vm5026, %v5025, %v4602
        %vm5059 = vcmask 465920
        %v5061 = vsel %vm5059, %v5028, %v4684
        %v5063 = vsel %vm5059, %v5030, %v4686
        %v5065 = vsel %vm5059, %v5032, %v4688
        %v5067 = vsel %vm5059, %v5034, %v4690
        %v5069 = vsel %vm5059, %v5036, %v4692
        %v5071 = vsel %vm5059, %v5038, %v4694
        %v5073 = vsel %vm5059, %v5040, %v4696
        %v5075 = vsel %vm5059, %v5042, %v4698
        %v5077 = vsel %vm5059, %v5044, %v4700
        %v5079 = vsel %vm5059, %v5046, %v4702
        %v5081 = vsel %vm5059, %v5048, %v4704
        %v5083 = vsel %vm5059, %v5050, %v4706
        %v5085 = vsel %vm5059, %v5052, %v4708
        %v5087 = vsel %vm5059, %v5054, %v4710
        %v5089 = vsel %vm5059, %v5056, %v4712
        %v5091 = vsel %vm5059, %v5058, %v4714
        %vm5092 = vcmask 531456
        %v5094 = vsel %vm5092, %v5061, %v4796
        %v5096 = vsel %vm5092, %v5063, %v4798
        %v5098 = vsel %vm5092, %v5065, %v4800
        %v5100 = vsel %vm5092, %v5067, %v4802
        %v5102 = vsel %vm5092, %v5069, %v4804
        %v5104 = vsel %vm5092, %v5071, %v4806
        %v5106 = vsel %vm5092, %v5073, %v4808
        %v5108 = vsel %vm5092, %v5075, %v4810
        %v5110 = vsel %vm5092, %v5077, %v4812
        %v5112 = vsel %vm5092, %v5079, %v4814
        %v5114 = vsel %vm5092, %v5081, %v4816
        %v5116 = vsel %vm5092, %v5083, %v4818
        %v5118 = vsel %vm5092, %v5085, %v4820
        %v5120 = vsel %vm5092, %v5087, %v4822
        %v5122 = vsel %vm5092, %v5089, %v4824
        %v5124 = vsel %vm5092, %v5091, %v4826
        %v5125 = vld [vmem:[%s3] sm:$0xff]
        %v5126 = vld [vmem:[%s3 + $0x8] sm:$0xff]
        %v5127 = vld [vmem:[%s3 + $0x10] sm:$0xff]
        %v5128 = vld [vmem:[%s3 + $0x18] sm:$0xff]
        %v5129 = vld [vmem:[%s3 + $0x20] sm:$0xff]
        %v5130 = vld [vmem:[%s3 + $0x28] sm:$0xff]
        %v5131 = vld [vmem:[%s3 + $0x30] sm:$0xff]
        %v5132 = vld [vmem:[%s3 + $0x38] sm:$0xff]
        %v5133 = vld [vmem:[%s3 + $0x40] sm:$0xff]
        %v5134 = vld [vmem:[%s3 + $0x48] sm:$0x11]
        %v5145 = vunpack.c.l.b16 %v5125
        %v5146 = vunpack.c.h.b16 %v5125
        %v5147 = vunpack.c.l.b16 %v5126
        %v5148 = vunpack.c.h.b16 %v5126
        %v5149 = vunpack.c.l.b16 %v5127
        %v5150 = vunpack.c.h.b16 %v5127
        %v5151 = vunpack.c.l.b16 %v5128
        %v5152 = vunpack.c.h.b16 %v5128
        %v5153 = vunpack.c.l.b16 %v5129
        %v5154 = vunpack.c.h.b16 %v5129
        %v5155 = vunpack.c.l.b16 %v5130
        %v5156 = vunpack.c.h.b16 %v5130
        %v5157 = vunpack.c.l.b16 %v5131
        %v5158 = vunpack.c.h.b16 %v5131
        %v5159 = vunpack.c.l.b16 %v5132
        %v5160 = vunpack.c.h.b16 %v5132
        %v5161 = vunpack.c.l.b16 %v5133
        %v5162 = vunpack.c.h.b16 %v5133
        %v5163 = vunpack.c.l.b16 %v5134
        %v5164 = vunpack.c.h.b16 %v5134
        %v5165 = vpack.c.b16 %v5147, %v5145
        %v5166 = vpack.c.b16 %v5148, %v5146
        %v5167 = vpack.c.b16 %v5151, %v5149
        %v5168 = vpack.c.b16 %v5152, %v5150
        %v5169 = vpack.c.b16 %v5155, %v5153
        %v5170 = vpack.c.b16 %v5156, %v5154
        %v5171 = vpack.c.b16 %v5159, %v5157
        %v5172 = vpack.c.b16 %v5160, %v5158
        %v5173 = vpack.c.b16 %v5163, %v5161
        %v5174 = vpack.c.b16 %v5164, %v5162
        %vm5183 = vcmask 596992
        %v5184 = vsel %vm5183, %v5094, 0
        %v5186 = vsel %vm5183, %v5096, 0
        %v5188 = vsel %vm5183, %v5098, 0
        %v5190 = vsel %vm5183, %v5100, 0
        %v5192 = vsel %vm5183, %v5102, 0
        %v5194 = vsel %vm5183, %v5104, 0
        %v5196 = vsel %vm5183, %v5106, 0
        %v5198 = vsel %vm5183, %v5108, 0
        %v5200 = vsel %vm5183, %v5110, 0
        %v5202 = vsel %vm5183, %v5112, 0
        %v5204 = vsel %vm5183, %v5114, 0
        %v5206 = vsel %vm5183, %v5116, 0
        %v5208 = vsel %vm5183, %v5118, 0
        %v5210 = vsel %vm5183, %v5120, 0
        %v5212 = vsel %vm5183, %v5122, 0
        %v5214 = vsel %vm5183, %v5124, 0
        %vm5216 = vcmask 1043456
        %vm5217 = vcmask 1044480
        %v5218 = vsel %vm5216, 4294967295, 65535
        %v5219 = vsel %vm5217, %v5218, 0
        %v5221 = vand.u32 %v5173, %v5219
        %v5224 = vand.u32 %v5174, %v5219
        %5226 = vmatprep.subr.bf16.mxu0 %v5166
        %5227 = vmatpush1.bf16.msra.mxu0 %v5165
        %5228 = vmatprep.subr.bf16.mxu0 %v5168
        %5229 = vmatpush1.bf16.msra.mxu0 %v5167
        %5230 = vmatprep.subr.bf16.mxu0 %v5170
        %5231 = vmatpush1.bf16.msra.mxu0 %v5169
        %5232 = vmatprep.subr.bf16.mxu0 %v5172
        %5233 = vmatpush1.bf16.msra.mxu0 %v5171
        %5234 = vmatprep.subr.bf16.mxu0 %v5224
        %5235 = vmatpush1.bf16.msra.mxu0 %v5221
        %5236 = vmatprep.subr.bf16.mxu0 0
        %5237 = vmatpush1.bf16.msra.mxu0 0
        %5238 = vmatprep.subr.bf16.mxu0 0
        %5239 = vmatpush1.bf16.msra.mxu0 0
        %5240 = vmatprep.subr.bf16.mxu0 0
        %5241 = vmatpush1.bf16.msra.mxu0 0
        %5242 = vmatprep.subr.bf16.mxu0 0
        %5243 = vmatpush1.bf16.msra.mxu0 0
        %5244 = vmatprep.subr.bf16.mxu0 0
        %5245 = vmatpush1.bf16.msra.mxu0 0
        %5246 = vmatprep.subr.bf16.mxu0 0
        %5247 = vmatpush1.bf16.msra.mxu0 0
        %5248 = vmatprep.subr.bf16.mxu0 0
        %5249 = vmatpush1.bf16.msra.mxu0 0
        %5250 = vmatprep.subr.bf16.mxu0 0
        %5251 = vmatpush1.bf16.msra.mxu0 0
        %5252 = vmatprep.subr.bf16.mxu0 0
        %5253 = vmatpush1.bf16.msra.mxu0 0
        %5254 = vmatprep.subr.bf16.mxu0 0
        %5255 = vmatpush1.bf16.msra.mxu0 0
        %5256 = vmatprep.subr.bf16.mxu0 0
        %5257 = vmatpush1.bf16.msra.mxu0 0
        %5258 = vmatprep.mubr.bf16.mxu0 0
        %5259 = vmatmul.mubr.bf16.gmra.mrb[0].mxu0 %v5184
        %v5260 = vpop.f32.mrb[0].mxu0
        %v5261 = vadd.f32 0.0, %v5260
        %v5262 = vpop.f32.mrb[0].mxu0
        %v5263 = vadd.f32 0.0, %v5262
        %v5264 = vpop.f32.mrb[0].mxu0
        %v5265 = vadd.f32 0.0, %v5264
        %v5266 = vpop.f32.mrb[0].mxu0
        %v5267 = vadd.f32 0.0, %v5266
        %5268 = vmatprep.mubr.bf16.mxu0 0
        %5269 = vmatmul.mubr.bf16.gmra.mrb[0].mxu0 %v5186
        %v5270 = vpop.f32.mrb[0].mxu0
        %v5271 = vadd.f32 0.0, %v5270
        %v5272 = vpop.f32.mrb[0].mxu0
        %v5273 = vadd.f32 0.0, %v5272
        %v5274 = vpop.f32.mrb[0].mxu0
        %v5275 = vadd.f32 0.0, %v5274
        %v5276 = vpop.f32.mrb[0].mxu0
        %v5277 = vadd.f32 0.0, %v5276
        %5278 = vmatprep.mubr.bf16.mxu0 0
        %5279 = vmatmul.mubr.bf16.gmra.mrb[0].mxu0 %v5188
        %v5280 = vpop.f32.mrb[0].mxu0
        %v5281 = vadd.f32 0.0, %v5280
        %v5282 = vpop.f32.mrb[0].mxu0
        %v5283 = vadd.f32 0.0, %v5282
        %v5284 = vpop.f32.mrb[0].mxu0
        %v5285 = vadd.f32 0.0, %v5284
        %v5286 = vpop.f32.mrb[0].mxu0
        %v5287 = vadd.f32 0.0, %v5286
        %5288 = vmatprep.mubr.bf16.mxu0 0
        %5289 = vmatmul.mubr.bf16.gmra.mrb[0].mxu0 %v5190
        %v5290 = vpop.f32.mrb[0].mxu0
        %v5291 = vadd.f32 0.0, %v5290
        %v5292 = vpop.f32.mrb[0].mxu0
        %v5293 = vadd.f32 0.0, %v5292
        %v5294 = vpop.f32.mrb[0].mxu0
        %v5295 = vadd.f32 0.0, %v5294
        %v5296 = vpop.f32.mrb[0].mxu0
        %v5297 = vadd.f32 0.0, %v5296
        %5298 = vmatprep.mubr.bf16.mxu0 0
        %5299 = vmatmul.mubr.bf16.gmra.mrb[0].mxu0 %v5192
        %v5300 = vpop.f32.mrb[0].mxu0
        %v5301 = vadd.f32 0.0, %v5300
        %v5302 = vpop.f32.mrb[0].mxu0
        %v5303 = vadd.f32 0.0, %v5302
        %v5304 = vpop.f32.mrb[0].mxu0
        %v5305 = vadd.f32 0.0, %v5304
        %v5306 = vpop.f32.mrb[0].mxu0
        %v5307 = vadd.f32 0.0, %v5306
        %5308 = vmatprep.mubr.bf16.mxu0 0
        %5309 = vmatmul.mubr.bf16.gmra.mrb[0].mxu0 %v5194
        %v5310 = vpop.f32.mrb[0].mxu0
        %v5311 = vadd.f32 0.0, %v5310
        %v5312 = vpop.f32.mrb[0].mxu0
        %v5313 = vadd.f32 0.0, %v5312
        %v5314 = vpop.f32.mrb[0].mxu0
        %v5315 = vadd.f32 0.0, %v5314
        %v5316 = vpop.f32.mrb[0].mxu0
        %v5317 = vadd.f32 0.0, %v5316
        %5318 = vmatprep.mubr.bf16.mxu0 0
        %5319 = vmatmul.mubr.bf16.gmra.mrb[0].mxu0 %v5196
        %v5320 = vpop.f32.mrb[0].mxu0
        %v5321 = vadd.f32 0.0, %v5320
        %v5322 = vpop.f32.mrb[0].mxu0
        %v5323 = vadd.f32 0.0, %v5322
        %v5324 = vpop.f32.mrb[0].mxu0
        %v5325 = vadd.f32 0.0, %v5324
        %v5326 = vpop.f32.mrb[0].mxu0
        %v5327 = vadd.f32 0.0, %v5326
        %5328 = vmatprep.mubr.bf16.mxu0 0
        %5329 = vmatmul.mubr.bf16.gmra.mrb[0].mxu0 %v5198
        %v5330 = vpop.f32.mrb[0].mxu0
        %v5331 = vadd.f32 0.0, %v5330
        %v5332 = vpop.f32.mrb[0].mxu0
        %v5333 = vadd.f32 0.0, %v5332
        %v5334 = vpop.f32.mrb[0].mxu0
        %v5335 = vadd.f32 0.0, %v5334
        %v5336 = vpop.f32.mrb[0].mxu0
        %v5337 = vadd.f32 0.0, %v5336
        %5338 = vmatprep.mubr.bf16.mxu0 0
        %5339 = vmatmul.mubr.bf16.gmra.mrb[0].mxu0 %v5200
        %v5340 = vpop.f32.mrb[0].mxu0
        %v5341 = vadd.f32 0.0, %v5340
        %v5342 = vpop.f32.mrb[0].mxu0
        %v5343 = vadd.f32 0.0, %v5342
        %v5344 = vpop.f32.mrb[0].mxu0
        %v5345 = vadd.f32 0.0, %v5344
        %v5346 = vpop.f32.mrb[0].mxu0
        %v5347 = vadd.f32 0.0, %v5346
        %5348 = vmatprep.mubr.bf16.mxu0 0
        %5349 = vmatmul.mubr.bf16.gmra.mrb[0].mxu0 %v5202
        %v5350 = vpop.f32.mrb[0].mxu0
        %v5351 = vadd.f32 0.0, %v5350
        %v5352 = vpop.f32.mrb[0].mxu0
        %v5353 = vadd.f32 0.0, %v5352
        %v5354 = vpop.f32.mrb[0].mxu0
        %v5355 = vadd.f32 0.0, %v5354
        %v5356 = vpop.f32.mrb[0].mxu0
        %v5357 = vadd.f32 0.0, %v5356
        %5358 = vmatprep.mubr.bf16.mxu0 0
        %5359 = vmatmul.mubr.bf16.gmra.mrb[0].mxu0 %v5204
        %v5360 = vpop.f32.mrb[0].mxu0
        %v5361 = vadd.f32 0.0, %v5360
        %v5362 = vpop.f32.mrb[0].mxu0
        %v5363 = vadd.f32 0.0, %v5362
        %v5364 = vpop.f32.mrb[0].mxu0
        %v5365 = vadd.f32 0.0, %v5364
        %v5366 = vpop.f32.mrb[0].mxu0
        %v5367 = vadd.f32 0.0, %v5366
        %5368 = vmatprep.mubr.bf16.mxu0 0
        %5369 = vmatmul.mubr.bf16.gmra.mrb[0].mxu0 %v5206
        %v5370 = vpop.f32.mrb[0].mxu0
        %v5371 = vadd.f32 0.0, %v5370
        %v5372 = vpop.f32.mrb[0].mxu0
        %v5373 = vadd.f32 0.0, %v5372
        %v5374 = vpop.f32.mrb[0].mxu0
        %v5375 = vadd.f32 0.0, %v5374
        %v5376 = vpop.f32.mrb[0].mxu0
        %v5377 = vadd.f32 0.0, %v5376
        %5378 = vmatprep.mubr.bf16.mxu0 0
        %5379 = vmatmul.mubr.bf16.gmra.mrb[0].mxu0 %v5208
        %v5380 = vpop.f32.mrb[0].mxu0
        %v5381 = vadd.f32 0.0, %v5380
        %v5382 = vpop.f32.mrb[0].mxu0
        %v5383 = vadd.f32 0.0, %v5382
        %v5384 = vpop.f32.mrb[0].mxu0
        %v5385 = vadd.f32 0.0, %v5384
        %v5386 = vpop.f32.mrb[0].mxu0
        %v5387 = vadd.f32 0.0, %v5386
        %5388 = vmatprep.mubr.bf16.mxu0 0
        %5389 = vmatmul.mubr.bf16.gmra.mrb[0].mxu0 %v5210
        %v5390 = vpop.f32.mrb[0].mxu0
        %v5391 = vadd.f32 0.0, %v5390
        %v5392 = vpop.f32.mrb[0].mxu0
        %v5393 = vadd.f32 0.0, %v5392
        %v5394 = vpop.f32.mrb[0].mxu0
        %v5395 = vadd.f32 0.0, %v5394
        %v5396 = vpop.f32.mrb[0].mxu0
        %v5397 = vadd.f32 0.0, %v5396
        %5398 = vmatprep.mubr.bf16.mxu0 0
        %5399 = vmatmul.mubr.bf16.gmra.mrb[0].mxu0 %v5212
        %v5400 = vpop.f32.mrb[0].mxu0
        %v5401 = vadd.f32 0.0, %v5400
        %v5402 = vpop.f32.mrb[0].mxu0
        %v5403 = vadd.f32 0.0, %v5402
        %v5404 = vpop.f32.mrb[0].mxu0
        %v5405 = vadd.f32 0.0, %v5404
        %v5406 = vpop.f32.mrb[0].mxu0
        %v5407 = vadd.f32 0.0, %v5406
        %5408 = vmatprep.mubr.bf16.mxu0 0
        %5409 = vmatmul.mubr.bf16.gmra.mrb[0].mxu0 %v5214
        %v5410 = vpop.f32.mrb[0].mxu0
        %v5411 = vadd.f32 0.0, %v5410
        %v5412 = vpop.f32.mrb[0].mxu0
        %v5413 = vadd.f32 0.0, %v5412
        %v5414 = vpop.f32.mrb[0].mxu0
        %v5415 = vadd.f32 0.0, %v5414
        %v5416 = vpop.f32.mrb[0].mxu0
        %v5417 = vadd.f32 0.0, %v5416
        %5418 = vdwg.mxu0
        %5420 = vset.pattern.permute.xlu0 0
        %5421 = vperm.xlu0 %5420, %v589
        %v5422 = vpop.permute.xlu0 %5421
        %5425 = vset.pattern.permute.xlu0 0
        %5426 = vperm.xlu0 %5425, %v592
        %v5427 = vpop.permute.xlu0 %5426
        %5430 = vset.pattern.permute.xlu0 0
        %5431 = vperm.xlu0 %5430, %v597
        %v5432 = vpop.permute.xlu0 %5431
        %5435 = vset.pattern.permute.xlu0 0
        %5436 = vperm.xlu0 %5435, %v600
        %v5437 = vpop.permute.xlu0 %5436
        %5440 = vset.pattern.permute.xlu0 0
        %5441 = vperm.xlu0 %5440, %v605
        %v5442 = vpop.permute.xlu0 %5441
        %5445 = vset.pattern.permute.xlu0 0
        %5446 = vperm.xlu0 %5445, %v608
        %v5447 = vpop.permute.xlu0 %5446
        %5450 = vset.pattern.permute.xlu0 0
        %5451 = vperm.xlu0 %5450, %v613
        %v5452 = vpop.permute.xlu0 %5451
        %5455 = vset.pattern.permute.xlu0 0
        %5456 = vperm.xlu0 %5455, %v616
        %v5457 = vpop.permute.xlu0 %5456
        %5460 = vset.pattern.permute.xlu0 0
        %5461 = vperm.xlu0 %5460, %v621
        %v5462 = vpop.permute.xlu0 %5461
        %5465 = vset.pattern.permute.xlu0 0
        %5466 = vperm.xlu0 %5465, %v624
        %v5467 = vpop.permute.xlu0 %5466
        %5470 = vset.pattern.permute.xlu0 0
        %5471 = vperm.xlu0 %5470, %v629
        %v5472 = vpop.permute.xlu0 %5471
        %5475 = vset.pattern.permute.xlu0 0
        %5476 = vperm.xlu0 %5475, %v632
        %v5477 = vpop.permute.xlu0 %5476
        %5480 = vset.pattern.permute.xlu0 0
        %5481 = vperm.xlu0 %5480, %v637
        %v5482 = vpop.permute.xlu0 %5481
        %5485 = vset.pattern.permute.xlu0 0
        %5486 = vperm.xlu0 %5485, %v640
        %v5487 = vpop.permute.xlu0 %5486
        %5490 = vset.pattern.permute.xlu0 0
        %5491 = vperm.xlu0 %5490, %v645
        %v5492 = vpop.permute.xlu0 %5491
        %5495 = vset.pattern.permute.xlu0 0
        %5496 = vperm.xlu0 %5495, %v648
        %v5497 = vpop.permute.xlu0 %5496
        %5500 = vset.pattern.permute.xlu0 0
        %5501 = vperm.xlu0 %5500, %v653
        %v5502 = vpop.permute.xlu0 %5501
        %5505 = vset.pattern.permute.xlu0 0
        %5506 = vperm.xlu0 %5505, %v656
        %v5507 = vpop.permute.xlu0 %5506
        %5510 = vset.pattern.permute.xlu0 0
        %5511 = vperm.xlu0 %5510, %v661
        %v5512 = vpop.permute.xlu0 %5511
        %5515 = vset.pattern.permute.xlu0 0
        %5516 = vperm.xlu0 %5515, %v664
        %v5517 = vpop.permute.xlu0 %5516
        %5520 = vset.pattern.permute.xlu0 0
        %5521 = vperm.xlu0 %5520, %v669
        %v5522 = vpop.permute.xlu0 %5521
        %5525 = vset.pattern.permute.xlu0 0
        %5526 = vperm.xlu0 %5525, %v672
        %v5527 = vpop.permute.xlu0 %5526
        %5530 = vset.pattern.permute.xlu0 0
        %5531 = vperm.xlu0 %5530, %v677
        %v5532 = vpop.permute.xlu0 %5531
        %5535 = vset.pattern.permute.xlu0 0
        %5536 = vperm.xlu0 %5535, %v680
        %v5537 = vpop.permute.xlu0 %5536
        %5540 = vset.pattern.permute.xlu0 0
        %5541 = vperm.xlu0 %5540, %v685
        %v5542 = vpop.permute.xlu0 %5541
        %5545 = vset.pattern.permute.xlu0 0
        %5546 = vperm.xlu0 %5545, %v688
        %v5547 = vpop.permute.xlu0 %5546
        %5550 = vset.pattern.permute.xlu0 0
        %5551 = vperm.xlu0 %5550, %v693
        %v5552 = vpop.permute.xlu0 %5551
        %5555 = vset.pattern.permute.xlu0 0
        %5556 = vperm.xlu0 %5555, %v696
        %v5557 = vpop.permute.xlu0 %5556
        %5560 = vset.pattern.permute.xlu0 0
        %5561 = vperm.xlu0 %5560, %v701
        %v5562 = vpop.permute.xlu0 %5561
        %5565 = vset.pattern.permute.xlu0 0
        %5566 = vperm.xlu0 %5565, %v704
        %v5567 = vpop.permute.xlu0 %5566
        %5570 = vset.pattern.permute.xlu0 0
        %5571 = vperm.xlu0 %5570, %v709
        %v5572 = vpop.permute.xlu0 %5571
        %5575 = vset.pattern.permute.xlu0 0
        %5576 = vperm.xlu0 %5575, %v712
        %v5577 = vpop.permute.xlu0 %5576
        %v5579 = vmul.f32 %v5422, %v5261
        %v5580 = vmul.f32 %v5427, %v5265
        %v5581 = vmul.f32 %v5432, %v5271
        %v5582 = vmul.f32 %v5437, %v5275
        %v5583 = vmul.f32 %v5442, %v5281
        %v5584 = vmul.f32 %v5447, %v5285
        %v5585 = vmul.f32 %v5452, %v5291
        %v5586 = vmul.f32 %v5457, %v5295
        %v5587 = vmul.f32 %v5462, %v5301
        %v5588 = vmul.f32 %v5467, %v5305
        %v5589 = vmul.f32 %v5472, %v5311
        %v5590 = vmul.f32 %v5477, %v5315
        %v5591 = vmul.f32 %v5482, %v5321
        %v5592 = vmul.f32 %v5487, %v5325
        %v5593 = vmul.f32 %v5492, %v5331
        %v5594 = vmul.f32 %v5497, %v5335
        %v5595 = vmul.f32 %v5502, %v5341
        %v5596 = vmul.f32 %v5507, %v5345
        %v5597 = vmul.f32 %v5512, %v5351
        %v5598 = vmul.f32 %v5517, %v5355
        %v5599 = vmul.f32 %v5522, %v5361
        %v5600 = vmul.f32 %v5527, %v5365
        %v5601 = vmul.f32 %v5532, %v5371
        %v5602 = vmul.f32 %v5537, %v5375
        %v5603 = vmul.f32 %v5542, %v5381
        %v5604 = vmul.f32 %v5547, %v5385
        %v5605 = vmul.f32 %v5552, %v5391
        %v5606 = vmul.f32 %v5557, %v5395
        %v5607 = vmul.f32 %v5562, %v5401
        %v5608 = vmul.f32 %v5567, %v5405
        %v5609 = vmul.f32 %v5572, %v5411
        %v5610 = vmul.f32 %v5577, %v5415
        %5611 = vset.pattern.permute.xlu0 1
        %5612 = vperm.xlu0 %5611, %v589
        %v5613 = vpop.permute.xlu0 %5612
        %5615 = vset.pattern.permute.xlu0 1
        %5616 = vperm.xlu0 %5615, %v592
        %v5617 = vpop.permute.xlu0 %5616
        %5619 = vset.pattern.permute.xlu0 1
        %5620 = vperm.xlu0 %5619, %v597
        %v5621 = vpop.permute.xlu0 %5620
        %5623 = vset.pattern.permute.xlu0 1
        %5624 = vperm.xlu0 %5623, %v600
        %v5625 = vpop.permute.xlu0 %5624
        %5627 = vset.pattern.permute.xlu0 1
        %5628 = vperm.xlu0 %5627, %v605
        %v5629 = vpop.permute.xlu0 %5628
        %5631 = vset.pattern.permute.xlu0 1
        %5632 = vperm.xlu0 %5631, %v608
        %v5633 = vpop.permute.xlu0 %5632
        %5635 = vset.pattern.permute.xlu0 1
        %5636 = vperm.xlu0 %5635, %v613
        %v5637 = vpop.permute.xlu0 %5636
        %5639 = vset.pattern.permute.xlu0 1
        %5640 = vperm.xlu0 %5639, %v616
        %v5641 = vpop.permute.xlu0 %5640
        %5643 = vset.pattern.permute.xlu0 1
        %5644 = vperm.xlu0 %5643, %v621
        %v5645 = vpop.permute.xlu0 %5644
        %5647 = vset.pattern.permute.xlu0 1
        %5648 = vperm.xlu0 %5647, %v624
        %v5649 = vpop.permute.xlu0 %5648
        %5651 = vset.pattern.permute.xlu0 1
        %5652 = vperm.xlu0 %5651, %v629
        %v5653 = vpop.permute.xlu0 %5652
        %5655 = vset.pattern.permute.xlu0 1
        %5656 = vperm.xlu0 %5655, %v632
        %v5657 = vpop.permute.xlu0 %5656
        %5659 = vset.pattern.permute.xlu0 1
        %5660 = vperm.xlu0 %5659, %v637
        %v5661 = vpop.permute.xlu0 %5660
        %5663 = vset.pattern.permute.xlu0 1
        %5664 = vperm.xlu0 %5663, %v640
        %v5665 = vpop.permute.xlu0 %5664
        %5667 = vset.pattern.permute.xlu0 1
        %5668 = vperm.xlu0 %5667, %v645
        %v5669 = vpop.permute.xlu0 %5668
        %5671 = vset.pattern.permute.xlu0 1
        %5672 = vperm.xlu0 %5671, %v648
        %v5673 = vpop.permute.xlu0 %5672
        %5675 = vset.pattern.permute.xlu0 1
        %5676 = vperm.xlu0 %5675, %v653
        %v5677 = vpop.permute.xlu0 %5676
        %5679 = vset.pattern.permute.xlu0 1
        %5680 = vperm.xlu0 %5679, %v656
        %v5681 = vpop.permute.xlu0 %5680
        %5683 = vset.pattern.permute.xlu0 1
        %5684 = vperm.xlu0 %5683, %v661
        %v5685 = vpop.permute.xlu0 %5684
        %5687 = vset.pattern.permute.xlu0 1
        %5688 = vperm.xlu0 %5687, %v664
        %v5689 = vpop.permute.xlu0 %5688
        %5691 = vset.pattern.permute.xlu0 1
        %5692 = vperm.xlu0 %5691, %v669
        %v5693 = vpop.permute.xlu0 %5692
        %5695 = vset.pattern.permute.xlu0 1
        %5696 = vperm.xlu0 %5695, %v672
        %v5697 = vpop.permute.xlu0 %5696
        %5699 = vset.pattern.permute.xlu0 1
        %5700 = vperm.xlu0 %5699, %v677
        %v5701 = vpop.permute.xlu0 %5700
        %5703 = vset.pattern.permute.xlu0 1
        %5704 = vperm.xlu0 %5703, %v680
        %v5705 = vpop.permute.xlu0 %5704
        %5707 = vset.pattern.permute.xlu0 1
        %5708 = vperm.xlu0 %5707, %v685
        %v5709 = vpop.permute.xlu0 %5708
        %5711 = vset.pattern.permute.xlu0 1
        %5712 = vperm.xlu0 %5711, %v688
        %v5713 = vpop.permute.xlu0 %5712
        %5715 = vset.pattern.permute.xlu0 1
        %5716 = vperm.xlu0 %5715, %v693
        %v5717 = vpop.permute.xlu0 %5716
        %5719 = vset.pattern.permute.xlu0 1
        %5720 = vperm.xlu0 %5719, %v696
        %v5721 = vpop.permute.xlu0 %5720
        %5723 = vset.pattern.permute.xlu0 1
        %5724 = vperm.xlu0 %5723, %v701
        %v5725 = vpop.permute.xlu0 %5724
        %5727 = vset.pattern.permute.xlu0 1
        %5728 = vperm.xlu0 %5727, %v704
        %v5729 = vpop.permute.xlu0 %5728
        %5731 = vset.pattern.permute.xlu0 1
        %5732 = vperm.xlu0 %5731, %v709
        %v5733 = vpop.permute.xlu0 %5732
        %5735 = vset.pattern.permute.xlu0 1
        %5736 = vperm.xlu0 %5735, %v712
        %v5737 = vpop.permute.xlu0 %5736
        %v5739 = vmul.f32 %v5613, %v5261
        %v5740 = vmul.f32 %v5617, %v5265
        %v5741 = vmul.f32 %v5621, %v5271
        %v5742 = vmul.f32 %v5625, %v5275
        %v5743 = vmul.f32 %v5629, %v5281
        %v5744 = vmul.f32 %v5633, %v5285
        %v5745 = vmul.f32 %v5637, %v5291
        %v5746 = vmul.f32 %v5641, %v5295
        %v5747 = vmul.f32 %v5645, %v5301
        %v5748 = vmul.f32 %v5649, %v5305
        %v5749 = vmul.f32 %v5653, %v5311
        %v5750 = vmul.f32 %v5657, %v5315
        %v5751 = vmul.f32 %v5661, %v5321
        %v5752 = vmul.f32 %v5665, %v5325
        %v5753 = vmul.f32 %v5669, %v5331
        %v5754 = vmul.f32 %v5673, %v5335
        %v5755 = vmul.f32 %v5677, %v5341
        %v5756 = vmul.f32 %v5681, %v5345
        %v5757 = vmul.f32 %v5685, %v5351
        %v5758 = vmul.f32 %v5689, %v5355
        %v5759 = vmul.f32 %v5693, %v5361
        %v5760 = vmul.f32 %v5697, %v5365
        %v5761 = vmul.f32 %v5701, %v5371
        %v5762 = vmul.f32 %v5705, %v5375
        %v5763 = vmul.f32 %v5709, %v5381
        %v5764 = vmul.f32 %v5713, %v5385
        %v5765 = vmul.f32 %v5717, %v5391
        %v5766 = vmul.f32 %v5721, %v5395
        %v5767 = vmul.f32 %v5725, %v5401
        %v5768 = vmul.f32 %v5729, %v5405
        %v5769 = vmul.f32 %v5733, %v5411
        %v5770 = vmul.f32 %v5737, %v5415
        %5771 = vset.pattern.permute.xlu0 2
        %5772 = vperm.xlu0 %5771, %v589
        %v5773 = vpop.permute.xlu0 %5772
        %5775 = vset.pattern.permute.xlu0 2
        %5776 = vperm.xlu0 %5775, %v592
        %v5777 = vpop.permute.xlu0 %5776
        %5779 = vset.pattern.permute.xlu0 2
        %5780 = vperm.xlu0 %5779, %v597
        %v5781 = vpop.permute.xlu0 %5780
        %5783 = vset.pattern.permute.xlu0 2
        %5784 = vperm.xlu0 %5783, %v600
        %v5785 = vpop.permute.xlu0 %5784
        %5787 = vset.pattern.permute.xlu0 2
        %5788 = vperm.xlu0 %5787, %v605
        %v5789 = vpop.permute.xlu0 %5788
        %5791 = vset.pattern.permute.xlu0 2
        %5792 = vperm.xlu0 %5791, %v608
        %v5793 = vpop.permute.xlu0 %5792
        %5795 = vset.pattern.permute.xlu0 2
        %5796 = vperm.xlu0 %5795, %v613
        %v5797 = vpop.permute.xlu0 %5796
        %5799 = vset.pattern.permute.xlu0 2
        %5800 = vperm.xlu0 %5799, %v616
        %v5801 = vpop.permute.xlu0 %5800
        %5803 = vset.pattern.permute.xlu0 2
        %5804 = vperm.xlu0 %5803, %v621
        %v5805 = vpop.permute.xlu0 %5804
        %5807 = vset.pattern.permute.xlu0 2
        %5808 = vperm.xlu0 %5807, %v624
        %v5809 = vpop.permute.xlu0 %5808
        %5811 = vset.pattern.permute.xlu0 2
        %5812 = vperm.xlu0 %5811, %v629
        %v5813 = vpop.permute.xlu0 %5812
        %5815 = vset.pattern.permute.xlu0 2
        %5816 = vperm.xlu0 %5815, %v632
        %v5817 = vpop.permute.xlu0 %5816
        %5819 = vset.pattern.permute.xlu0 2
        %5820 = vperm.xlu0 %5819, %v637
        %v5821 = vpop.permute.xlu0 %5820
        %5823 = vset.pattern.permute.xlu0 2
        %5824 = vperm.xlu0 %5823, %v640
        %v5825 = vpop.permute.xlu0 %5824
        %5827 = vset.pattern.permute.xlu0 2
        %5828 = vperm.xlu0 %5827, %v645
        %v5829 = vpop.permute.xlu0 %5828
        %5831 = vset.pattern.permute.xlu0 2
        %5832 = vperm.xlu0 %5831, %v648
        %v5833 = vpop.permute.xlu0 %5832
        %5835 = vset.pattern.permute.xlu0 2
        %5836 = vperm.xlu0 %5835, %v653
        %v5837 = vpop.permute.xlu0 %5836
        %5839 = vset.pattern.permute.xlu0 2
        %5840 = vperm.xlu0 %5839, %v656
        %v5841 = vpop.permute.xlu0 %5840
        %5843 = vset.pattern.permute.xlu0 2
        %5844 = vperm.xlu0 %5843, %v661
        %v5845 = vpop.permute.xlu0 %5844
        %5847 = vset.pattern.permute.xlu0 2
        %5848 = vperm.xlu0 %5847, %v664
        %v5849 = vpop.permute.xlu0 %5848
        %5851 = vset.pattern.permute.xlu0 2
        %5852 = vperm.xlu0 %5851, %v669
        %v5853 = vpop.permute.xlu0 %5852
        %5855 = vset.pattern.permute.xlu0 2
        %5856 = vperm.xlu0 %5855, %v672
        %v5857 = vpop.permute.xlu0 %5856
        %5859 = vset.pattern.permute.xlu0 2
        %5860 = vperm.xlu0 %5859, %v677
        %v5861 = vpop.permute.xlu0 %5860
        %5863 = vset.pattern.permute.xlu0 2
        %5864 = vperm.xlu0 %5863, %v680
        %v5865 = vpop.permute.xlu0 %5864
        %5867 = vset.pattern.permute.xlu0 2
        %5868 = vperm.xlu0 %5867, %v685
        %v5869 = vpop.permute.xlu0 %5868
        %5871 = vset.pattern.permute.xlu0 2
        %5872 = vperm.xlu0 %5871, %v688
        %v5873 = vpop.permute.xlu0 %5872
        %5875 = vset.pattern.permute.xlu0 2
        %5876 = vperm.xlu0 %5875, %v693
        %v5877 = vpop.permute.xlu0 %5876
        %5879 = vset.pattern.permute.xlu0 2
        %5880 = vperm.xlu0 %5879, %v696
        %v5881 = vpop.permute.xlu0 %5880
        %5883 = vset.pattern.permute.xlu0 2
        %5884 = vperm.xlu0 %5883, %v701
        %v5885 = vpop.permute.xlu0 %5884
        %5887 = vset.pattern.permute.xlu0 2
        %5888 = vperm.xlu0 %5887, %v704
        %v5889 = vpop.permute.xlu0 %5888
        %5891 = vset.pattern.permute.xlu0 2
        %5892 = vperm.xlu0 %5891, %v709
        %v5893 = vpop.permute.xlu0 %5892
        %5895 = vset.pattern.permute.xlu0 2
        %5896 = vperm.xlu0 %5895, %v712
        %v5897 = vpop.permute.xlu0 %5896
        %v5899 = vmul.f32 %v5773, %v5261
        %v5900 = vmul.f32 %v5777, %v5265
        %v5901 = vmul.f32 %v5781, %v5271
        %v5902 = vmul.f32 %v5785, %v5275
        %v5903 = vmul.f32 %v5789, %v5281
        %v5904 = vmul.f32 %v5793, %v5285
        %v5905 = vmul.f32 %v5797, %v5291
        %v5906 = vmul.f32 %v5801, %v5295
        %v5907 = vmul.f32 %v5805, %v5301
        %v5908 = vmul.f32 %v5809, %v5305
        %v5909 = vmul.f32 %v5813, %v5311
        %v5910 = vmul.f32 %v5817, %v5315
        %v5911 = vmul.f32 %v5821, %v5321
        %v5912 = vmul.f32 %v5825, %v5325
        %v5913 = vmul.f32 %v5829, %v5331
        %v5914 = vmul.f32 %v5833, %v5335
        %v5915 = vmul.f32 %v5837, %v5341
        %v5916 = vmul.f32 %v5841, %v5345
        %v5917 = vmul.f32 %v5845, %v5351
        %v5918 = vmul.f32 %v5849, %v5355
        %v5919 = vmul.f32 %v5853, %v5361
        %v5920 = vmul.f32 %v5857, %v5365
        %v5921 = vmul.f32 %v5861, %v5371
        %v5922 = vmul.f32 %v5865, %v5375
        %v5923 = vmul.f32 %v5869, %v5381
        %v5924 = vmul.f32 %v5873, %v5385
        %v5925 = vmul.f32 %v5877, %v5391
        %v5926 = vmul.f32 %v5881, %v5395
        %v5927 = vmul.f32 %v5885, %v5401
        %v5928 = vmul.f32 %v5889, %v5405
        %v5929 = vmul.f32 %v5893, %v5411
        %v5930 = vmul.f32 %v5897, %v5415
        %5931 = vset.pattern.permute.xlu0 3
        %5932 = vperm.xlu0 %5931, %v589
        %v5933 = vpop.permute.xlu0 %5932
        %5935 = vset.pattern.permute.xlu0 3
        %5936 = vperm.xlu0 %5935, %v592
        %v5937 = vpop.permute.xlu0 %5936
        %5939 = vset.pattern.permute.xlu0 3
        %5940 = vperm.xlu0 %5939, %v597
        %v5941 = vpop.permute.xlu0 %5940
        %5943 = vset.pattern.permute.xlu0 3
        %5944 = vperm.xlu0 %5943, %v600
        %v5945 = vpop.permute.xlu0 %5944
        %5947 = vset.pattern.permute.xlu0 3
        %5948 = vperm.xlu0 %5947, %v605
        %v5949 = vpop.permute.xlu0 %5948
        %5951 = vset.pattern.permute.xlu0 3
        %5952 = vperm.xlu0 %5951, %v608
        %v5953 = vpop.permute.xlu0 %5952
        %5955 = vset.pattern.permute.xlu0 3
        %5956 = vperm.xlu0 %5955, %v613
        %v5957 = vpop.permute.xlu0 %5956
        %5959 = vset.pattern.permute.xlu0 3
        %5960 = vperm.xlu0 %5959, %v616
        %v5961 = vpop.permute.xlu0 %5960
        %5963 = vset.pattern.permute.xlu0 3
        %5964 = vperm.xlu0 %5963, %v621
        %v5965 = vpop.permute.xlu0 %5964
        %5967 = vset.pattern.permute.xlu0 3
        %5968 = vperm.xlu0 %5967, %v624
        %v5969 = vpop.permute.xlu0 %5968
        %5971 = vset.pattern.permute.xlu0 3
        %5972 = vperm.xlu0 %5971, %v629
        %v5973 = vpop.permute.xlu0 %5972
        %5975 = vset.pattern.permute.xlu0 3
        %5976 = vperm.xlu0 %5975, %v632
        %v5977 = vpop.permute.xlu0 %5976
        %5979 = vset.pattern.permute.xlu0 3
        %5980 = vperm.xlu0 %5979, %v637
        %v5981 = vpop.permute.xlu0 %5980
        %5983 = vset.pattern.permute.xlu0 3
        %5984 = vperm.xlu0 %5983, %v640
        %v5985 = vpop.permute.xlu0 %5984
        %5987 = vset.pattern.permute.xlu0 3
        %5988 = vperm.xlu0 %5987, %v645
        %v5989 = vpop.permute.xlu0 %5988
        %5991 = vset.pattern.permute.xlu0 3
        %5992 = vperm.xlu0 %5991, %v648
        %v5993 = vpop.permute.xlu0 %5992
        %5995 = vset.pattern.permute.xlu0 3
        %5996 = vperm.xlu0 %5995, %v653
        %v5997 = vpop.permute.xlu0 %5996
        %5999 = vset.pattern.permute.xlu0 3
        %6000 = vperm.xlu0 %5999, %v656
        %v6001 = vpop.permute.xlu0 %6000
        %6003 = vset.pattern.permute.xlu0 3
        %6004 = vperm.xlu0 %6003, %v661
        %v6005 = vpop.permute.xlu0 %6004
        %6007 = vset.pattern.permute.xlu0 3
        %6008 = vperm.xlu0 %6007, %v664
        %v6009 = vpop.permute.xlu0 %6008
        %6011 = vset.pattern.permute.xlu0 3
        %6012 = vperm.xlu0 %6011, %v669
        %v6013 = vpop.permute.xlu0 %6012
        %6015 = vset.pattern.permute.xlu0 3
        %6016 = vperm.xlu0 %6015, %v672
        %v6017 = vpop.permute.xlu0 %6016
        %6019 = vset.pattern.permute.xlu0 3
        %6020 = vperm.xlu0 %6019, %v677
        %v6021 = vpop.permute.xlu0 %6020
        %6023 = vset.pattern.permute.xlu0 3
        %6024 = vperm.xlu0 %6023, %v680
        %v6025 = vpop.permute.xlu0 %6024
        %6027 = vset.pattern.permute.xlu0 3
        %6028 = vperm.xlu0 %6027, %v685
        %v6029 = vpop.permute.xlu0 %6028
        %6031 = vset.pattern.permute.xlu0 3
        %6032 = vperm.xlu0 %6031, %v688
        %v6033 = vpop.permute.xlu0 %6032
        %6035 = vset.pattern.permute.xlu0 3
        %6036 = vperm.xlu0 %6035, %v693
        %v6037 = vpop.permute.xlu0 %6036
        %6039 = vset.pattern.permute.xlu0 3
        %6040 = vperm.xlu0 %6039, %v696
        %v6041 = vpop.permute.xlu0 %6040
        %6043 = vset.pattern.permute.xlu0 3
        %6044 = vperm.xlu0 %6043, %v701
        %v6045 = vpop.permute.xlu0 %6044
        %6047 = vset.pattern.permute.xlu0 3
        %6048 = vperm.xlu0 %6047, %v704
        %v6049 = vpop.permute.xlu0 %6048
        %6051 = vset.pattern.permute.xlu0 3
        %6052 = vperm.xlu0 %6051, %v709
        %v6053 = vpop.permute.xlu0 %6052
        %6055 = vset.pattern.permute.xlu0 3
        %6056 = vperm.xlu0 %6055, %v712
        %v6057 = vpop.permute.xlu0 %6056
        %v6059 = vmul.f32 %v5933, %v5261
        %v6060 = vmul.f32 %v5937, %v5265
        %v6061 = vmul.f32 %v5941, %v5271
        %v6062 = vmul.f32 %v5945, %v5275
        %v6063 = vmul.f32 %v5949, %v5281
        %v6064 = vmul.f32 %v5953, %v5285
        %v6065 = vmul.f32 %v5957, %v5291
        %v6066 = vmul.f32 %v5961, %v5295
        %v6067 = vmul.f32 %v5965, %v5301
        %v6068 = vmul.f32 %v5969, %v5305
        %v6069 = vmul.f32 %v5973, %v5311
        %v6070 = vmul.f32 %v5977, %v5315
        %v6071 = vmul.f32 %v5981, %v5321
        %v6072 = vmul.f32 %v5985, %v5325
        %v6073 = vmul.f32 %v5989, %v5331
        %v6074 = vmul.f32 %v5993, %v5335
        %v6075 = vmul.f32 %v5997, %v5341
        %v6076 = vmul.f32 %v6001, %v5345
        %v6077 = vmul.f32 %v6005, %v5351
        %v6078 = vmul.f32 %v6009, %v5355
        %v6079 = vmul.f32 %v6013, %v5361
        %v6080 = vmul.f32 %v6017, %v5365
        %v6081 = vmul.f32 %v6021, %v5371
        %v6082 = vmul.f32 %v6025, %v5375
        %v6083 = vmul.f32 %v6029, %v5381
        %v6084 = vmul.f32 %v6033, %v5385
        %v6085 = vmul.f32 %v6037, %v5391
        %v6086 = vmul.f32 %v6041, %v5395
        %v6087 = vmul.f32 %v6045, %v5401
        %v6088 = vmul.f32 %v6049, %v5405
        %v6089 = vmul.f32 %v6053, %v5411
        %v6090 = vmul.f32 %v6057, %v5415
        %6091 = vset.pattern.permute.xlu0 4
        %6092 = vperm.xlu0 %6091, %v589
        %v6093 = vpop.permute.xlu0 %6092
        %6095 = vset.pattern.permute.xlu0 4
        %6096 = vperm.xlu0 %6095, %v592
        %v6097 = vpop.permute.xlu0 %6096
        %6099 = vset.pattern.permute.xlu0 4
        %6100 = vperm.xlu0 %6099, %v597
        %v6101 = vpop.permute.xlu0 %6100
        %6103 = vset.pattern.permute.xlu0 4
        %6104 = vperm.xlu0 %6103, %v600
        %v6105 = vpop.permute.xlu0 %6104
        %6107 = vset.pattern.permute.xlu0 4
        %6108 = vperm.xlu0 %6107, %v605
        %v6109 = vpop.permute.xlu0 %6108
        %6111 = vset.pattern.permute.xlu0 4
        %6112 = vperm.xlu0 %6111, %v608
        %v6113 = vpop.permute.xlu0 %6112
        %6115 = vset.pattern.permute.xlu0 4
        %6116 = vperm.xlu0 %6115, %v613
        %v6117 = vpop.permute.xlu0 %6116
        %6119 = vset.pattern.permute.xlu0 4
        %6120 = vperm.xlu0 %6119, %v616
        %v6121 = vpop.permute.xlu0 %6120
        %6123 = vset.pattern.permute.xlu0 4
        %6124 = vperm.xlu0 %6123, %v621
        %v6125 = vpop.permute.xlu0 %6124
        %6127 = vset.pattern.permute.xlu0 4
        %6128 = vperm.xlu0 %6127, %v624
        %v6129 = vpop.permute.xlu0 %6128
        %6131 = vset.pattern.permute.xlu0 4
        %6132 = vperm.xlu0 %6131, %v629
        %v6133 = vpop.permute.xlu0 %6132
        %6135 = vset.pattern.permute.xlu0 4
        %6136 = vperm.xlu0 %6135, %v632
        %v6137 = vpop.permute.xlu0 %6136
        %6139 = vset.pattern.permute.xlu0 4
        %6140 = vperm.xlu0 %6139, %v637
        %v6141 = vpop.permute.xlu0 %6140
        %6143 = vset.pattern.permute.xlu0 4
        %6144 = vperm.xlu0 %6143, %v640
        %v6145 = vpop.permute.xlu0 %6144
        %6147 = vset.pattern.permute.xlu0 4
        %6148 = vperm.xlu0 %6147, %v645
        %v6149 = vpop.permute.xlu0 %6148
        %6151 = vset.pattern.permute.xlu0 4
        %6152 = vperm.xlu0 %6151, %v648
        %v6153 = vpop.permute.xlu0 %6152
        %6155 = vset.pattern.permute.xlu0 4
        %6156 = vperm.xlu0 %6155, %v653
        %v6157 = vpop.permute.xlu0 %6156
        %6159 = vset.pattern.permute.xlu0 4
        %6160 = vperm.xlu0 %6159, %v656
        %v6161 = vpop.permute.xlu0 %6160
        %6163 = vset.pattern.permute.xlu0 4
        %6164 = vperm.xlu0 %6163, %v661
        %v6165 = vpop.permute.xlu0 %6164
        %6167 = vset.pattern.permute.xlu0 4
        %6168 = vperm.xlu0 %6167, %v664
        %v6169 = vpop.permute.xlu0 %6168
        %6171 = vset.pattern.permute.xlu0 4
        %6172 = vperm.xlu0 %6171, %v669
        %v6173 = vpop.permute.xlu0 %6172
        %6175 = vset.pattern.permute.xlu0 4
        %6176 = vperm.xlu0 %6175, %v672
        %v6177 = vpop.permute.xlu0 %6176
        %6179 = vset.pattern.permute.xlu0 4
        %6180 = vperm.xlu0 %6179, %v677
        %v6181 = vpop.permute.xlu0 %6180
        %6183 = vset.pattern.permute.xlu0 4
        %6184 = vperm.xlu0 %6183, %v680
        %v6185 = vpop.permute.xlu0 %6184
        %6187 = vset.pattern.permute.xlu0 4
        %6188 = vperm.xlu0 %6187, %v685
        %v6189 = vpop.permute.xlu0 %6188
        %6191 = vset.pattern.permute.xlu0 4
        %6192 = vperm.xlu0 %6191, %v688
        %v6193 = vpop.permute.xlu0 %6192
        %6195 = vset.pattern.permute.xlu0 4
        %6196 = vperm.xlu0 %6195, %v693
        %v6197 = vpop.permute.xlu0 %6196
        %6199 = vset.pattern.permute.xlu0 4
        %6200 = vperm.xlu0 %6199, %v696
        %v6201 = vpop.permute.xlu0 %6200
        %6203 = vset.pattern.permute.xlu0 4
        %6204 = vperm.xlu0 %6203, %v701
        %v6205 = vpop.permute.xlu0 %6204
        %6207 = vset.pattern.permute.xlu0 4
        %6208 = vperm.xlu0 %6207, %v704
        %v6209 = vpop.permute.xlu0 %6208
        %6211 = vset.pattern.permute.xlu0 4
        %6212 = vperm.xlu0 %6211, %v709
        %v6213 = vpop.permute.xlu0 %6212
        %6215 = vset.pattern.permute.xlu0 4
        %6216 = vperm.xlu0 %6215, %v712
        %v6217 = vpop.permute.xlu0 %6216
        %v6219 = vmul.f32 %v6093, %v5263
        %v6220 = vmul.f32 %v6097, %v5267
        %v6221 = vmul.f32 %v6101, %v5273
        %v6222 = vmul.f32 %v6105, %v5277
        %v6223 = vmul.f32 %v6109, %v5283
        %v6224 = vmul.f32 %v6113, %v5287
        %v6225 = vmul.f32 %v6117, %v5293
        %v6226 = vmul.f32 %v6121, %v5297
        %v6227 = vmul.f32 %v6125, %v5303
        %v6228 = vmul.f32 %v6129, %v5307
        %v6229 = vmul.f32 %v6133, %v5313
        %v6230 = vmul.f32 %v6137, %v5317
        %v6231 = vmul.f32 %v6141, %v5323
        %v6232 = vmul.f32 %v6145, %v5327
        %v6233 = vmul.f32 %v6149, %v5333
        %v6234 = vmul.f32 %v6153, %v5337
        %v6235 = vmul.f32 %v6157, %v5343
        %v6236 = vmul.f32 %v6161, %v5347
        %v6237 = vmul.f32 %v6165, %v5353
        %v6238 = vmul.f32 %v6169, %v5357
        %v6239 = vmul.f32 %v6173, %v5363
        %v6240 = vmul.f32 %v6177, %v5367
        %v6241 = vmul.f32 %v6181, %v5373
        %v6242 = vmul.f32 %v6185, %v5377
        %v6243 = vmul.f32 %v6189, %v5383
        %v6244 = vmul.f32 %v6193, %v5387
        %v6245 = vmul.f32 %v6197, %v5393
        %v6246 = vmul.f32 %v6201, %v5397
        %v6247 = vmul.f32 %v6205, %v5403
        %v6248 = vmul.f32 %v6209, %v5407
        %v6249 = vmul.f32 %v6213, %v5413
        %v6250 = vmul.f32 %v6217, %v5417
        %6251 = vset.pattern.permute.xlu0 5
        %6252 = vperm.xlu0 %6251, %v589
        %v6253 = vpop.permute.xlu0 %6252
        %6255 = vset.pattern.permute.xlu0 5
        %6256 = vperm.xlu0 %6255, %v592
        %v6257 = vpop.permute.xlu0 %6256
        %6259 = vset.pattern.permute.xlu0 5
        %6260 = vperm.xlu0 %6259, %v597
        %v6261 = vpop.permute.xlu0 %6260
        %6263 = vset.pattern.permute.xlu0 5
        %6264 = vperm.xlu0 %6263, %v600
        %v6265 = vpop.permute.xlu0 %6264
        %6267 = vset.pattern.permute.xlu0 5
        %6268 = vperm.xlu0 %6267, %v605
        %v6269 = vpop.permute.xlu0 %6268
        %6271 = vset.pattern.permute.xlu0 5
        %6272 = vperm.xlu0 %6271, %v608
        %v6273 = vpop.permute.xlu0 %6272
        %6275 = vset.pattern.permute.xlu0 5
        %6276 = vperm.xlu0 %6275, %v613
        %v6277 = vpop.permute.xlu0 %6276
        %6279 = vset.pattern.permute.xlu0 5
        %6280 = vperm.xlu0 %6279, %v616
        %v6281 = vpop.permute.xlu0 %6280
        %6283 = vset.pattern.permute.xlu0 5
        %6284 = vperm.xlu0 %6283, %v621
        %v6285 = vpop.permute.xlu0 %6284
        %6287 = vset.pattern.permute.xlu0 5
        %6288 = vperm.xlu0 %6287, %v624
        %v6289 = vpop.permute.xlu0 %6288
        %6291 = vset.pattern.permute.xlu0 5
        %6292 = vperm.xlu0 %6291, %v629
        %v6293 = vpop.permute.xlu0 %6292
        %6295 = vset.pattern.permute.xlu0 5
        %6296 = vperm.xlu0 %6295, %v632
        %v6297 = vpop.permute.xlu0 %6296
        %6299 = vset.pattern.permute.xlu0 5
        %6300 = vperm.xlu0 %6299, %v637
        %v6301 = vpop.permute.xlu0 %6300
        %6303 = vset.pattern.permute.xlu0 5
        %6304 = vperm.xlu0 %6303, %v640
        %v6305 = vpop.permute.xlu0 %6304
        %6307 = vset.pattern.permute.xlu0 5
        %6308 = vperm.xlu0 %6307, %v645
        %v6309 = vpop.permute.xlu0 %6308
        %6311 = vset.pattern.permute.xlu0 5
        %6312 = vperm.xlu0 %6311, %v648
        %v6313 = vpop.permute.xlu0 %6312
        %6315 = vset.pattern.permute.xlu0 5
        %6316 = vperm.xlu0 %6315, %v653
        %v6317 = vpop.permute.xlu0 %6316
        %6319 = vset.pattern.permute.xlu0 5
        %6320 = vperm.xlu0 %6319, %v656
        %v6321 = vpop.permute.xlu0 %6320
        %6323 = vset.pattern.permute.xlu0 5
        %6324 = vperm.xlu0 %6323, %v661
        %v6325 = vpop.permute.xlu0 %6324
        %6327 = vset.pattern.permute.xlu0 5
        %6328 = vperm.xlu0 %6327, %v664
        %v6329 = vpop.permute.xlu0 %6328
        %6331 = vset.pattern.permute.xlu0 5
        %6332 = vperm.xlu0 %6331, %v669
        %v6333 = vpop.permute.xlu0 %6332
        %6335 = vset.pattern.permute.xlu0 5
        %6336 = vperm.xlu0 %6335, %v672
        %v6337 = vpop.permute.xlu0 %6336
        %6339 = vset.pattern.permute.xlu0 5
        %6340 = vperm.xlu0 %6339, %v677
        %v6341 = vpop.permute.xlu0 %6340
        %6343 = vset.pattern.permute.xlu0 5
        %6344 = vperm.xlu0 %6343, %v680
        %v6345 = vpop.permute.xlu0 %6344
        %6347 = vset.pattern.permute.xlu0 5
        %6348 = vperm.xlu0 %6347, %v685
        %v6349 = vpop.permute.xlu0 %6348
        %6351 = vset.pattern.permute.xlu0 5
        %6352 = vperm.xlu0 %6351, %v688
        %v6353 = vpop.permute.xlu0 %6352
        %6355 = vset.pattern.permute.xlu0 5
        %6356 = vperm.xlu0 %6355, %v693
        %v6357 = vpop.permute.xlu0 %6356
        %6359 = vset.pattern.permute.xlu0 5
        %6360 = vperm.xlu0 %6359, %v696
        %v6361 = vpop.permute.xlu0 %6360
        %6363 = vset.pattern.permute.xlu0 5
        %6364 = vperm.xlu0 %6363, %v701
        %v6365 = vpop.permute.xlu0 %6364
        %6367 = vset.pattern.permute.xlu0 5
        %6368 = vperm.xlu0 %6367, %v704
        %v6369 = vpop.permute.xlu0 %6368
        %6371 = vset.pattern.permute.xlu0 5
        %6372 = vperm.xlu0 %6371, %v709
        %v6373 = vpop.permute.xlu0 %6372
        %6375 = vset.pattern.permute.xlu0 5
        %6376 = vperm.xlu0 %6375, %v712
        %v6377 = vpop.permute.xlu0 %6376
        %v6379 = vmul.f32 %v6253, %v5263
        %v6380 = vmul.f32 %v6257, %v5267
        %v6381 = vmul.f32 %v6261, %v5273
        %v6382 = vmul.f32 %v6265, %v5277
        %v6383 = vmul.f32 %v6269, %v5283
        %v6384 = vmul.f32 %v6273, %v5287
        %v6385 = vmul.f32 %v6277, %v5293
        %v6386 = vmul.f32 %v6281, %v5297
        %v6387 = vmul.f32 %v6285, %v5303
        %v6388 = vmul.f32 %v6289, %v5307
        %v6389 = vmul.f32 %v6293, %v5313
        %v6390 = vmul.f32 %v6297, %v5317
        %v6391 = vmul.f32 %v6301, %v5323
        %v6392 = vmul.f32 %v6305, %v5327
        %v6393 = vmul.f32 %v6309, %v5333
        %v6394 = vmul.f32 %v6313, %v5337
        %v6395 = vmul.f32 %v6317, %v5343
        %v6396 = vmul.f32 %v6321, %v5347
        %v6397 = vmul.f32 %v6325, %v5353
        %v6398 = vmul.f32 %v6329, %v5357
        %v6399 = vmul.f32 %v6333, %v5363
        %v6400 = vmul.f32 %v6337, %v5367
        %v6401 = vmul.f32 %v6341, %v5373
        %v6402 = vmul.f32 %v6345, %v5377
        %v6403 = vmul.f32 %v6349, %v5383
        %v6404 = vmul.f32 %v6353, %v5387
        %v6405 = vmul.f32 %v6357, %v5393
        %v6406 = vmul.f32 %v6361, %v5397
        %v6407 = vmul.f32 %v6365, %v5403
        %v6408 = vmul.f32 %v6369, %v5407
        %v6409 = vmul.f32 %v6373, %v5413
        %v6410 = vmul.f32 %v6377, %v5417
        %6411 = vset.pattern.permute.xlu0 6
        %6412 = vperm.xlu0 %6411, %v589
        %v6413 = vpop.permute.xlu0 %6412
        %6415 = vset.pattern.permute.xlu0 6
        %6416 = vperm.xlu0 %6415, %v592
        %v6417 = vpop.permute.xlu0 %6416
        %6419 = vset.pattern.permute.xlu0 6
        %6420 = vperm.xlu0 %6419, %v597
        %v6421 = vpop.permute.xlu0 %6420
        %6423 = vset.pattern.permute.xlu0 6
        %6424 = vperm.xlu0 %6423, %v600
        %v6425 = vpop.permute.xlu0 %6424
        %6427 = vset.pattern.permute.xlu0 6
        %6428 = vperm.xlu0 %6427, %v605
        %v6429 = vpop.permute.xlu0 %6428
        %6431 = vset.pattern.permute.xlu0 6
        %6432 = vperm.xlu0 %6431, %v608
        %v6433 = vpop.permute.xlu0 %6432
        %6435 = vset.pattern.permute.xlu0 6
        %6436 = vperm.xlu0 %6435, %v613
        %v6437 = vpop.permute.xlu0 %6436
        %6439 = vset.pattern.permute.xlu0 6
        %6440 = vperm.xlu0 %6439, %v616
        %v6441 = vpop.permute.xlu0 %6440
        %6443 = vset.pattern.permute.xlu0 6
        %6444 = vperm.xlu0 %6443, %v621
        %v6445 = vpop.permute.xlu0 %6444
        %6447 = vset.pattern.permute.xlu0 6
        %6448 = vperm.xlu0 %6447, %v624
        %v6449 = vpop.permute.xlu0 %6448
        %6451 = vset.pattern.permute.xlu0 6
        %6452 = vperm.xlu0 %6451, %v629
        %v6453 = vpop.permute.xlu0 %6452
        %6455 = vset.pattern.permute.xlu0 6
        %6456 = vperm.xlu0 %6455, %v632
        %v6457 = vpop.permute.xlu0 %6456
        %6459 = vset.pattern.permute.xlu0 6
        %6460 = vperm.xlu0 %6459, %v637
        %v6461 = vpop.permute.xlu0 %6460
        %6463 = vset.pattern.permute.xlu0 6
        %6464 = vperm.xlu0 %6463, %v640
        %v6465 = vpop.permute.xlu0 %6464
        %6467 = vset.pattern.permute.xlu0 6
        %6468 = vperm.xlu0 %6467, %v645
        %v6469 = vpop.permute.xlu0 %6468
        %6471 = vset.pattern.permute.xlu0 6
        %6472 = vperm.xlu0 %6471, %v648
        %v6473 = vpop.permute.xlu0 %6472
        %6475 = vset.pattern.permute.xlu0 6
        %6476 = vperm.xlu0 %6475, %v653
        %v6477 = vpop.permute.xlu0 %6476
        %6479 = vset.pattern.permute.xlu0 6
        %6480 = vperm.xlu0 %6479, %v656
        %v6481 = vpop.permute.xlu0 %6480
        %6483 = vset.pattern.permute.xlu0 6
        %6484 = vperm.xlu0 %6483, %v661
        %v6485 = vpop.permute.xlu0 %6484
        %6487 = vset.pattern.permute.xlu0 6
        %6488 = vperm.xlu0 %6487, %v664
        %v6489 = vpop.permute.xlu0 %6488
        %6491 = vset.pattern.permute.xlu0 6
        %6492 = vperm.xlu0 %6491, %v669
        %v6493 = vpop.permute.xlu0 %6492
        %6495 = vset.pattern.permute.xlu0 6
        %6496 = vperm.xlu0 %6495, %v672
        %v6497 = vpop.permute.xlu0 %6496
        %6499 = vset.pattern.permute.xlu0 6
        %6500 = vperm.xlu0 %6499, %v677
        %v6501 = vpop.permute.xlu0 %6500
        %6503 = vset.pattern.permute.xlu0 6
        %6504 = vperm.xlu0 %6503, %v680
        %v6505 = vpop.permute.xlu0 %6504
        %6507 = vset.pattern.permute.xlu0 6
        %6508 = vperm.xlu0 %6507, %v685
        %v6509 = vpop.permute.xlu0 %6508
        %6511 = vset.pattern.permute.xlu0 6
        %6512 = vperm.xlu0 %6511, %v688
        %v6513 = vpop.permute.xlu0 %6512
        %6515 = vset.pattern.permute.xlu0 6
        %6516 = vperm.xlu0 %6515, %v693
        %v6517 = vpop.permute.xlu0 %6516
        %6519 = vset.pattern.permute.xlu0 6
        %6520 = vperm.xlu0 %6519, %v696
        %v6521 = vpop.permute.xlu0 %6520
        %6523 = vset.pattern.permute.xlu0 6
        %6524 = vperm.xlu0 %6523, %v701
        %v6525 = vpop.permute.xlu0 %6524
        %6527 = vset.pattern.permute.xlu0 6
        %6528 = vperm.xlu0 %6527, %v704
        %v6529 = vpop.permute.xlu0 %6528
        %6531 = vset.pattern.permute.xlu0 6
        %6532 = vperm.xlu0 %6531, %v709
        %v6533 = vpop.permute.xlu0 %6532
        %6535 = vset.pattern.permute.xlu0 6
        %6536 = vperm.xlu0 %6535, %v712
        %v6537 = vpop.permute.xlu0 %6536
        %v6539 = vmul.f32 %v6413, %v5263
        %v6540 = vmul.f32 %v6417, %v5267
        %v6541 = vmul.f32 %v6421, %v5273
        %v6542 = vmul.f32 %v6425, %v5277
        %v6543 = vmul.f32 %v6429, %v5283
        %v6544 = vmul.f32 %v6433, %v5287
        %v6545 = vmul.f32 %v6437, %v5293
        %v6546 = vmul.f32 %v6441, %v5297
        %v6547 = vmul.f32 %v6445, %v5303
        %v6548 = vmul.f32 %v6449, %v5307
        %v6549 = vmul.f32 %v6453, %v5313
        %v6550 = vmul.f32 %v6457, %v5317
        %v6551 = vmul.f32 %v6461, %v5323
        %v6552 = vmul.f32 %v6465, %v5327
        %v6553 = vmul.f32 %v6469, %v5333
        %v6554 = vmul.f32 %v6473, %v5337
        %v6555 = vmul.f32 %v6477, %v5343
        %v6556 = vmul.f32 %v6481, %v5347
        %v6557 = vmul.f32 %v6485, %v5353
        %v6558 = vmul.f32 %v6489, %v5357
        %v6559 = vmul.f32 %v6493, %v5363
        %v6560 = vmul.f32 %v6497, %v5367
        %v6561 = vmul.f32 %v6501, %v5373
        %v6562 = vmul.f32 %v6505, %v5377
        %v6563 = vmul.f32 %v6509, %v5383
        %v6564 = vmul.f32 %v6513, %v5387
        %v6565 = vmul.f32 %v6517, %v5393
        %v6566 = vmul.f32 %v6521, %v5397
        %v6567 = vmul.f32 %v6525, %v5403
        %v6568 = vmul.f32 %v6529, %v5407
        %v6569 = vmul.f32 %v6533, %v5413
        %v6570 = vmul.f32 %v6537, %v5417
        %6571 = vset.pattern.permute.xlu0 7
        %6572 = vperm.xlu0 %6571, %v589
        %v6573 = vpop.permute.xlu0 %6572
        %6575 = vset.pattern.permute.xlu0 7
        %6576 = vperm.xlu0 %6575, %v592
        %v6577 = vpop.permute.xlu0 %6576
        %6579 = vset.pattern.permute.xlu0 7
        %6580 = vperm.xlu0 %6579, %v597
        %v6581 = vpop.permute.xlu0 %6580
        %6583 = vset.pattern.permute.xlu0 7
        %6584 = vperm.xlu0 %6583, %v600
        %v6585 = vpop.permute.xlu0 %6584
        %6587 = vset.pattern.permute.xlu0 7
        %6588 = vperm.xlu0 %6587, %v605
        %v6589 = vpop.permute.xlu0 %6588
        %6591 = vset.pattern.permute.xlu0 7
        %6592 = vperm.xlu0 %6591, %v608
        %v6593 = vpop.permute.xlu0 %6592
        %6595 = vset.pattern.permute.xlu0 7
        %6596 = vperm.xlu0 %6595, %v613
        %v6597 = vpop.permute.xlu0 %6596
        %6599 = vset.pattern.permute.xlu0 7
        %6600 = vperm.xlu0 %6599, %v616
        %v6601 = vpop.permute.xlu0 %6600
        %6603 = vset.pattern.permute.xlu0 7
        %6604 = vperm.xlu0 %6603, %v621
        %v6605 = vpop.permute.xlu0 %6604
        %6607 = vset.pattern.permute.xlu0 7
        %6608 = vperm.xlu0 %6607, %v624
        %v6609 = vpop.permute.xlu0 %6608
        %6611 = vset.pattern.permute.xlu0 7
        %6612 = vperm.xlu0 %6611, %v629
        %v6613 = vpop.permute.xlu0 %6612
        %6615 = vset.pattern.permute.xlu0 7
        %6616 = vperm.xlu0 %6615, %v632
        %v6617 = vpop.permute.xlu0 %6616
        %6619 = vset.pattern.permute.xlu0 7
        %6620 = vperm.xlu0 %6619, %v637
        %v6621 = vpop.permute.xlu0 %6620
        %6623 = vset.pattern.permute.xlu0 7
        %6624 = vperm.xlu0 %6623, %v640
        %v6625 = vpop.permute.xlu0 %6624
        %6627 = vset.pattern.permute.xlu0 7
        %6628 = vperm.xlu0 %6627, %v645
        %v6629 = vpop.permute.xlu0 %6628
        %6631 = vset.pattern.permute.xlu0 7
        %6632 = vperm.xlu0 %6631, %v648
        %v6633 = vpop.permute.xlu0 %6632
        %6635 = vset.pattern.permute.xlu0 7
        %6636 = vperm.xlu0 %6635, %v653
        %v6637 = vpop.permute.xlu0 %6636
        %6639 = vset.pattern.permute.xlu0 7
        %6640 = vperm.xlu0 %6639, %v656
        %v6641 = vpop.permute.xlu0 %6640
        %6643 = vset.pattern.permute.xlu0 7
        %6644 = vperm.xlu0 %6643, %v661
        %v6645 = vpop.permute.xlu0 %6644
        %6647 = vset.pattern.permute.xlu0 7
        %6648 = vperm.xlu0 %6647, %v664
        %v6649 = vpop.permute.xlu0 %6648
        %6651 = vset.pattern.permute.xlu0 7
        %6652 = vperm.xlu0 %6651, %v669
        %v6653 = vpop.permute.xlu0 %6652
        %6655 = vset.pattern.permute.xlu0 7
        %6656 = vperm.xlu0 %6655, %v672
        %v6657 = vpop.permute.xlu0 %6656
        %6659 = vset.pattern.permute.xlu0 7
        %6660 = vperm.xlu0 %6659, %v677
        %v6661 = vpop.permute.xlu0 %6660
        %6663 = vset.pattern.permute.xlu0 7
        %6664 = vperm.xlu0 %6663, %v680
        %v6665 = vpop.permute.xlu0 %6664
        %6667 = vset.pattern.permute.xlu0 7
        %6668 = vperm.xlu0 %6667, %v685
        %v6669 = vpop.permute.xlu0 %6668
        %6671 = vset.pattern.permute.xlu0 7
        %6672 = vperm.xlu0 %6671, %v688
        %v6673 = vpop.permute.xlu0 %6672
        %6675 = vset.pattern.permute.xlu0 7
        %6676 = vperm.xlu0 %6675, %v693
        %v6677 = vpop.permute.xlu0 %6676
        %6679 = vset.pattern.permute.xlu0 7
        %6680 = vperm.xlu0 %6679, %v696
        %v6681 = vpop.permute.xlu0 %6680
        %6683 = vset.pattern.permute.xlu0 7
        %6684 = vperm.xlu0 %6683, %v701
        %v6685 = vpop.permute.xlu0 %6684
        %6687 = vset.pattern.permute.xlu0 7
        %6688 = vperm.xlu0 %6687, %v704
        %v6689 = vpop.permute.xlu0 %6688
        %6691 = vset.pattern.permute.xlu0 7
        %6692 = vperm.xlu0 %6691, %v709
        %v6693 = vpop.permute.xlu0 %6692
        %6695 = vset.pattern.permute.xlu0 7
        %6696 = vperm.xlu0 %6695, %v712
        %v6697 = vpop.permute.xlu0 %6696
        %v6699 = vmul.f32 %v6573, %v5263
        %v6700 = vmul.f32 %v6577, %v5267
        %v6701 = vmul.f32 %v6581, %v5273
        %v6702 = vmul.f32 %v6585, %v5277
        %v6703 = vmul.f32 %v6589, %v5283
        %v6704 = vmul.f32 %v6593, %v5287
        %v6705 = vmul.f32 %v6597, %v5293
        %v6706 = vmul.f32 %v6601, %v5297
        %v6707 = vmul.f32 %v6605, %v5303
        %v6708 = vmul.f32 %v6609, %v5307
        %v6709 = vmul.f32 %v6613, %v5313
        %v6710 = vmul.f32 %v6617, %v5317
        %v6711 = vmul.f32 %v6621, %v5323
        %v6712 = vmul.f32 %v6625, %v5327
        %v6713 = vmul.f32 %v6629, %v5333
        %v6714 = vmul.f32 %v6633, %v5337
        %v6715 = vmul.f32 %v6637, %v5343
        %v6716 = vmul.f32 %v6641, %v5347
        %v6717 = vmul.f32 %v6645, %v5353
        %v6718 = vmul.f32 %v6649, %v5357
        %v6719 = vmul.f32 %v6653, %v5363
        %v6720 = vmul.f32 %v6657, %v5367
        %v6721 = vmul.f32 %v6661, %v5373
        %v6722 = vmul.f32 %v6665, %v5377
        %v6723 = vmul.f32 %v6669, %v5383
        %v6724 = vmul.f32 %v6673, %v5387
        %v6725 = vmul.f32 %v6677, %v5393
        %v6726 = vmul.f32 %v6681, %v5397
        %v6727 = vmul.f32 %v6685, %v5403
        %v6728 = vmul.f32 %v6689, %v5407
        %v6729 = vmul.f32 %v6693, %v5413
        %v6730 = vmul.f32 %v6697, %v5417
        %6763 = vrot.lane.b32.xlu0 %v5739, 96
        %v6764 = vpop.permute.xlu0 %6763
        %6765 = vrot.lane.b32.xlu0 %v5740, 96
        %v6766 = vpop.permute.xlu0 %6765
        %6767 = vrot.lane.b32.xlu0 %v5741, 96
        %v6768 = vpop.permute.xlu0 %6767
        %6769 = vrot.lane.b32.xlu0 %v5742, 96
        %v6770 = vpop.permute.xlu0 %6769
        %6771 = vrot.lane.b32.xlu0 %v5743, 96
        %v6772 = vpop.permute.xlu0 %6771
        %6773 = vrot.lane.b32.xlu0 %v5744, 96
        %v6774 = vpop.permute.xlu0 %6773
        %6775 = vrot.lane.b32.xlu0 %v5745, 96
        %v6776 = vpop.permute.xlu0 %6775
        %6777 = vrot.lane.b32.xlu0 %v5746, 96
        %v6778 = vpop.permute.xlu0 %6777
        %6779 = vrot.lane.b32.xlu0 %v5747, 96
        %v6780 = vpop.permute.xlu0 %6779
        %6781 = vrot.lane.b32.xlu0 %v5748, 96
        %v6782 = vpop.permute.xlu0 %6781
        %6783 = vrot.lane.b32.xlu0 %v5749, 96
        %v6784 = vpop.permute.xlu0 %6783
        %6785 = vrot.lane.b32.xlu0 %v5750, 96
        %v6786 = vpop.permute.xlu0 %6785
        %6787 = vrot.lane.b32.xlu0 %v5751, 96
        %v6788 = vpop.permute.xlu0 %6787
        %6789 = vrot.lane.b32.xlu0 %v5752, 96
        %v6790 = vpop.permute.xlu0 %6789
        %6791 = vrot.lane.b32.xlu0 %v5753, 96
        %v6792 = vpop.permute.xlu0 %6791
        %6793 = vrot.lane.b32.xlu0 %v5754, 96
        %v6794 = vpop.permute.xlu0 %6793
        %6795 = vrot.lane.b32.xlu0 %v5755, 96
        %v6796 = vpop.permute.xlu0 %6795
        %6797 = vrot.lane.b32.xlu0 %v5756, 96
        %v6798 = vpop.permute.xlu0 %6797
        %6799 = vrot.lane.b32.xlu0 %v5757, 96
        %v6800 = vpop.permute.xlu0 %6799
        %6801 = vrot.lane.b32.xlu0 %v5758, 96
        %v6802 = vpop.permute.xlu0 %6801
        %6803 = vrot.lane.b32.xlu0 %v5759, 96
        %v6804 = vpop.permute.xlu0 %6803
        %6805 = vrot.lane.b32.xlu0 %v5760, 96
        %v6806 = vpop.permute.xlu0 %6805
        %6807 = vrot.lane.b32.xlu0 %v5761, 96
        %v6808 = vpop.permute.xlu0 %6807
        %6809 = vrot.lane.b32.xlu0 %v5762, 96
        %v6810 = vpop.permute.xlu0 %6809
        %6811 = vrot.lane.b32.xlu0 %v5763, 96
        %v6812 = vpop.permute.xlu0 %6811
        %6813 = vrot.lane.b32.xlu0 %v5764, 96
        %v6814 = vpop.permute.xlu0 %6813
        %6815 = vrot.lane.b32.xlu0 %v5765, 96
        %v6816 = vpop.permute.xlu0 %6815
        %6817 = vrot.lane.b32.xlu0 %v5766, 96
        %v6818 = vpop.permute.xlu0 %6817
        %6819 = vrot.lane.b32.xlu0 %v5767, 96
        %v6820 = vpop.permute.xlu0 %6819
        %6821 = vrot.lane.b32.xlu0 %v5768, 96
        %v6822 = vpop.permute.xlu0 %6821
        %6823 = vrot.lane.b32.xlu0 %v5769, 96
        %v6824 = vpop.permute.xlu0 %6823
        %6825 = vrot.lane.b32.xlu0 %v5770, 96
        %v6826 = vpop.permute.xlu0 %6825
        %v6859 = vadd.f32 %v5579, %v6764
        %v6860 = vadd.f32 %v5580, %v6766
        %v6861 = vadd.f32 %v5581, %v6768
        %v6862 = vadd.f32 %v5582, %v6770
        %v6863 = vadd.f32 %v5583, %v6772
        %v6864 = vadd.f32 %v5584, %v6774
        %v6865 = vadd.f32 %v5585, %v6776
        %v6866 = vadd.f32 %v5586, %v6778
        %v6867 = vadd.f32 %v5587, %v6780
        %v6868 = vadd.f32 %v5588, %v6782
        %v6869 = vadd.f32 %v5589, %v6784
        %v6870 = vadd.f32 %v5590, %v6786
        %v6871 = vadd.f32 %v5591, %v6788
        %v6872 = vadd.f32 %v5592, %v6790
        %v6873 = vadd.f32 %v5593, %v6792
        %v6874 = vadd.f32 %v5594, %v6794
        %v6875 = vadd.f32 %v5595, %v6796
        %v6876 = vadd.f32 %v5596, %v6798
        %v6877 = vadd.f32 %v5597, %v6800
        %v6878 = vadd.f32 %v5598, %v6802
        %v6879 = vadd.f32 %v5599, %v6804
        %v6880 = vadd.f32 %v5600, %v6806
        %v6881 = vadd.f32 %v5601, %v6808
        %v6882 = vadd.f32 %v5602, %v6810
        %v6883 = vadd.f32 %v5603, %v6812
        %v6884 = vadd.f32 %v5604, %v6814
        %v6885 = vadd.f32 %v5605, %v6816
        %v6886 = vadd.f32 %v5606, %v6818
        %v6887 = vadd.f32 %v5607, %v6820
        %v6888 = vadd.f32 %v5608, %v6822
        %v6889 = vadd.f32 %v5609, %v6824
        %v6890 = vadd.f32 %v5610, %v6826
        %6923 = vrot.lane.b32.xlu0 %v6059, 96
        %v6924 = vpop.permute.xlu0 %6923
        %6925 = vrot.lane.b32.xlu0 %v6060, 96
        %v6926 = vpop.permute.xlu0 %6925
        %6927 = vrot.lane.b32.xlu0 %v6061, 96
        %v6928 = vpop.permute.xlu0 %6927
        %6929 = vrot.lane.b32.xlu0 %v6062, 96
        %v6930 = vpop.permute.xlu0 %6929
        %6931 = vrot.lane.b32.xlu0 %v6063, 96
        %v6932 = vpop.permute.xlu0 %6931
        %6933 = vrot.lane.b32.xlu0 %v6064, 96
        %v6934 = vpop.permute.xlu0 %6933
        %6935 = vrot.lane.b32.xlu0 %v6065, 96
        %v6936 = vpop.permute.xlu0 %6935
        %6937 = vrot.lane.b32.xlu0 %v6066, 96
        %v6938 = vpop.permute.xlu0 %6937
        %6939 = vrot.lane.b32.xlu0 %v6067, 96
        %v6940 = vpop.permute.xlu0 %6939
        %6941 = vrot.lane.b32.xlu0 %v6068, 96
        %v6942 = vpop.permute.xlu0 %6941
        %6943 = vrot.lane.b32.xlu0 %v6069, 96
        %v6944 = vpop.permute.xlu0 %6943
        %6945 = vrot.lane.b32.xlu0 %v6070, 96
        %v6946 = vpop.permute.xlu0 %6945
        %6947 = vrot.lane.b32.xlu0 %v6071, 96
        %v6948 = vpop.permute.xlu0 %6947
        %6949 = vrot.lane.b32.xlu0 %v6072, 96
        %v6950 = vpop.permute.xlu0 %6949
        %6951 = vrot.lane.b32.xlu0 %v6073, 96
        %v6952 = vpop.permute.xlu0 %6951
        %6953 = vrot.lane.b32.xlu0 %v6074, 96
        %v6954 = vpop.permute.xlu0 %6953
        %6955 = vrot.lane.b32.xlu0 %v6075, 96
        %v6956 = vpop.permute.xlu0 %6955
        %6957 = vrot.lane.b32.xlu0 %v6076, 96
        %v6958 = vpop.permute.xlu0 %6957
        %6959 = vrot.lane.b32.xlu0 %v6077, 96
        %v6960 = vpop.permute.xlu0 %6959
        %6961 = vrot.lane.b32.xlu0 %v6078, 96
        %v6962 = vpop.permute.xlu0 %6961
        %6963 = vrot.lane.b32.xlu0 %v6079, 96
        %v6964 = vpop.permute.xlu0 %6963
        %6965 = vrot.lane.b32.xlu0 %v6080, 96
        %v6966 = vpop.permute.xlu0 %6965
        %6967 = vrot.lane.b32.xlu0 %v6081, 96
        %v6968 = vpop.permute.xlu0 %6967
        %6969 = vrot.lane.b32.xlu0 %v6082, 96
        %v6970 = vpop.permute.xlu0 %6969
        %6971 = vrot.lane.b32.xlu0 %v6083, 96
        %v6972 = vpop.permute.xlu0 %6971
        %6973 = vrot.lane.b32.xlu0 %v6084, 96
        %v6974 = vpop.permute.xlu0 %6973
        %6975 = vrot.lane.b32.xlu0 %v6085, 96
        %v6976 = vpop.permute.xlu0 %6975
        %6977 = vrot.lane.b32.xlu0 %v6086, 96
        %v6978 = vpop.permute.xlu0 %6977
        %6979 = vrot.lane.b32.xlu0 %v6087, 96
        %v6980 = vpop.permute.xlu0 %6979
        %6981 = vrot.lane.b32.xlu0 %v6088, 96
        %v6982 = vpop.permute.xlu0 %6981
        %6983 = vrot.lane.b32.xlu0 %v6089, 96
        %v6984 = vpop.permute.xlu0 %6983
        %6985 = vrot.lane.b32.xlu0 %v6090, 96
        %v6986 = vpop.permute.xlu0 %6985
        %v7019 = vadd.f32 %v5899, %v6924
        %v7020 = vadd.f32 %v5900, %v6926
        %v7021 = vadd.f32 %v5901, %v6928
        %v7022 = vadd.f32 %v5902, %v6930
        %v7023 = vadd.f32 %v5903, %v6932
        %v7024 = vadd.f32 %v5904, %v6934
        %v7025 = vadd.f32 %v5905, %v6936
        %v7026 = vadd.f32 %v5906, %v6938
        %v7027 = vadd.f32 %v5907, %v6940
        %v7028 = vadd.f32 %v5908, %v6942
        %v7029 = vadd.f32 %v5909, %v6944
        %v7030 = vadd.f32 %v5910, %v6946
        %v7031 = vadd.f32 %v5911, %v6948
        %v7032 = vadd.f32 %v5912, %v6950
        %v7033 = vadd.f32 %v5913, %v6952
        %v7034 = vadd.f32 %v5914, %v6954
        %v7035 = vadd.f32 %v5915, %v6956
        %v7036 = vadd.f32 %v5916, %v6958
        %v7037 = vadd.f32 %v5917, %v6960
        %v7038 = vadd.f32 %v5918, %v6962
        %v7039 = vadd.f32 %v5919, %v6964
        %v7040 = vadd.f32 %v5920, %v6966
        %v7041 = vadd.f32 %v5921, %v6968
        %v7042 = vadd.f32 %v5922, %v6970
        %v7043 = vadd.f32 %v5923, %v6972
        %v7044 = vadd.f32 %v5924, %v6974
        %v7045 = vadd.f32 %v5925, %v6976
        %v7046 = vadd.f32 %v5926, %v6978
        %v7047 = vadd.f32 %v5927, %v6980
        %v7048 = vadd.f32 %v5928, %v6982
        %v7049 = vadd.f32 %v5929, %v6984
        %v7050 = vadd.f32 %v5930, %v6986
        %7083 = vrot.lane.b32.xlu0 %v6379, 96
        %v7084 = vpop.permute.xlu0 %7083
        %7085 = vrot.lane.b32.xlu0 %v6380, 96
        %v7086 = vpop.permute.xlu0 %7085
        %7087 = vrot.lane.b32.xlu0 %v6381, 96
        %v7088 = vpop.permute.xlu0 %7087
        %7089 = vrot.lane.b32.xlu0 %v6382, 96
        %v7090 = vpop.permute.xlu0 %7089
        %7091 = vrot.lane.b32.xlu0 %v6383, 96
        %v7092 = vpop.permute.xlu0 %7091
        %7093 = vrot.lane.b32.xlu0 %v6384, 96
        %v7094 = vpop.permute.xlu0 %7093
        %7095 = vrot.lane.b32.xlu0 %v6385, 96
        %v7096 = vpop.permute.xlu0 %7095
        %7097 = vrot.lane.b32.xlu0 %v6386, 96
        %v7098 = vpop.permute.xlu0 %7097
        %7099 = vrot.lane.b32.xlu0 %v6387, 96
        %v7100 = vpop.permute.xlu0 %7099
        %7101 = vrot.lane.b32.xlu0 %v6388, 96
        %v7102 = vpop.permute.xlu0 %7101
        %7103 = vrot.lane.b32.xlu0 %v6389, 96
        %v7104 = vpop.permute.xlu0 %7103
        %7105 = vrot.lane.b32.xlu0 %v6390, 96
        %v7106 = vpop.permute.xlu0 %7105
        %7107 = vrot.lane.b32.xlu0 %v6391, 96
        %v7108 = vpop.permute.xlu0 %7107
        %7109 = vrot.lane.b32.xlu0 %v6392, 96
        %v7110 = vpop.permute.xlu0 %7109
        %7111 = vrot.lane.b32.xlu0 %v6393, 96
        %v7112 = vpop.permute.xlu0 %7111
        %7113 = vrot.lane.b32.xlu0 %v6394, 96
        %v7114 = vpop.permute.xlu0 %7113
        %7115 = vrot.lane.b32.xlu0 %v6395, 96
        %v7116 = vpop.permute.xlu0 %7115
        %7117 = vrot.lane.b32.xlu0 %v6396, 96
        %v7118 = vpop.permute.xlu0 %7117
        %7119 = vrot.lane.b32.xlu0 %v6397, 96
        %v7120 = vpop.permute.xlu0 %7119
        %7121 = vrot.lane.b32.xlu0 %v6398, 96
        %v7122 = vpop.permute.xlu0 %7121
        %7123 = vrot.lane.b32.xlu0 %v6399, 96
        %v7124 = vpop.permute.xlu0 %7123
        %7125 = vrot.lane.b32.xlu0 %v6400, 96
        %v7126 = vpop.permute.xlu0 %7125
        %7127 = vrot.lane.b32.xlu0 %v6401, 96
        %v7128 = vpop.permute.xlu0 %7127
        %7129 = vrot.lane.b32.xlu0 %v6402, 96
        %v7130 = vpop.permute.xlu0 %7129
        %7131 = vrot.lane.b32.xlu0 %v6403, 96
        %v7132 = vpop.permute.xlu0 %7131
        %7133 = vrot.lane.b32.xlu0 %v6404, 96
        %v7134 = vpop.permute.xlu0 %7133
        %7135 = vrot.lane.b32.xlu0 %v6405, 96
        %v7136 = vpop.permute.xlu0 %7135
        %7137 = vrot.lane.b32.xlu0 %v6406, 96
        %v7138 = vpop.permute.xlu0 %7137
        %7139 = vrot.lane.b32.xlu0 %v6407, 96
        %v7140 = vpop.permute.xlu0 %7139
        %7141 = vrot.lane.b32.xlu0 %v6408, 96
        %v7142 = vpop.permute.xlu0 %7141
        %7143 = vrot.lane.b32.xlu0 %v6409, 96
        %v7144 = vpop.permute.xlu0 %7143
        %7145 = vrot.lane.b32.xlu0 %v6410, 96
        %v7146 = vpop.permute.xlu0 %7145
        %v7179 = vadd.f32 %v6219, %v7084
        %v7180 = vadd.f32 %v6220, %v7086
        %v7181 = vadd.f32 %v6221, %v7088
        %v7182 = vadd.f32 %v6222, %v7090
        %v7183 = vadd.f32 %v6223, %v7092
        %v7184 = vadd.f32 %v6224, %v7094
        %v7185 = vadd.f32 %v6225, %v7096
        %v7186 = vadd.f32 %v6226, %v7098
        %v7187 = vadd.f32 %v6227, %v7100
        %v7188 = vadd.f32 %v6228, %v7102
        %v7189 = vadd.f32 %v6229, %v7104
        %v7190 = vadd.f32 %v6230, %v7106
        %v7191 = vadd.f32 %v6231, %v7108
        %v7192 = vadd.f32 %v6232, %v7110
        %v7193 = vadd.f32 %v6233, %v7112
        %v7194 = vadd.f32 %v6234, %v7114
        %v7195 = vadd.f32 %v6235, %v7116
        %v7196 = vadd.f32 %v6236, %v7118
        %v7197 = vadd.f32 %v6237, %v7120
        %v7198 = vadd.f32 %v6238, %v7122
        %v7199 = vadd.f32 %v6239, %v7124
        %v7200 = vadd.f32 %v6240, %v7126
        %v7201 = vadd.f32 %v6241, %v7128
        %v7202 = vadd.f32 %v6242, %v7130
        %v7203 = vadd.f32 %v6243, %v7132
        %v7204 = vadd.f32 %v6244, %v7134
        %v7205 = vadd.f32 %v6245, %v7136
        %v7206 = vadd.f32 %v6246, %v7138
        %v7207 = vadd.f32 %v6247, %v7140
        %v7208 = vadd.f32 %v6248, %v7142
        %v7209 = vadd.f32 %v6249, %v7144
        %v7210 = vadd.f32 %v6250, %v7146
        %7243 = vrot.lane.b32.xlu0 %v6699, 96
        %v7244 = vpop.permute.xlu0 %7243
        %7245 = vrot.lane.b32.xlu0 %v6700, 96
        %v7246 = vpop.permute.xlu0 %7245
        %7247 = vrot.lane.b32.xlu0 %v6701, 96
        %v7248 = vpop.permute.xlu0 %7247
        %7249 = vrot.lane.b32.xlu0 %v6702, 96
        %v7250 = vpop.permute.xlu0 %7249
        %7251 = vrot.lane.b32.xlu0 %v6703, 96
        %v7252 = vpop.permute.xlu0 %7251
        %7253 = vrot.lane.b32.xlu0 %v6704, 96
        %v7254 = vpop.permute.xlu0 %7253
        %7255 = vrot.lane.b32.xlu0 %v6705, 96
        %v7256 = vpop.permute.xlu0 %7255
        %7257 = vrot.lane.b32.xlu0 %v6706, 96
        %v7258 = vpop.permute.xlu0 %7257
        %7259 = vrot.lane.b32.xlu0 %v6707, 96
        %v7260 = vpop.permute.xlu0 %7259
        %7261 = vrot.lane.b32.xlu0 %v6708, 96
        %v7262 = vpop.permute.xlu0 %7261
        %7263 = vrot.lane.b32.xlu0 %v6709, 96
        %v7264 = vpop.permute.xlu0 %7263
        %7265 = vrot.lane.b32.xlu0 %v6710, 96
        %v7266 = vpop.permute.xlu0 %7265
        %7267 = vrot.lane.b32.xlu0 %v6711, 96
        %v7268 = vpop.permute.xlu0 %7267
        %7269 = vrot.lane.b32.xlu0 %v6712, 96
        %v7270 = vpop.permute.xlu0 %7269
        %7271 = vrot.lane.b32.xlu0 %v6713, 96
        %v7272 = vpop.permute.xlu0 %7271
        %7273 = vrot.lane.b32.xlu0 %v6714, 96
        %v7274 = vpop.permute.xlu0 %7273
        %7275 = vrot.lane.b32.xlu0 %v6715, 96
        %v7276 = vpop.permute.xlu0 %7275
        %7277 = vrot.lane.b32.xlu0 %v6716, 96
        %v7278 = vpop.permute.xlu0 %7277
        %7279 = vrot.lane.b32.xlu0 %v6717, 96
        %v7280 = vpop.permute.xlu0 %7279
        %7281 = vrot.lane.b32.xlu0 %v6718, 96
        %v7282 = vpop.permute.xlu0 %7281
        %7283 = vrot.lane.b32.xlu0 %v6719, 96
        %v7284 = vpop.permute.xlu0 %7283
        %7285 = vrot.lane.b32.xlu0 %v6720, 96
        %v7286 = vpop.permute.xlu0 %7285
        %7287 = vrot.lane.b32.xlu0 %v6721, 96
        %v7288 = vpop.permute.xlu0 %7287
        %7289 = vrot.lane.b32.xlu0 %v6722, 96
        %v7290 = vpop.permute.xlu0 %7289
        %7291 = vrot.lane.b32.xlu0 %v6723, 96
        %v7292 = vpop.permute.xlu0 %7291
        %7293 = vrot.lane.b32.xlu0 %v6724, 96
        %v7294 = vpop.permute.xlu0 %7293
        %7295 = vrot.lane.b32.xlu0 %v6725, 96
        %v7296 = vpop.permute.xlu0 %7295
        %7297 = vrot.lane.b32.xlu0 %v6726, 96
        %v7298 = vpop.permute.xlu0 %7297
        %7299 = vrot.lane.b32.xlu0 %v6727, 96
        %v7300 = vpop.permute.xlu0 %7299
        %7301 = vrot.lane.b32.xlu0 %v6728, 96
        %v7302 = vpop.permute.xlu0 %7301
        %7303 = vrot.lane.b32.xlu0 %v6729, 96
        %v7304 = vpop.permute.xlu0 %7303
        %7305 = vrot.lane.b32.xlu0 %v6730, 96
        %v7306 = vpop.permute.xlu0 %7305
        %v7339 = vadd.f32 %v6539, %v7244
        %v7340 = vadd.f32 %v6540, %v7246
        %v7341 = vadd.f32 %v6541, %v7248
        %v7342 = vadd.f32 %v6542, %v7250
        %v7343 = vadd.f32 %v6543, %v7252
        %v7344 = vadd.f32 %v6544, %v7254
        %v7345 = vadd.f32 %v6545, %v7256
        %v7346 = vadd.f32 %v6546, %v7258
        %v7347 = vadd.f32 %v6547, %v7260
        %v7348 = vadd.f32 %v6548, %v7262
        %v7349 = vadd.f32 %v6549, %v7264
        %v7350 = vadd.f32 %v6550, %v7266
        %v7351 = vadd.f32 %v6551, %v7268
        %v7352 = vadd.f32 %v6552, %v7270
        %v7353 = vadd.f32 %v6553, %v7272
        %v7354 = vadd.f32 %v6554, %v7274
        %v7355 = vadd.f32 %v6555, %v7276
        %v7356 = vadd.f32 %v6556, %v7278
        %v7357 = vadd.f32 %v6557, %v7280
        %v7358 = vadd.f32 %v6558, %v7282
        %v7359 = vadd.f32 %v6559, %v7284
        %v7360 = vadd.f32 %v6560, %v7286
        %v7361 = vadd.f32 %v6561, %v7288
        %v7362 = vadd.f32 %v6562, %v7290
        %v7363 = vadd.f32 %v6563, %v7292
        %v7364 = vadd.f32 %v6564, %v7294
        %v7365 = vadd.f32 %v6565, %v7296
        %v7366 = vadd.f32 %v6566, %v7298
        %v7367 = vadd.f32 %v6567, %v7300
        %v7368 = vadd.f32 %v6568, %v7302
        %v7369 = vadd.f32 %v6569, %v7304
        %v7370 = vadd.f32 %v6570, %v7306
        %7403 = vrot.lane.b32.xlu0 %v7019, 64
        %v7404 = vpop.permute.xlu0 %7403
        %7405 = vrot.lane.b32.xlu0 %v7020, 64
        %v7406 = vpop.permute.xlu0 %7405
        %7407 = vrot.lane.b32.xlu0 %v7021, 64
        %v7408 = vpop.permute.xlu0 %7407
        %7409 = vrot.lane.b32.xlu0 %v7022, 64
        %v7410 = vpop.permute.xlu0 %7409
        %7411 = vrot.lane.b32.xlu0 %v7023, 64
        %v7412 = vpop.permute.xlu0 %7411
        %7413 = vrot.lane.b32.xlu0 %v7024, 64
        %v7414 = vpop.permute.xlu0 %7413
        %7415 = vrot.lane.b32.xlu0 %v7025, 64
        %v7416 = vpop.permute.xlu0 %7415
        %7417 = vrot.lane.b32.xlu0 %v7026, 64
        %v7418 = vpop.permute.xlu0 %7417
        %7419 = vrot.lane.b32.xlu0 %v7027, 64
        %v7420 = vpop.permute.xlu0 %7419
        %7421 = vrot.lane.b32.xlu0 %v7028, 64
        %v7422 = vpop.permute.xlu0 %7421
        %7423 = vrot.lane.b32.xlu0 %v7029, 64
        %v7424 = vpop.permute.xlu0 %7423
        %7425 = vrot.lane.b32.xlu0 %v7030, 64
        %v7426 = vpop.permute.xlu0 %7425
        %7427 = vrot.lane.b32.xlu0 %v7031, 64
        %v7428 = vpop.permute.xlu0 %7427
        %7429 = vrot.lane.b32.xlu0 %v7032, 64
        %v7430 = vpop.permute.xlu0 %7429
        %7431 = vrot.lane.b32.xlu0 %v7033, 64
        %v7432 = vpop.permute.xlu0 %7431
        %7433 = vrot.lane.b32.xlu0 %v7034, 64
        %v7434 = vpop.permute.xlu0 %7433
        %7435 = vrot.lane.b32.xlu0 %v7035, 64
        %v7436 = vpop.permute.xlu0 %7435
        %7437 = vrot.lane.b32.xlu0 %v7036, 64
        %v7438 = vpop.permute.xlu0 %7437
        %7439 = vrot.lane.b32.xlu0 %v7037, 64
        %v7440 = vpop.permute.xlu0 %7439
        %7441 = vrot.lane.b32.xlu0 %v7038, 64
        %v7442 = vpop.permute.xlu0 %7441
        %7443 = vrot.lane.b32.xlu0 %v7039, 64
        %v7444 = vpop.permute.xlu0 %7443
        %7445 = vrot.lane.b32.xlu0 %v7040, 64
        %v7446 = vpop.permute.xlu0 %7445
        %7447 = vrot.lane.b32.xlu0 %v7041, 64
        %v7448 = vpop.permute.xlu0 %7447
        %7449 = vrot.lane.b32.xlu0 %v7042, 64
        %v7450 = vpop.permute.xlu0 %7449
        %7451 = vrot.lane.b32.xlu0 %v7043, 64
        %v7452 = vpop.permute.xlu0 %7451
        %7453 = vrot.lane.b32.xlu0 %v7044, 64
        %v7454 = vpop.permute.xlu0 %7453
        %7455 = vrot.lane.b32.xlu0 %v7045, 64
        %v7456 = vpop.permute.xlu0 %7455
        %7457 = vrot.lane.b32.xlu0 %v7046, 64
        %v7458 = vpop.permute.xlu0 %7457
        %7459 = vrot.lane.b32.xlu0 %v7047, 64
        %v7460 = vpop.permute.xlu0 %7459
        %7461 = vrot.lane.b32.xlu0 %v7048, 64
        %v7462 = vpop.permute.xlu0 %7461
        %7463 = vrot.lane.b32.xlu0 %v7049, 64
        %v7464 = vpop.permute.xlu0 %7463
        %7465 = vrot.lane.b32.xlu0 %v7050, 64
        %v7466 = vpop.permute.xlu0 %7465
        %v7499 = vadd.f32 %v6859, %v7404
        %v7500 = vadd.f32 %v6860, %v7406
        %v7501 = vadd.f32 %v6861, %v7408
        %v7502 = vadd.f32 %v6862, %v7410
        %v7503 = vadd.f32 %v6863, %v7412
        %v7504 = vadd.f32 %v6864, %v7414
        %v7505 = vadd.f32 %v6865, %v7416
        %v7506 = vadd.f32 %v6866, %v7418
        %v7507 = vadd.f32 %v6867, %v7420
        %v7508 = vadd.f32 %v6868, %v7422
        %v7509 = vadd.f32 %v6869, %v7424
        %v7510 = vadd.f32 %v6870, %v7426
        %v7511 = vadd.f32 %v6871, %v7428
        %v7512 = vadd.f32 %v6872, %v7430
        %v7513 = vadd.f32 %v6873, %v7432
        %v7514 = vadd.f32 %v6874, %v7434
        %v7515 = vadd.f32 %v6875, %v7436
        %v7516 = vadd.f32 %v6876, %v7438
        %v7517 = vadd.f32 %v6877, %v7440
        %v7518 = vadd.f32 %v6878, %v7442
        %v7519 = vadd.f32 %v6879, %v7444
        %v7520 = vadd.f32 %v6880, %v7446
        %v7521 = vadd.f32 %v6881, %v7448
        %v7522 = vadd.f32 %v6882, %v7450
        %v7523 = vadd.f32 %v6883, %v7452
        %v7524 = vadd.f32 %v6884, %v7454
        %v7525 = vadd.f32 %v6885, %v7456
        %v7526 = vadd.f32 %v6886, %v7458
        %v7527 = vadd.f32 %v6887, %v7460
        %v7528 = vadd.f32 %v6888, %v7462
        %v7529 = vadd.f32 %v6889, %v7464
        %v7530 = vadd.f32 %v6890, %v7466
        %7563 = vrot.lane.b32.xlu0 %v7339, 64
        %v7564 = vpop.permute.xlu0 %7563
        %7565 = vrot.lane.b32.xlu0 %v7340, 64
        %v7566 = vpop.permute.xlu0 %7565
        %7567 = vrot.lane.b32.xlu0 %v7341, 64
        %v7568 = vpop.permute.xlu0 %7567
        %7569 = vrot.lane.b32.xlu0 %v7342, 64
        %v7570 = vpop.permute.xlu0 %7569
        %7571 = vrot.lane.b32.xlu0 %v7343, 64
        %v7572 = vpop.permute.xlu0 %7571
        %7573 = vrot.lane.b32.xlu0 %v7344, 64
        %v7574 = vpop.permute.xlu0 %7573
        %7575 = vrot.lane.b32.xlu0 %v7345, 64
        %v7576 = vpop.permute.xlu0 %7575
        %7577 = vrot.lane.b32.xlu0 %v7346, 64
        %v7578 = vpop.permute.xlu0 %7577
        %7579 = vrot.lane.b32.xlu0 %v7347, 64
        %v7580 = vpop.permute.xlu0 %7579
        %7581 = vrot.lane.b32.xlu0 %v7348, 64
        %v7582 = vpop.permute.xlu0 %7581
        %7583 = vrot.lane.b32.xlu0 %v7349, 64
        %v7584 = vpop.permute.xlu0 %7583
        %7585 = vrot.lane.b32.xlu0 %v7350, 64
        %v7586 = vpop.permute.xlu0 %7585
        %7587 = vrot.lane.b32.xlu0 %v7351, 64
        %v7588 = vpop.permute.xlu0 %7587
        %7589 = vrot.lane.b32.xlu0 %v7352, 64
        %v7590 = vpop.permute.xlu0 %7589
        %7591 = vrot.lane.b32.xlu0 %v7353, 64
        %v7592 = vpop.permute.xlu0 %7591
        %7593 = vrot.lane.b32.xlu0 %v7354, 64
        %v7594 = vpop.permute.xlu0 %7593
        %7595 = vrot.lane.b32.xlu0 %v7355, 64
        %v7596 = vpop.permute.xlu0 %7595
        %7597 = vrot.lane.b32.xlu0 %v7356, 64
        %v7598 = vpop.permute.xlu0 %7597
        %7599 = vrot.lane.b32.xlu0 %v7357, 64
        %v7600 = vpop.permute.xlu0 %7599
        %7601 = vrot.lane.b32.xlu0 %v7358, 64
        %v7602 = vpop.permute.xlu0 %7601
        %7603 = vrot.lane.b32.xlu0 %v7359, 64
        %v7604 = vpop.permute.xlu0 %7603
        %7605 = vrot.lane.b32.xlu0 %v7360, 64
        %v7606 = vpop.permute.xlu0 %7605
        %7607 = vrot.lane.b32.xlu0 %v7361, 64
        %v7608 = vpop.permute.xlu0 %7607
        %7609 = vrot.lane.b32.xlu0 %v7362, 64
        %v7610 = vpop.permute.xlu0 %7609
        %7611 = vrot.lane.b32.xlu0 %v7363, 64
        %v7612 = vpop.permute.xlu0 %7611
        %7613 = vrot.lane.b32.xlu0 %v7364, 64
        %v7614 = vpop.permute.xlu0 %7613
        %7615 = vrot.lane.b32.xlu0 %v7365, 64
        %v7616 = vpop.permute.xlu0 %7615
        %7617 = vrot.lane.b32.xlu0 %v7366, 64
        %v7618 = vpop.permute.xlu0 %7617
        %7619 = vrot.lane.b32.xlu0 %v7367, 64
        %v7620 = vpop.permute.xlu0 %7619
        %7621 = vrot.lane.b32.xlu0 %v7368, 64
        %v7622 = vpop.permute.xlu0 %7621
        %7623 = vrot.lane.b32.xlu0 %v7369, 64
        %v7624 = vpop.permute.xlu0 %7623
        %7625 = vrot.lane.b32.xlu0 %v7370, 64
        %v7626 = vpop.permute.xlu0 %7625
        %v7659 = vadd.f32 %v7179, %v7564
        %v7660 = vadd.f32 %v7180, %v7566
        %v7661 = vadd.f32 %v7181, %v7568
        %v7662 = vadd.f32 %v7182, %v7570
        %v7663 = vadd.f32 %v7183, %v7572
        %v7664 = vadd.f32 %v7184, %v7574
        %v7665 = vadd.f32 %v7185, %v7576
        %v7666 = vadd.f32 %v7186, %v7578
        %v7667 = vadd.f32 %v7187, %v7580
        %v7668 = vadd.f32 %v7188, %v7582
        %v7669 = vadd.f32 %v7189, %v7584
        %v7670 = vadd.f32 %v7190, %v7586
        %v7671 = vadd.f32 %v7191, %v7588
        %v7672 = vadd.f32 %v7192, %v7590
        %v7673 = vadd.f32 %v7193, %v7592
        %v7674 = vadd.f32 %v7194, %v7594
        %v7675 = vadd.f32 %v7195, %v7596
        %v7676 = vadd.f32 %v7196, %v7598
        %v7677 = vadd.f32 %v7197, %v7600
        %v7678 = vadd.f32 %v7198, %v7602
        %v7679 = vadd.f32 %v7199, %v7604
        %v7680 = vadd.f32 %v7200, %v7606
        %v7681 = vadd.f32 %v7201, %v7608
        %v7682 = vadd.f32 %v7202, %v7610
        %v7683 = vadd.f32 %v7203, %v7612
        %v7684 = vadd.f32 %v7204, %v7614
        %v7685 = vadd.f32 %v7205, %v7616
        %v7686 = vadd.f32 %v7206, %v7618
        %v7687 = vadd.f32 %v7207, %v7620
        %v7688 = vadd.f32 %v7208, %v7622
        %v7689 = vadd.f32 %v7209, %v7624
        %v7690 = vadd.f32 %v7210, %v7626
        %v7691 = vadd.f32 %v7499, %v7659
        %v7692 = vadd.f32 %v7500, %v7660
        %v7693 = vadd.f32 %v7501, %v7661
        %v7694 = vadd.f32 %v7502, %v7662
        %v7695 = vadd.f32 %v7503, %v7663
        %v7696 = vadd.f32 %v7504, %v7664
        %v7697 = vadd.f32 %v7505, %v7665
        %v7698 = vadd.f32 %v7506, %v7666
        %v7699 = vadd.f32 %v7507, %v7667
        %v7700 = vadd.f32 %v7508, %v7668
        %v7701 = vadd.f32 %v7509, %v7669
        %v7702 = vadd.f32 %v7510, %v7670
        %v7703 = vadd.f32 %v7511, %v7671
        %v7704 = vadd.f32 %v7512, %v7672
        %v7705 = vadd.f32 %v7513, %v7673
        %v7706 = vadd.f32 %v7514, %v7674
        %v7707 = vadd.f32 %v7515, %v7675
        %v7708 = vadd.f32 %v7516, %v7676
        %v7709 = vadd.f32 %v7517, %v7677
        %v7710 = vadd.f32 %v7518, %v7678
        %v7711 = vadd.f32 %v7519, %v7679
        %v7712 = vadd.f32 %v7520, %v7680
        %v7713 = vadd.f32 %v7521, %v7681
        %v7714 = vadd.f32 %v7522, %v7682
        %v7715 = vadd.f32 %v7523, %v7683
        %v7716 = vadd.f32 %v7524, %v7684
        %v7717 = vadd.f32 %v7525, %v7685
        %v7718 = vadd.f32 %v7526, %v7686
        %v7719 = vadd.f32 %v7527, %v7687
        %v7720 = vadd.f32 %v7528, %v7688
        %v7721 = vadd.f32 %v7529, %v7689
        %v7722 = vadd.f32 %v7530, %v7690
        %vm7723 = vcmask 261120
        %7724 = vst.msk [vmem:[#allocation2] sm:$0xff] %vm7723, %v7691
        %7725 = vst.msk [vmem:[#allocation2 + $0x8] sm:$0xff] %vm7723, %v7692
        %7726 = vst.msk [vmem:[#allocation2 + $0x10] sm:$0xff] %vm7723, %v7693
        %7727 = vst.msk [vmem:[#allocation2 + $0x18] sm:$0xff] %vm7723, %v7694
        %7728 = vst.msk [vmem:[#allocation2 + $0x20] sm:$0xff] %vm7723, %v7695
        %7729 = vst.msk [vmem:[#allocation2 + $0x28] sm:$0xff] %vm7723, %v7696
        %7730 = vst.msk [vmem:[#allocation2 + $0x30] sm:$0xff] %vm7723, %v7697
        %7731 = vst.msk [vmem:[#allocation2 + $0x38] sm:$0xff] %vm7723, %v7698
        %7732 = vst.msk [vmem:[#allocation2 + $0x40] sm:$0xff] %vm7723, %v7699
        %7733 = vst.msk [vmem:[#allocation2 + $0x48] sm:$0xff] %vm7723, %v7700
        %7734 = vst.msk [vmem:[#allocation2 + $0x50] sm:$0xff] %vm7723, %v7701
        %7735 = vst.msk [vmem:[#allocation2 + $0x58] sm:$0xff] %vm7723, %v7702
        %7736 = vst.msk [vmem:[#allocation2 + $0x60] sm:$0xff] %vm7723, %v7703
        %7737 = vst.msk [vmem:[#allocation2 + $0x68] sm:$0xff] %vm7723, %v7704
        %7738 = vst.msk [vmem:[#allocation2 + $0x70] sm:$0xff] %vm7723, %v7705
        %7739 = vst.msk [vmem:[#allocation2 + $0x78] sm:$0xff] %vm7723, %v7706
        %7740 = vst.msk [vmem:[#allocation2 + $0x80] sm:$0xff] %vm7723, %v7707
        %7741 = vst.msk [vmem:[#allocation2 + $0x88] sm:$0xff] %vm7723, %v7708
        %7742 = vst.msk [vmem:[#allocation2 + $0x90] sm:$0xff] %vm7723, %v7709
        %7743 = vst.msk [vmem:[#allocation2 + $0x98] sm:$0xff] %vm7723, %v7710
        %7744 = vst.msk [vmem:[#allocation2 + $0xa0] sm:$0xff] %vm7723, %v7711
        %7745 = vst.msk [vmem:[#allocation2 + $0xa8] sm:$0xff] %vm7723, %v7712
        %7746 = vst.msk [vmem:[#allocation2 + $0xb0] sm:$0xff] %vm7723, %v7713
        %7747 = vst.msk [vmem:[#allocation2 + $0xb8] sm:$0xff] %vm7723, %v7714
        %7748 = vst.msk [vmem:[#allocation2 + $0xc0] sm:$0xff] %vm7723, %v7715
        %7749 = vst.msk [vmem:[#allocation2 + $0xc8] sm:$0xff] %vm7723, %v7716
        %7750 = vst.msk [vmem:[#allocation2 + $0xd0] sm:$0xff] %vm7723, %v7717
        %7751 = vst.msk [vmem:[#allocation2 + $0xd8] sm:$0xff] %vm7723, %v7718
        %7752 = vst.msk [vmem:[#allocation2 + $0xe0] sm:$0xff] %vm7723, %v7719
        %7753 = vst.msk [vmem:[#allocation2 + $0xe8] sm:$0xff] %vm7723, %v7720
        %7754 = vst.msk [vmem:[#allocation2 + $0xf0] sm:$0xff] %vm7723, %v7721
        %7755 = vst.msk [vmem:[#allocation2 + $0xf8] sm:$0xff] %vm7723, %v7722
        %v7756 = vld [vmem:[#allocation2] ss:$4 sm:$0xff]
        %s7757 = scalar_lea.vmem [#allocation2], 32
        %v7758 = vld [vmem:[%s7757] ss:$4 sm:$0xff]
        %s7759 = scalar_lea.vmem [#allocation2], 64
        %v7760 = vld [vmem:[%s7759] ss:$4 sm:$0xff]
        %s7761 = scalar_lea.vmem [#allocation2], 96
        %v7762 = vld [vmem:[%s7761] ss:$4 sm:$0xff]
        %s7763 = scalar_lea.vmem [#allocation2], 128
        %v7764 = vld [vmem:[%s7763] ss:$4 sm:$0xff]
        %s7765 = scalar_lea.vmem [#allocation2], 160
        %v7766 = vld [vmem:[%s7765] ss:$4 sm:$0xff]
        %s7767 = scalar_lea.vmem [#allocation2], 192
        %v7768 = vld [vmem:[%s7767] ss:$4 sm:$0xff]
        %s7769 = scalar_lea.vmem [#allocation2], 224
        %v7770 = vld [vmem:[%s7769] ss:$4 sm:$0xff]
        %s7771 = scalar_lea.vmem [#allocation2], 1
        %v7772 = vld [vmem:[%s7771] ss:$4 sm:$0xff]
        %s7773 = scalar_lea.vmem [#allocation2], 33
        %v7774 = vld [vmem:[%s7773] ss:$4 sm:$0xff]
        %s7775 = scalar_lea.vmem [#allocation2], 65
        %v7776 = vld [vmem:[%s7775] ss:$4 sm:$0xff]
        %s7777 = scalar_lea.vmem [#allocation2], 97
        %v7778 = vld [vmem:[%s7777] ss:$4 sm:$0xff]
        %s7779 = scalar_lea.vmem [#allocation2], 129
        %v7780 = vld [vmem:[%s7779] ss:$4 sm:$0xff]
        %s7781 = scalar_lea.vmem [#allocation2], 161
        %v7782 = vld [vmem:[%s7781] ss:$4 sm:$0xff]
        %s7783 = scalar_lea.vmem [#allocation2], 193
        %v7784 = vld [vmem:[%s7783] ss:$4 sm:$0xff]
        %s7785 = scalar_lea.vmem [#allocation2], 225
        %v7786 = vld [vmem:[%s7785] ss:$4 sm:$0xff]
        %s7787 = scalar_lea.vmem [#allocation2], 2
        %v7788 = vld [vmem:[%s7787] ss:$4 sm:$0xff]
        %s7789 = scalar_lea.vmem [#allocation2], 34
        %v7790 = vld [vmem:[%s7789] ss:$4 sm:$0xff]
        %s7791 = scalar_lea.vmem [#allocation2], 66
        %v7792 = vld [vmem:[%s7791] ss:$4 sm:$0xff]
        %s7793 = scalar_lea.vmem [#allocation2], 98
        %v7794 = vld [vmem:[%s7793] ss:$4 sm:$0xff]
        %s7795 = scalar_lea.vmem [#allocation2], 130
        %v7796 = vld [vmem:[%s7795] ss:$4 sm:$0xff]
        %s7797 = scalar_lea.vmem [#allocation2], 162
        %v7798 = vld [vmem:[%s7797] ss:$4 sm:$0xff]
        %s7799 = scalar_lea.vmem [#allocation2], 194
        %v7800 = vld [vmem:[%s7799] ss:$4 sm:$0xff]
        %s7801 = scalar_lea.vmem [#allocation2], 226
        %v7802 = vld [vmem:[%s7801] ss:$4 sm:$0xff]
        %s7803 = scalar_lea.vmem [#allocation2], 3
        %v7804 = vld [vmem:[%s7803] ss:$4 sm:$0xff]
        %s7805 = scalar_lea.vmem [#allocation2], 35
        %v7806 = vld [vmem:[%s7805] ss:$4 sm:$0xff]
        %s7807 = scalar_lea.vmem [#allocation2], 67
        %v7808 = vld [vmem:[%s7807] ss:$4 sm:$0xff]
        %s7809 = scalar_lea.vmem [#allocation2], 99
        %v7810 = vld [vmem:[%s7809] ss:$4 sm:$0xff]
        %s7811 = scalar_lea.vmem [#allocation2], 131
        %v7812 = vld [vmem:[%s7811] ss:$4 sm:$0xff]
        %s7813 = scalar_lea.vmem [#allocation2], 163
        %v7814 = vld [vmem:[%s7813] ss:$4 sm:$0xff]
        %s7815 = scalar_lea.vmem [#allocation2], 195
        %v7816 = vld [vmem:[%s7815] ss:$4 sm:$0xff]
        %s7817 = scalar_lea.vmem [#allocation2], 227
        %v7818 = vld [vmem:[%s7817] ss:$4 sm:$0xff]
        %7827 = vrot.lane.b32.xlu0 %v7772, 32
        %v7828 = vpop.permute.xlu0 %7827
        %7829 = vrot.lane.b32.xlu0 %v7774, 32
        %v7830 = vpop.permute.xlu0 %7829
        %7831 = vrot.lane.b32.xlu0 %v7776, 32
        %v7832 = vpop.permute.xlu0 %7831
        %7833 = vrot.lane.b32.xlu0 %v7778, 32
        %v7834 = vpop.permute.xlu0 %7833
        %7835 = vrot.lane.b32.xlu0 %v7780, 32
        %v7836 = vpop.permute.xlu0 %7835
        %7837 = vrot.lane.b32.xlu0 %v7782, 32
        %v7838 = vpop.permute.xlu0 %7837
        %7839 = vrot.lane.b32.xlu0 %v7784, 32
        %v7840 = vpop.permute.xlu0 %7839
        %7841 = vrot.lane.b32.xlu0 %v7786, 32
        %v7842 = vpop.permute.xlu0 %7841
        %7859 = vrot.lane.b32.xlu0 %v7788, 64
        %v7860 = vpop.permute.xlu0 %7859
        %7861 = vrot.lane.b32.xlu0 %v7790, 64
        %v7862 = vpop.permute.xlu0 %7861
        %7863 = vrot.lane.b32.xlu0 %v7792, 64
        %v7864 = vpop.permute.xlu0 %7863
        %7865 = vrot.lane.b32.xlu0 %v7794, 64
        %v7866 = vpop.permute.xlu0 %7865
        %7867 = vrot.lane.b32.xlu0 %v7796, 64
        %v7868 = vpop.permute.xlu0 %7867
        %7869 = vrot.lane.b32.xlu0 %v7798, 64
        %v7870 = vpop.permute.xlu0 %7869
        %7871 = vrot.lane.b32.xlu0 %v7800, 64
        %v7872 = vpop.permute.xlu0 %7871
        %7873 = vrot.lane.b32.xlu0 %v7802, 64
        %v7874 = vpop.permute.xlu0 %7873
        %7891 = vrot.lane.b32.xlu0 %v7804, 96
        %v7892 = vpop.permute.xlu0 %7891
        %7893 = vrot.lane.b32.xlu0 %v7806, 96
        %v7894 = vpop.permute.xlu0 %7893
        %7895 = vrot.lane.b32.xlu0 %v7808, 96
        %v7896 = vpop.permute.xlu0 %7895
        %7897 = vrot.lane.b32.xlu0 %v7810, 96
        %v7898 = vpop.permute.xlu0 %7897
        %7899 = vrot.lane.b32.xlu0 %v7812, 96
        %v7900 = vpop.permute.xlu0 %7899
        %7901 = vrot.lane.b32.xlu0 %v7814, 96
        %v7902 = vpop.permute.xlu0 %7901
        %7903 = vrot.lane.b32.xlu0 %v7816, 96
        %v7904 = vpop.permute.xlu0 %7903
        %7905 = vrot.lane.b32.xlu0 %v7818, 96
        %v7906 = vpop.permute.xlu0 %7905
        %v7915 = vsel %vm7723, %v7756, %v7828
        %v7916 = vsel %vm7723, %v7758, %v7830
        %v7917 = vsel %vm7723, %v7760, %v7832
        %v7918 = vsel %vm7723, %v7762, %v7834
        %v7919 = vsel %vm7723, %v7764, %v7836
        %v7920 = vsel %vm7723, %v7766, %v7838
        %v7921 = vsel %vm7723, %v7768, %v7840
        %v7922 = vsel %vm7723, %v7770, %v7842
        %vm7923 = vcmask 523264
        %v7924 = vsel %vm7923, %v7915, %v7860
        %v7925 = vsel %vm7923, %v7916, %v7862
        %v7926 = vsel %vm7923, %v7917, %v7864
        %v7927 = vsel %vm7923, %v7918, %v7866
        %v7928 = vsel %vm7923, %v7919, %v7868
        %v7929 = vsel %vm7923, %v7920, %v7870
        %v7930 = vsel %vm7923, %v7921, %v7872
        %v7931 = vsel %vm7923, %v7922, %v7874
        %vm7932 = vcmask 785408
        %v7933 = vsel %vm7932, %v7924, %v7892
        %v7934 = vsel %vm7932, %v7925, %v7894
        %v7935 = vsel %vm7932, %v7926, %v7896
        %v7936 = vsel %vm7932, %v7927, %v7898
        %v7937 = vsel %vm7932, %v7928, %v7900
        %v7938 = vsel %vm7932, %v7929, %v7902
        %v7939 = vsel %vm7932, %v7930, %v7904
        %v7940 = vsel %vm7932, %v7931, %v7906
        %v7941 = vpack.c.bf16 %v7934, %v7933
        %v7942 = vpack.c.bf16 %v7936, %v7935
        %v7943 = vpack.c.bf16 %v7938, %v7937
        %v7944 = vpack.c.bf16 %v7940, %v7939
        %v7949 = vunpack.c.l.b16 %v7941
        %v7950 = vunpack.c.h.b16 %v7941
        %v7951 = vunpack.c.l.b16 %v7942
        %v7952 = vunpack.c.h.b16 %v7942
        %v7953 = vunpack.c.l.b16 %v7943
        %v7954 = vunpack.c.h.b16 %v7943
        %v7955 = vunpack.c.l.b16 %v7944
        %v7956 = vunpack.c.h.b16 %v7944
        %v7957 = vpack.c.b16 %v7949, %v7949
        %v7958 = vpack.c.b16 %v7950, %v7950
        %v7959 = vpack.c.b16 %v7951, %v7951
        %v7960 = vpack.c.b16 %v7952, %v7952
        %v7961 = vpack.c.b16 %v7953, %v7953
        %v7962 = vpack.c.b16 %v7954, %v7954
        %v7963 = vpack.c.b16 %v7955, %v7955
        %v7964 = vpack.c.b16 %v7956, %v7956
        %7973 = vst [vmem:[%s207] sm:$0xf] %v7957
        %7974 = vst [vmem:[%s207 + $0x4] sm:$0xf] %v7958
        %7975 = vst [vmem:[%s207 + $0x8] sm:$0xf] %v7959
        %7976 = vst [vmem:[%s207 + $0xc] sm:$0xf] %v7960
        %7977 = vst [vmem:[%s207 + $0x10] sm:$0xf] %v7961
        %7978 = vst [vmem:[%s207 + $0x14] sm:$0xf] %v7962
        %7979 = vst [vmem:[%s207 + $0x18] sm:$0xf] %v7963
        %7980 = vst [vmem:[%s207 + $0x1c] sm:$0xf] %v7964
        %s7981 = sand.u32 %s120, 1
        %s7982 = scalar_lea.sflag [#allocation4], %s7981
        %s7983 = sand.u32 %s120, 1
        %s7984 = smul.addr %s7983, 32
        %s7985 = scalar_lea.vmem [#allocation3], %s7984
        // Predicated region
        $region37: #{tpu_custom_call.1} parent=35 // pred_check
          %p7986 = pneg %p130
        $region38: #{tpu_custom_call.1} parent=35 // pred_check_branch
          %7988 = sbr.rel (%p7986) target = $region40
        $region39: #{tpu_custom_call.1} parent=35 // pred_region
          %s7989 = smul.u32 8, %s18
          %s7991 = ssub.s32 512, 512
          %7992 = vsyncadd %s7982, %s7991
          %s7993 = smul.addr %s7989, 64
          %s7994 = scalar_lea.hbm %s4, %s7993
          %s7995 = sshll.u32 %s7985, 4
          %s7996 = int_to_ptr.vmem [resolvable:$true] %s7995
          %8001 = dma.vmem_to_hbm [thread:$0]  %s7996, 512, %s7994, %s7982, 64, 64, 4
        $region40: #{tpu_custom_call.1} parent=35 // pred_fallthru
          _
      $region36: #{tpu_custom_call.1} parent=5 // pred_fallthru
        _
      %p8002 = scmp.le.s32.totalorder 2, %s13
      // Predicated region
      $region41: #{tpu_custom_call.1} parent=5 // pred_check
        %p8003 = pneg %p8002
      $region42: #{tpu_custom_call.1} parent=5 // pred_check_branch
        %8005 = sbr.rel (%p8003) target = $region44
      $region43: #{tpu_custom_call.1} parent=5 // pred_region
        %s8006 = ssub.s32 %s13, 2
        // Predicated region
        $region45: #{tpu_custom_call.1} parent=43 // pred_check
          %p8007 = pneg %p136
        $region46: #{tpu_custom_call.1} parent=43 // pred_check_branch
          %8009 = sbr.rel (%p8007) target = $region48
        $region47: #{tpu_custom_call.1} parent=43 // pred_region
          %s8010 = sand.u32 %s121, 1
          %s8011 = scalar_lea.sflag [#allocation4], %s8010
          %s8012 = sand.u32 %s121, 1
          %s8013 = smul.addr %s8012, 32
          %s8014 = scalar_lea.vmem [#allocation3], %s8013
          %8015 = dma.done %s8011, 512
        $region48: #{tpu_custom_call.1} parent=43 // pred_fallthru
          _
      $region44: #{tpu_custom_call.1} parent=5 // pred_fallthru
        _
    $region6: #{tpu_custom_call.1} parent=1 // loop_footer
      %s17 = sadd.s32 1, %s13
    $region7: #{tpu_custom_call.1} parent=1 // loop_footer_branch
      %12 = sbr.rel target = $region3
    $region8: #{tpu_custom_call.1} parent=1 // loop_exit
      _
    %8016 = vsyncpa [#allocation4], 1
    %s8017 = scalar_lea.sflag [#allocation4], 1
    %8018 = vsyncpa %s8017, 1

</llo_original>
